<compile_context>
chip_gen: v7x
topology: tpu7x:2x2x1
jax: 0.10.0
libtpu: 0.0.40
codegen_flags: <defaults>
</compile_context>

<pallas_src>
import functools
import math

import jax
import jax.numpy as jnp
from jax.experimental import pallas as pl
from jax.experimental.pallas import tpu as pltpu


LANES = 128  # fc3 output / mask feature axis padded to a full lane width


def phi_net_kernel(
    x_ref, ts_ref,
    w1_ref, g1_ref, be1_ref,
    w2_ref, g2_ref, be2_ref,
    w3_ref, b3_ref,
    o_ref,
    *, use_sigmoid: bool,
):
    eps = 1e-5
    G, B, in_dim = x_ref.shape      # G micro-batches of B rows per grid step
    M = G * B

    def elu(h):
        # ELU(alpha=1); clamp the exp argument so the unselected branch stays finite.
        return jnp.where(h > 0, h, jnp.exp(jnp.minimum(h, 0.0)) - 1.0)

    def batchnorm(h, gamma, beta):
        # Training-mode BN with statistics per independent micro-batch group,
        # folded into a per-(group, feature) scale/shift (one mul + one add on
        # the (M, F) stream).
        F_ = h.shape[-1]
        hg = h.reshape(G, B, F_)
        mu = jnp.mean(hg, axis=1, keepdims=True)
        var = jnp.mean(hg * hg, axis=1, keepdims=True) - mu * mu
        var = jnp.maximum(var, 0.0)              # guard f32 cancellation -> NaN
        s = gamma * jax.lax.rsqrt(var + eps)     # (G, 1, F)
        t = beta - mu * s
        return (hg * s + t).reshape(M, F_)

    x = x_ref[...].reshape(M, in_dim)

    # fc1 (bias dropped: cancelled by BN mean subtraction) -> bn1 -> elu
    h1 = jnp.dot(x.astype(jnp.bfloat16), w1_ref[...],
                 preferred_element_type=jnp.float32)
    h1 = elu(batchnorm(h1, g1_ref[...], be1_ref[...]))

    # fc2 (bias dropped) -> bn2 -> elu
    h2 = jnp.dot(h1.astype(jnp.bfloat16), w2_ref[...],
                 preferred_element_type=jnp.float32)
    h2 = elu(batchnorm(h2, g2_ref[...], be2_ref[...]))

    # fc3 (+ bias, lane-padded to 128 output features; no BN after it)
    logits = jnp.dot(h2.astype(jnp.bfloat16), w3_ref[...],
                     preferred_element_type=jnp.float32) + b3_ref[...]

    mask = ts_ref[...].reshape(M, LANES) > 0.0   # padded lanes are always False

    if use_sigmoid:
        # rl_technique == 'sample': sigmoid(-inf) == 0 on masked entries.
        probs = jnp.where(
            mask, pl.reciprocal(1.0 + jnp.exp(-logits), approx=True), 0.0)
    else:
        # softmax over features with masked logits forced to -inf
        # (where-guarded exp avoids -inf arithmetic; exact divide keeps row
        # sums within f32 rounding of 1).
        masked = jnp.where(mask, logits, -jnp.inf)
        m = jnp.max(masked, axis=-1, keepdims=True)
        e = jnp.where(mask, jnp.exp(logits - m), 0.0)
        denom = jnp.sum(e, axis=-1, keepdims=True)
        probs = e / denom

    o_ref[...] = probs.reshape(G, B, LANES)


def phi_net_forward(x, p, target_set, params, rl_technique="softmax",
                    max_group=16):
    """x: (N, B, in_dim) -- N independent micro-batches (one module forward()
    each, training-mode BN statistics per micro-batch).  p is unused because
    the module was built with input_x == False."""
    del p  # input_x == False -> p never reaches the network
    (w1, g1, be1, w2, g2, be2, w3p, b3p) = params
    N, B, in_dim = x.shape
    out_dim = target_set.shape[-1]

    # Lane-pad the masked feature axis to 128 (padded lanes keep mask == False
    # so they contribute exactly 0 to the softmax / sigmoid output).
    ts_pad = jnp.zeros((N, B, LANES), jnp.float32).at[..., :out_dim].set(target_set)

    # Stack G micro-batches per grid step so M = G*B fills the MXU M dimension.
    G = math.gcd(N, max_group)
    grid = (N // G,)

    kernel = functools.partial(
        phi_net_kernel, use_sigmoid=(rl_technique == "sample"))

    def batch_spec(shape):
        return pl.BlockSpec((G,) + tuple(shape[1:]), lambda i: (i, 0, 0))

    def const_spec(arr):  # weights / BN params stay resident across the grid
        return pl.BlockSpec(arr.shape, lambda i: (0, 0))

    M_total = N * B
    weight_bytes = sum(a.nbytes for a in (w1, g1, be1, w2, g2, be2, w3p, b3p))
    cost = pl.CostEstimate(
        flops=2 * M_total * (in_dim * 512 + 512 * 256 + 256 * LANES),
        transcendentals=M_total * (512 + 256 + LANES),
        bytes_accessed=x.nbytes + ts_pad.nbytes + weight_bytes
                       + M_total * LANES * 4,
    )

    out = pl.pallas_call(
        kernel,
        out_shape=jax.ShapeDtypeStruct((N, B, LANES), jnp.float32),
        grid=grid,
        in_specs=[
            batch_spec(x.shape),
            batch_spec(ts_pad.shape),
            const_spec(w1), const_spec(g1), const_spec(be1),
            const_spec(w2), const_spec(g2), const_spec(be2),
            const_spec(w3p), const_spec(b3p),
        ],
        out_specs=pl.BlockSpec((G, B, LANES), lambda i: (i, 0, 0)),
        compiler_params=pltpu.CompilerParams(
            dimension_semantics=("parallel",)),
        cost_estimate=cost,
    )(x, ts_pad, w1, g1, be1, w2, g2, be2, w3p, b3p)

    return out[..., :out_dim]


def xavier_uniform(key, fan_in, fan_out):
    # matches torch.nn.init.xavier_uniform_ (gain=1), returned as (in, out)
    limit = (6.0 / (fan_in + fan_out)) ** 0.5
    return jax.random.uniform(key, (fan_in, fan_out), jnp.float32, -limit, limit)


def linear_bias(key, fan_in, fan_out):
    # PyTorch nn.Linear default bias init: U(-1/sqrt(fan_in), 1/sqrt(fan_in))
    bound = 1.0 / (fan_in ** 0.5)
    return jax.random.uniform(key, (1, fan_out), jnp.float32, -bound, bound)


def init_params(key, input_dim, output_dim):
    ks = jax.random.split(key, 4)
    # Weights kept in bf16 (native full-rate MXU input; halves weight DMA bytes).
    w1 = xavier_uniform(ks[0], input_dim, 512).astype(jnp.bfloat16)
    w2 = xavier_uniform(ks[1], 512, 256).astype(jnp.bfloat16)
    w3 = xavier_uniform(ks[2], 256, output_dim)
    b3 = linear_bias(ks[3], 256, output_dim)
    # fc3 lane-padded to 128 output features; padded lanes are always masked out.
    w3p = (jnp.zeros((256, LANES), jnp.float32)
           .at[:, :output_dim].set(w3).astype(jnp.bfloat16))
    b3p = jnp.zeros((1, LANES), jnp.float32).at[:, :output_dim].set(b3)
    # fc1/fc2 biases intentionally omitted: training-mode BN cancels them.
    g1 = jnp.ones((1, 512), jnp.float32)
    be1 = jnp.zeros((1, 512), jnp.float32)
    g2 = jnp.ones((1, 256), jnp.float32)
    be2 = jnp.zeros((1, 256), jnp.float32)
    return (w1, g1, be1, w2, g2, be2, w3p, b3p)


if __name__ == "__main__":
    # 32 independent micro-batches of 8 rows each (each == one module forward()).
    N, B, input_dim, output_dim = 32, 8, 32, 8

    key = jax.random.PRNGKey(0)
    k_x, k_p, k_t, k_w = jax.random.split(key, 4)
    x = jax.random.normal(k_x, (N, B, input_dim), jnp.float32)
    p = jax.random.uniform(k_p, (N, B, output_dim), jnp.float32)  # unused (input_x=False)
    target_set = (jax.random.uniform(k_t, (N, B, output_dim)) > 0.4).astype(jnp.float32)
    target_set = target_set.at[..., 0].set(1.0)  # every row keeps >=1 selectable entry
    params = init_params(k_w, input_dim, output_dim)

    out = phi_net_forward(x, p, target_set, params, rl_technique="softmax")
    out = jax.block_until_ready(out)

    # sanity: masked entries are exactly 0 and unmasked entries renormalize to 1
    assert out.shape == (N, B, output_dim)
    assert bool(jnp.all(jnp.where(target_set > 0, True, out == 0.0)))
    assert bool(jnp.all(jnp.abs(jnp.sum(out, axis=-1) - 1.0) < 1e-4))

    print("KERNEL_OK")
</pallas_src>

<mosaic_0001>
module attributes {stable_mosaic.version = 11 : i64} {
  func.func @phi_net_kernel(%arg0: i32, %arg1: memref<16x8x32xf32, #tpu.memory_space<vmem>>, %arg2: memref<16x8x128xf32, #tpu.memory_space<vmem>>, %arg3: memref<32x512xbf16, #tpu.memory_space<vmem>>, %arg4: memref<1x512xf32, #tpu.memory_space<vmem>>, %arg5: memref<1x512xf32, #tpu.memory_space<vmem>>, %arg6: memref<512x256xbf16, #tpu.memory_space<vmem>>, %arg7: memref<1x256xf32, #tpu.memory_space<vmem>>, %arg8: memref<1x256xf32, #tpu.memory_space<vmem>>, %arg9: memref<256x128xbf16, #tpu.memory_space<vmem>>, %arg10: memref<1x128xf32, #tpu.memory_space<vmem>>, %arg11: memref<16x8x128xf32, #tpu.memory_space<vmem>>) attributes {dimension_semantics = [#tpu.dimension_semantics<parallel>], iteration_bounds = array<i64: 2>, scalar_prefetch = 0 : i64, scratch_operands = 0 : i64, tpu.core_type = #tpu.core_type<tc>, window_params = [{transform_indices = @transform_0, window_bounds = array<i64: 16, 8, 32>}, {transform_indices = @transform_1, window_bounds = array<i64: 16, 8, 128>}, {pipeline_mode = #tpu.pipeline_mode<synchronous>, transform_indices = @transform_2, window_bounds = array<i64: 32, 512>}, {pipeline_mode = #tpu.pipeline_mode<synchronous>, transform_indices = @transform_3, window_bounds = array<i64: 1, 512>}, {pipeline_mode = #tpu.pipeline_mode<synchronous>, transform_indices = @transform_4, window_bounds = array<i64: 1, 512>}, {pipeline_mode = #tpu.pipeline_mode<synchronous>, transform_indices = @transform_5, window_bounds = array<i64: 512, 256>}, {pipeline_mode = #tpu.pipeline_mode<synchronous>, transform_indices = @transform_6, window_bounds = array<i64: 1, 256>}, {pipeline_mode = #tpu.pipeline_mode<synchronous>, transform_indices = @transform_7, window_bounds = array<i64: 1, 256>}, {pipeline_mode = #tpu.pipeline_mode<synchronous>, transform_indices = @transform_8, window_bounds = array<i64: 256, 128>}, {pipeline_mode = #tpu.pipeline_mode<synchronous>, transform_indices = @transform_9, window_bounds = array<i64: 1, 128>}, {transform_indices = @transform_10, window_bounds = array<i64: 16, 8, 128>}]} {
    %c0 = arith.constant 0 : index
    %c0_0 = arith.constant 0 : index
    %c0_1 = arith.constant 0 : index
    %0 = vector.load %arg1[%c0, %c0_0, %c0_1] : memref<16x8x32xf32, #tpu.memory_space<vmem>>, vector<16x8x32xf32>
    %1 = vector.shape_cast %0 : vector<16x8x32xf32> to vector<128x32xf32>
    %2 = arith.truncf %1 : vector<128x32xf32> to vector<128x32xbf16>
    %c0_2 = arith.constant 0 : index
    %c0_3 = arith.constant 0 : index
    %3 = vector.load %arg3[%c0_2, %c0_3] : memref<32x512xbf16, #tpu.memory_space<vmem>>, vector<32x512xbf16>
    %cst = arith.constant dense<0.000000e+00> : vector<128x512xf32>
    %4 = tpu.matmul %2, %3, %cst {dimension_numbers = #tpu.dot_dimension_numbers<[1], [0], [0], [1], [0, 0, 1, 1], [], []>} : vector<128x32xbf16>, vector<32x512xbf16>, vector<128x512xf32> -> vector<128x512xf32>
    %c0_4 = arith.constant 0 : index
    %c0_5 = arith.constant 0 : index
    %5 = vector.load %arg4[%c0_4, %c0_5] : memref<1x512xf32, #tpu.memory_space<vmem>>, vector<1x512xf32>
    %c0_6 = arith.constant 0 : index
    %c0_7 = arith.constant 0 : index
    %6 = vector.load %arg5[%c0_6, %c0_7] : memref<1x512xf32, #tpu.memory_space<vmem>>, vector<1x512xf32>
    %7 = vector.shape_cast %4 : vector<128x512xf32> to vector<16x8x512xf32>
    %cst_8 = arith.constant dense<0.000000e+00> : vector<16x512xf32>
    %8 = vector.multi_reduction <add>, %7, %cst_8 [1] : vector<16x8x512xf32> to vector<16x512xf32>
    %9 = vector.shape_cast %8 : vector<16x512xf32> to vector<16x1x512xf32>
    %cst_9 = arith.constant 8.000000e+00 : f32
    %10 = vector.broadcast %cst_9 : f32 to vector<16x1x512xf32>
    %11 = arith.divf %9, %10 : vector<16x1x512xf32>
    %12 = arith.mulf %7, %7 : vector<16x8x512xf32>
    %cst_10 = arith.constant dense<0.000000e+00> : vector<16x512xf32>
    %13 = vector.multi_reduction <add>, %12, %cst_10 [1] : vector<16x8x512xf32> to vector<16x512xf32>
    %14 = vector.shape_cast %13 : vector<16x512xf32> to vector<16x1x512xf32>
    %cst_11 = arith.constant 8.000000e+00 : f32
    %15 = vector.broadcast %cst_11 : f32 to vector<16x1x512xf32>
    %16 = arith.divf %14, %15 : vector<16x1x512xf32>
    %17 = arith.mulf %11, %11 : vector<16x1x512xf32>
    %18 = arith.subf %16, %17 : vector<16x1x512xf32>
    %cst_12 = arith.constant 0.000000e+00 : f32
    %19 = vector.broadcast %cst_12 : f32 to vector<16x1x512xf32>
    %20 = arith.maximumf %18, %19 : vector<16x1x512xf32>
    %cst_13 = arith.constant 9.99999974E-6 : f32
    %21 = vector.broadcast %cst_13 : f32 to vector<16x1x512xf32>
    %22 = arith.addf %20, %21 : vector<16x1x512xf32>
    %23 = math.rsqrt %22 : vector<16x1x512xf32>
    %24 = vector.shape_cast %5 : vector<1x512xf32> to vector<1x1x512xf32>
    %25 = vector.broadcast %24 : vector<1x1x512xf32> to vector<16x1x512xf32>
    %26 = arith.mulf %25, %23 : vector<16x1x512xf32>
    %27 = arith.mulf %11, %26 : vector<16x1x512xf32>
    %28 = vector.shape_cast %6 : vector<1x512xf32> to vector<1x1x512xf32>
    %29 = vector.broadcast %28 : vector<1x1x512xf32> to vector<16x1x512xf32>
    %30 = arith.subf %29, %27 : vector<16x1x512xf32>
    %31 = vector.broadcast %26 : vector<16x1x512xf32> to vector<16x8x512xf32>
    %32 = arith.mulf %7, %31 : vector<16x8x512xf32>
    %33 = vector.broadcast %30 : vector<16x1x512xf32> to vector<16x8x512xf32>
    %34 = arith.addf %32, %33 : vector<16x8x512xf32>
    %35 = vector.shape_cast %34 : vector<16x8x512xf32> to vector<128x512xf32>
    %cst_14 = arith.constant 0.000000e+00 : f32
    %36 = vector.broadcast %cst_14 : f32 to vector<128x512xf32>
    %37 = arith.cmpf ogt, %35, %36 : vector<128x512xf32>
    %cst_15 = arith.constant 0.000000e+00 : f32
    %38 = vector.broadcast %cst_15 : f32 to vector<128x512xf32>
    %39 = arith.minimumf %35, %38 : vector<128x512xf32>
    %40 = math.exp %39 : vector<128x512xf32>
    %cst_16 = arith.constant 1.000000e+00 : f32
    %41 = vector.broadcast %cst_16 : f32 to vector<128x512xf32>
    %42 = arith.subf %40, %41 : vector<128x512xf32>
    %43 = arith.select %37, %35, %42 : vector<128x512xi1>, vector<128x512xf32>
    %44 = arith.truncf %43 : vector<128x512xf32> to vector<128x512xbf16>
    %c0_17 = arith.constant 0 : index
    %c0_18 = arith.constant 0 : index
    %45 = vector.load %arg6[%c0_17, %c0_18] : memref<512x256xbf16, #tpu.memory_space<vmem>>, vector<512x256xbf16>
    %cst_19 = arith.constant dense<0.000000e+00> : vector<128x256xf32>
    %46 = tpu.matmul %44, %45, %cst_19 {dimension_numbers = #tpu.dot_dimension_numbers<[1], [0], [0], [1], [0, 0, 1, 1], [], []>} : vector<128x512xbf16>, vector<512x256xbf16>, vector<128x256xf32> -> vector<128x256xf32>
    %c0_20 = arith.constant 0 : index
    %c0_21 = arith.constant 0 : index
    %47 = vector.load %arg7[%c0_20, %c0_21] : memref<1x256xf32, #tpu.memory_space<vmem>>, vector<1x256xf32>
    %c0_22 = arith.constant 0 : index
    %c0_23 = arith.constant 0 : index
    %48 = vector.load %arg8[%c0_22, %c0_23] : memref<1x256xf32, #tpu.memory_space<vmem>>, vector<1x256xf32>
    %49 = vector.shape_cast %46 : vector<128x256xf32> to vector<16x8x256xf32>
    %cst_24 = arith.constant dense<0.000000e+00> : vector<16x256xf32>
    %50 = vector.multi_reduction <add>, %49, %cst_24 [1] : vector<16x8x256xf32> to vector<16x256xf32>
    %51 = vector.shape_cast %50 : vector<16x256xf32> to vector<16x1x256xf32>
    %cst_25 = arith.constant 8.000000e+00 : f32
    %52 = vector.broadcast %cst_25 : f32 to vector<16x1x256xf32>
    %53 = arith.divf %51, %52 : vector<16x1x256xf32>
    %54 = arith.mulf %49, %49 : vector<16x8x256xf32>
    %cst_26 = arith.constant dense<0.000000e+00> : vector<16x256xf32>
    %55 = vector.multi_reduction <add>, %54, %cst_26 [1] : vector<16x8x256xf32> to vector<16x256xf32>
    %56 = vector.shape_cast %55 : vector<16x256xf32> to vector<16x1x256xf32>
    %cst_27 = arith.constant 8.000000e+00 : f32
    %57 = vector.broadcast %cst_27 : f32 to vector<16x1x256xf32>
    %58 = arith.divf %56, %57 : vector<16x1x256xf32>
    %59 = arith.mulf %53, %53 : vector<16x1x256xf32>
    %60 = arith.subf %58, %59 : vector<16x1x256xf32>
    %cst_28 = arith.constant 0.000000e+00 : f32
    %61 = vector.broadcast %cst_28 : f32 to vector<16x1x256xf32>
    %62 = arith.maximumf %60, %61 : vector<16x1x256xf32>
    %cst_29 = arith.constant 9.99999974E-6 : f32
    %63 = vector.broadcast %cst_29 : f32 to vector<16x1x256xf32>
    %64 = arith.addf %62, %63 : vector<16x1x256xf32>
    %65 = math.rsqrt %64 : vector<16x1x256xf32>
    %66 = vector.shape_cast %47 : vector<1x256xf32> to vector<1x1x256xf32>
    %67 = vector.broadcast %66 : vector<1x1x256xf32> to vector<16x1x256xf32>
    %68 = arith.mulf %67, %65 : vector<16x1x256xf32>
    %69 = arith.mulf %53, %68 : vector<16x1x256xf32>
    %70 = vector.shape_cast %48 : vector<1x256xf32> to vector<1x1x256xf32>
    %71 = vector.broadcast %70 : vector<1x1x256xf32> to vector<16x1x256xf32>
    %72 = arith.subf %71, %69 : vector<16x1x256xf32>
    %73 = vector.broadcast %68 : vector<16x1x256xf32> to vector<16x8x256xf32>
    %74 = arith.mulf %49, %73 : vector<16x8x256xf32>
    %75 = vector.broadcast %72 : vector<16x1x256xf32> to vector<16x8x256xf32>
    %76 = arith.addf %74, %75 : vector<16x8x256xf32>
    %77 = vector.shape_cast %76 : vector<16x8x256xf32> to vector<128x256xf32>
    %cst_30 = arith.constant 0.000000e+00 : f32
    %78 = vector.broadcast %cst_30 : f32 to vector<128x256xf32>
    %79 = arith.cmpf ogt, %77, %78 : vector<128x256xf32>
    %cst_31 = arith.constant 0.000000e+00 : f32
    %80 = vector.broadcast %cst_31 : f32 to vector<128x256xf32>
    %81 = arith.minimumf %77, %80 : vector<128x256xf32>
    %82 = math.exp %81 : vector<128x256xf32>
    %cst_32 = arith.constant 1.000000e+00 : f32
    %83 = vector.broadcast %cst_32 : f32 to vector<128x256xf32>
    %84 = arith.subf %82, %83 : vector<128x256xf32>
    %85 = arith.select %79, %77, %84 : vector<128x256xi1>, vector<128x256xf32>
    %86 = arith.truncf %85 : vector<128x256xf32> to vector<128x256xbf16>
    %c0_33 = arith.constant 0 : index
    %c0_34 = arith.constant 0 : index
    %87 = vector.load %arg9[%c0_33, %c0_34] : memref<256x128xbf16, #tpu.memory_space<vmem>>, vector<256x128xbf16>
    %cst_35 = arith.constant dense<0.000000e+00> : vector<128x128xf32>
    %88 = tpu.matmul %86, %87, %cst_35 {dimension_numbers = #tpu.dot_dimension_numbers<[1], [0], [0], [1], [0, 0, 1, 1], [], []>} : vector<128x256xbf16>, vector<256x128xbf16>, vector<128x128xf32> -> vector<128x128xf32>
    %c0_36 = arith.constant 0 : index
    %c0_37 = arith.constant 0 : index
    %89 = vector.load %arg10[%c0_36, %c0_37] : memref<1x128xf32, #tpu.memory_space<vmem>>, vector<1x128xf32>
    %90 = vector.broadcast %89 : vector<1x128xf32> to vector<128x128xf32>
    %91 = arith.addf %88, %90 : vector<128x128xf32>
    %c0_38 = arith.constant 0 : index
    %c0_39 = arith.constant 0 : index
    %c0_40 = arith.constant 0 : index
    %92 = vector.load %arg2[%c0_38, %c0_39, %c0_40] : memref<16x8x128xf32, #tpu.memory_space<vmem>>, vector<16x8x128xf32>
    %93 = vector.shape_cast %92 : vector<16x8x128xf32> to vector<128x128xf32>
    %cst_41 = arith.constant 0.000000e+00 : f32
    %94 = vector.broadcast %cst_41 : f32 to vector<128x128xf32>
    %95 = arith.cmpf ogt, %93, %94 : vector<128x128xf32>
    %cst_42 = arith.constant 0xFF800000 : f32
    %96 = vector.broadcast %cst_42 : f32 to vector<128x128xf32>
    %97 = arith.select %95, %91, %96 : vector<128x128xi1>, vector<128x128xf32>
    %cst_43 = arith.constant dense<0xFF800000> : vector<128xf32>
    %98 = vector.multi_reduction <maximumf>, %97, %cst_43 [1] : vector<128x128xf32> to vector<128xf32>
    %99 = vector.shape_cast %98 : vector<128xf32> to vector<128x1xf32>
    %100 = vector.broadcast %99 : vector<128x1xf32> to vector<128x128xf32>
    %101 = arith.subf %91, %100 : vector<128x128xf32>
    %102 = math.exp %101 : vector<128x128xf32>
    %cst_44 = arith.constant 0.000000e+00 : f32
    %103 = vector.broadcast %cst_44 : f32 to vector<128x128xf32>
    %104 = arith.select %95, %102, %103 : vector<128x128xi1>, vector<128x128xf32>
    %cst_45 = arith.constant dense<0.000000e+00> : vector<128xf32>
    %105 = vector.multi_reduction <add>, %104, %cst_45 [1] : vector<128x128xf32> to vector<128xf32>
    %106 = vector.shape_cast %105 : vector<128xf32> to vector<128x1xf32>
    %107 = vector.broadcast %106 : vector<128x1xf32> to vector<128x128xf32>
    %108 = arith.divf %104, %107 : vector<128x128xf32>
    %109 = vector.shape_cast %108 : vector<128x128xf32> to vector<16x8x128xf32>
    %c0_46 = arith.constant 0 : index
    %c0_47 = arith.constant 0 : index
    %c0_48 = arith.constant 0 : index
    %110 = vector.load %arg11[%c0_46, %c0_47, %c0_48] : memref<16x8x128xf32, #tpu.memory_space<vmem>>, vector<16x8x128xf32>
    tpu.vector_store %arg11[%c0_46, %c0_47, %c0_48], %109 {strides = array<i32>} : memref<16x8x128xf32, #tpu.memory_space<vmem>>, vector<16x8x128xf32>,
    return
  }
  func.func @transform_0(%arg0: i32) -> (i32, i32, i32) {
    %c0_i32 = arith.constant 0 : i32
    %c0_i32_0 = arith.constant 0 : i32
    %c0_i32_1 = arith.constant 0 : i32
    return %arg0, %c0_i32, %c0_i32_0 : i32, i32, i32
  }
  func.func @transform_1(%arg0: i32) -> (i32, i32, i32) {
    %c0_i32 = arith.constant 0 : i32
    %c0_i32_0 = arith.constant 0 : i32
    %c0_i32_1 = arith.constant 0 : i32
    return %arg0, %c0_i32, %c0_i32_0 : i32, i32, i32
  }
  func.func @transform_2(%arg0: i32) -> (i32, i32) {
    %c0_i32 = arith.constant 0 : i32
    %c0_i32_0 = arith.constant 0 : i32
    %c0_i32_1 = arith.constant 0 : i32
    return %c0_i32, %c0_i32_0 : i32, i32
  }
  func.func @transform_3(%arg0: i32) -> (i32, i32) {
    %c0_i32 = arith.constant 0 : i32
    %c0_i32_0 = arith.constant 0 : i32
    %c0_i32_1 = arith.constant 0 : i32
    return %c0_i32, %c0_i32_0 : i32, i32
  }
  func.func @transform_4(%arg0: i32) -> (i32, i32) {
    %c0_i32 = arith.constant 0 : i32
    %c0_i32_0 = arith.constant 0 : i32
    %c0_i32_1 = arith.constant 0 : i32
    return %c0_i32, %c0_i32_0 : i32, i32
  }
  func.func @transform_5(%arg0: i32) -> (i32, i32) {
    %c0_i32 = arith.constant 0 : i32
    %c0_i32_0 = arith.constant 0 : i32
    %c0_i32_1 = arith.constant 0 : i32
    return %c0_i32, %c0_i32_0 : i32, i32
  }
  func.func @transform_6(%arg0: i32) -> (i32, i32) {
    %c0_i32 = arith.constant 0 : i32
    %c0_i32_0 = arith.constant 0 : i32
    %c0_i32_1 = arith.constant 0 : i32
    return %c0_i32, %c0_i32_0 : i32, i32
  }
  func.func @transform_7(%arg0: i32) -> (i32, i32) {
    %c0_i32 = arith.constant 0 : i32
    %c0_i32_0 = arith.constant 0 : i32
    %c0_i32_1 = arith.constant 0 : i32
    return %c0_i32, %c0_i32_0 : i32, i32
  }
  func.func @transform_8(%arg0: i32) -> (i32, i32) {
    %c0_i32 = arith.constant 0 : i32
    %c0_i32_0 = arith.constant 0 : i32
    %c0_i32_1 = arith.constant 0 : i32
    return %c0_i32, %c0_i32_0 : i32, i32
  }
  func.func @transform_9(%arg0: i32) -> (i32, i32) {
    %c0_i32 = arith.constant 0 : i32
    %c0_i32_0 = arith.constant 0 : i32
    %c0_i32_1 = arith.constant 0 : i32
    return %c0_i32, %c0_i32_0 : i32, i32
  }
  func.func @transform_10(%arg0: i32) -> (i32, i32, i32) {
    %c0_i32 = arith.constant 0 : i32
    %c0_i32_0 = arith.constant 0 : i32
    %c0_i32_1 = arith.constant 0 : i32
    return %arg0, %c0_i32, %c0_i32_0 : i32, i32, i32
  }
}

</mosaic_0001>

<llo_original>
// kernel: tpu_custom_call.1
$region0: #{tpu_custom_call.1}
  #allocation0 [shape = 'u32[]', space=smem, size = 0x4, offset = 0x4, fixed_abs, tag = 'smem constant byte address 0x4 - core index']
  #allocation1 [shape = 'u32[144,128]{1,0:T(1,128)}', space=vmem, size = 0x12000, scoped, tag = 'internal scratch']
  %s0 = inlined_call_operand.hbm [shape: f32[32,8,32], index: 0, kind: input, shape index: {}]
  %s1 = inlined_call_operand.hbm [shape: f32[32,8,128], index: 1, kind: input, shape index: {}]
  %s2 = inlined_call_operand.hbm [shape: bf16[32,512], index: 2, kind: input, shape index: {}]
  %s3 = inlined_call_operand.vmem [shape: f32[1,512], index: 3, kind: input, shape index: {}]
  %s4 = inlined_call_operand.vmem [shape: f32[1,512], index: 4, kind: input, shape index: {}]
  %s5 = inlined_call_operand.hbm [shape: bf16[512,256], index: 5, kind: input, shape index: {}]
  %s6 = inlined_call_operand.vmem [shape: f32[1,256], index: 6, kind: input, shape index: {}]
  %s7 = inlined_call_operand.vmem [shape: f32[1,256], index: 7, kind: input, shape index: {}]
  %s8 = inlined_call_operand.hbm [shape: bf16[256,128], index: 8, kind: input, shape index: {}]
  %s9 = inlined_call_operand.vmem [shape: f32[1,128], index: 9, kind: input, shape index: {}]
  %s10 = inlined_call_operand.hbm [shape: f32[32,8,128], index: 10, kind: output, shape index: {}]
  %s11 = sld [smem:[#allocation0]]
  $region93: #{tpu_custom_call.1} parent=0
    _
  %s13 = ssub.s32 1, %s11
  %s14 = scalar_select 0, %s13, %s11
  $region1: #{tpu_custom_call.1} parent=0
    #allocation2 [shape = 'u8[131072]{0}', space=vmem, size = 0x20000, scoped, tag = 'input window, operand 0']
    #allocation3 [shape = 's32[2]{0}', space=sflag, size = 0x8, scoped, tag = 'scoped memory for tpu_custom_call.1']
    #allocation4 [shape = 's32[2]{0}', space=sflag, size = 0x8, scoped, tag = 'scoped memory for tpu_custom_call.1']
    #allocation5 [shape = 'u8[131072]{0}', space=vmem, size = 0x20000, scoped, tag = 'input window, operand 1']
    #allocation6 [shape = 's32[2]{0}', space=sflag, size = 0x8, scoped, tag = 'scoped memory for tpu_custom_call.1']
    #allocation7 [shape = 'u8[32768]{0}', space=vmem, size = 0x8000, scoped, tag = 'input window, operand 2, single buffered']
    #allocation8 [shape = 'u8[262144]{0}', space=vmem, size = 0x40000, scoped, tag = 'input window, operand 5, single buffered']
    #allocation9 [shape = 's32[1]{0}', space=sflag, size = 0x4, scoped, tag = 'scoped memory for tpu_custom_call.1']
    #allocation10 [shape = 'u8[65536]{0}', space=vmem, size = 0x10000, scoped, tag = 'input window, operand 8, single buffered']
    #allocation11 [shape = 'u8[131072]{0}', space=vmem, size = 0x20000, scoped, tag = 'output window, operand 0']
    %15 = vsyncpa [#allocation3], 0
    %s16 = scalar_lea.sflag [#allocation3], 1
    %17 = vsyncpa %s16, 0
    %18 = vsyncpa [#allocation6], 0
    %s19 = scalar_lea.sflag [#allocation6], 1
    %20 = vsyncpa %s19, 0
    %21 = vsyncpa [#allocation9], 0
    %22 = vsyncpa [#allocation4], 0
    %s23 = scalar_lea.sflag [#allocation4], 1
    %24 = vsyncpa %s23, 0
    loop: start=0, step=1, limit=4
    $region2: #{tpu_custom_call.1} parent=1 // loop_pre_header
      _
    $region3: #{tpu_custom_call.1} parent=1 // loop_header
      %s26 = sphi 0, %s30
      %p27 = scmp.ge.s32.totalorder %s26, 4
      %s36 = sphi 0, %s38
      %s39 = sphi 0, %s36
      %s40 = sphi 0, %s39
      %s56 = sphi 0, %s40
      %s62 = sphi 0, %s64
      %s65 = sphi 0, %s62
      %s66 = sphi 0, %s65
      %s82 = sphi 0, %s66
      %s86 = sphi 0, %s86
      %s88 = sphi 0, %s86
      %s89 = sphi 0, %s88
      %s103 = sphi 0, %s89
      %s107 = sphi 0, %s107
      %s109 = sphi 0, %s107
      %s110 = sphi 0, %s109
      %s124 = sphi 0, %s110
      %s128 = sphi 0, %s128
      %s130 = sphi 0, %s128
      %s131 = sphi 0, %s130
      %s145 = sphi 0, %s131
      %s149 = sphi 0, %s149
      %s151 = sphi 0, %s149
      %s152 = sphi 0, %s151
      %s166 = sphi 0, %s152
      %s170 = sphi 0, %s170
      %s172 = sphi 0, %s170
      %s173 = sphi 0, %s172
      %s187 = sphi 0, %s173
      %s191 = sphi 0, %s191
      %s193 = sphi 0, %s191
      %s194 = sphi 0, %s193
      %s208 = sphi 0, %s194
      %s212 = sphi 0, %s212
      %s214 = sphi 0, %s212
      %s215 = sphi 0, %s214
      %s229 = sphi 0, %s215
      %s233 = sphi 0, %s233
      %s235 = sphi 0, %s233
      %s236 = sphi 0, %s235
      %s250 = sphi 0, %s236
      %s256 = sphi 0, %s258
      %s259 = sphi 0, %s256
      %s260 = sphi 0, %s259
      %s276 = sphi 0, %s260
    $region4: #{tpu_custom_call.1} parent=1 // loop_header_branch
      %29 = sbr.rel (%p27) target = $region8
    $region5: #{tpu_custom_call.1} parent=1 // loop_body
      %s31 = ssub.s32 %s26, 1
      %s32 = ssub.s32 %s26, 2
      %s33 = sadd.s32 %s26, 1
      %s34 = ssub.s32 %s26, %s33
      %p35 = scmp.eq.s32.totalorder %s34, 0
      %s37 = sadd.s32 %s36, 1
      %s38 = scalar_select %p35, %s36, %s37
      %p41 = pneg %p35
      %p42 = scmp.eq.s32.totalorder %s26, 1
      %p43 = por %p41, %p42
      %p44 = scmp.ne.s32.totalorder %s36, %s39
      %p45 = scmp.eq.s32.totalorder %s26, 0
      %p46 = por %p44, %p45
      %p47 = scmp.ne.s32.totalorder %s36, %s39
      %p48 = scmp.eq.s32.totalorder %s31, 1
      %p49 = por %p47, %p48
      %p50 = scmp.ne.s32.totalorder %s39, %s40
      %p51 = scmp.eq.s32.totalorder %s31, 0
      %p52 = por %p50, %p51
      %p53 = scmp.ne.s32.totalorder %s39, %s40
      %p54 = scmp.eq.s32.totalorder %s32, 1
      %p55 = por %p53, %p54
      %p57 = scmp.ne.s32.totalorder %s40, %s56
      %p58 = scmp.eq.s32.totalorder %s32, 0
      %p59 = por %p57, %p58
      %s60 = ssub.s32 %s26, %s33
      %p61 = scmp.eq.s32.totalorder %s60, 0
      %s63 = sadd.s32 %s62, 1
      %s64 = scalar_select %p61, %s62, %s63
      %p67 = pneg %p61
      %p68 = scmp.eq.s32.totalorder %s26, 1
      %p69 = por %p67, %p68
      %p70 = scmp.ne.s32.totalorder %s62, %s65
      %p71 = scmp.eq.s32.totalorder %s26, 0
      %p72 = por %p70, %p71
      %p73 = scmp.ne.s32.totalorder %s62, %s65
      %p74 = scmp.eq.s32.totalorder %s31, 1
      %p75 = por %p73, %p74
      %p76 = scmp.ne.s32.totalorder %s65, %s66
      %p77 = scmp.eq.s32.totalorder %s31, 0
      %p78 = por %p76, %p77
      %p79 = scmp.ne.s32.totalorder %s65, %s66
      %p80 = scmp.eq.s32.totalorder %s32, 1
      %p81 = por %p79, %p80
      %p83 = scmp.ne.s32.totalorder %s66, %s82
      %p84 = scmp.eq.s32.totalorder %s32, 0
      %p85 = por %p83, %p84
      %s87 = sadd.s32 %s86, 1
      %p90 = scmp.eq.s32.totalorder %s26, 1
      %p91 = scmp.ne.s32.totalorder %s86, %s88
      %p92 = scmp.eq.s32.totalorder %s26, 0
      %p93 = por %p91, %p92
      %p94 = scmp.ne.s32.totalorder %s86, %s88
      %p95 = scmp.eq.s32.totalorder %s31, 1
      %p96 = por %p94, %p95
      %p97 = scmp.ne.s32.totalorder %s88, %s89
      %p98 = scmp.eq.s32.totalorder %s31, 0
      %p99 = por %p97, %p98
      %p100 = scmp.ne.s32.totalorder %s88, %s89
      %p101 = scmp.eq.s32.totalorder %s32, 1
      %p102 = por %p100, %p101
      %p104 = scmp.ne.s32.totalorder %s89, %s103
      %p105 = scmp.eq.s32.totalorder %s32, 0
      %p106 = por %p104, %p105
      %s108 = sadd.s32 %s107, 1
      %p111 = scmp.eq.s32.totalorder %s26, 1
      %p112 = scmp.ne.s32.totalorder %s107, %s109
      %p113 = scmp.eq.s32.totalorder %s26, 0
      %p114 = por %p112, %p113
      %p115 = scmp.ne.s32.totalorder %s107, %s109
      %p116 = scmp.eq.s32.totalorder %s31, 1
      %p117 = por %p115, %p116
      %p118 = scmp.ne.s32.totalorder %s109, %s110
      %p119 = scmp.eq.s32.totalorder %s31, 0
      %p120 = por %p118, %p119
      %p121 = scmp.ne.s32.totalorder %s109, %s110
      %p122 = scmp.eq.s32.totalorder %s32, 1
      %p123 = por %p121, %p122
      %p125 = scmp.ne.s32.totalorder %s110, %s124
      %p126 = scmp.eq.s32.totalorder %s32, 0
      %p127 = por %p125, %p126
      %s129 = sadd.s32 %s128, 1
      %p132 = scmp.eq.s32.totalorder %s26, 1
      %p133 = scmp.ne.s32.totalorder %s128, %s130
      %p134 = scmp.eq.s32.totalorder %s26, 0
      %p135 = por %p133, %p134
      %p136 = scmp.ne.s32.totalorder %s128, %s130
      %p137 = scmp.eq.s32.totalorder %s31, 1
      %p138 = por %p136, %p137
      %p139 = scmp.ne.s32.totalorder %s130, %s131
      %p140 = scmp.eq.s32.totalorder %s31, 0
      %p141 = por %p139, %p140
      %p142 = scmp.ne.s32.totalorder %s130, %s131
      %p143 = scmp.eq.s32.totalorder %s32, 1
      %p144 = por %p142, %p143
      %p146 = scmp.ne.s32.totalorder %s131, %s145
      %p147 = scmp.eq.s32.totalorder %s32, 0
      %p148 = por %p146, %p147
      %s150 = sadd.s32 %s149, 1
      %p153 = scmp.eq.s32.totalorder %s26, 1
      %p154 = scmp.ne.s32.totalorder %s149, %s151
      %p155 = scmp.eq.s32.totalorder %s26, 0
      %p156 = por %p154, %p155
      %p157 = scmp.ne.s32.totalorder %s149, %s151
      %p158 = scmp.eq.s32.totalorder %s31, 1
      %p159 = por %p157, %p158
      %p160 = scmp.ne.s32.totalorder %s151, %s152
      %p161 = scmp.eq.s32.totalorder %s31, 0
      %p162 = por %p160, %p161
      %p163 = scmp.ne.s32.totalorder %s151, %s152
      %p164 = scmp.eq.s32.totalorder %s32, 1
      %p165 = por %p163, %p164
      %p167 = scmp.ne.s32.totalorder %s152, %s166
      %p168 = scmp.eq.s32.totalorder %s32, 0
      %p169 = por %p167, %p168
      %s171 = sadd.s32 %s170, 1
      %p174 = scmp.eq.s32.totalorder %s26, 1
      %p175 = scmp.ne.s32.totalorder %s170, %s172
      %p176 = scmp.eq.s32.totalorder %s26, 0
      %p177 = por %p175, %p176
      %p178 = scmp.ne.s32.totalorder %s170, %s172
      %p179 = scmp.eq.s32.totalorder %s31, 1
      %p180 = por %p178, %p179
      %p181 = scmp.ne.s32.totalorder %s172, %s173
      %p182 = scmp.eq.s32.totalorder %s31, 0
      %p183 = por %p181, %p182
      %p184 = scmp.ne.s32.totalorder %s172, %s173
      %p185 = scmp.eq.s32.totalorder %s32, 1
      %p186 = por %p184, %p185
      %p188 = scmp.ne.s32.totalorder %s173, %s187
      %p189 = scmp.eq.s32.totalorder %s32, 0
      %p190 = por %p188, %p189
      %s192 = sadd.s32 %s191, 1
      %p195 = scmp.eq.s32.totalorder %s26, 1
      %p196 = scmp.ne.s32.totalorder %s191, %s193
      %p197 = scmp.eq.s32.totalorder %s26, 0
      %p198 = por %p196, %p197
      %p199 = scmp.ne.s32.totalorder %s191, %s193
      %p200 = scmp.eq.s32.totalorder %s31, 1
      %p201 = por %p199, %p200
      %p202 = scmp.ne.s32.totalorder %s193, %s194
      %p203 = scmp.eq.s32.totalorder %s31, 0
      %p204 = por %p202, %p203
      %p205 = scmp.ne.s32.totalorder %s193, %s194
      %p206 = scmp.eq.s32.totalorder %s32, 1
      %p207 = por %p205, %p206
      %p209 = scmp.ne.s32.totalorder %s194, %s208
      %p210 = scmp.eq.s32.totalorder %s32, 0
      %p211 = por %p209, %p210
      %s213 = sadd.s32 %s212, 1
      %p216 = scmp.eq.s32.totalorder %s26, 1
      %p217 = scmp.ne.s32.totalorder %s212, %s214
      %p218 = scmp.eq.s32.totalorder %s26, 0
      %p219 = por %p217, %p218
      %p220 = scmp.ne.s32.totalorder %s212, %s214
      %p221 = scmp.eq.s32.totalorder %s31, 1
      %p222 = por %p220, %p221
      %p223 = scmp.ne.s32.totalorder %s214, %s215
      %p224 = scmp.eq.s32.totalorder %s31, 0
      %p225 = por %p223, %p224
      %p226 = scmp.ne.s32.totalorder %s214, %s215
      %p227 = scmp.eq.s32.totalorder %s32, 1
      %p228 = por %p226, %p227
      %p230 = scmp.ne.s32.totalorder %s215, %s229
      %p231 = scmp.eq.s32.totalorder %s32, 0
      %p232 = por %p230, %p231
      %s234 = sadd.s32 %s233, 1
      %p237 = scmp.eq.s32.totalorder %s26, 1
      %p238 = scmp.ne.s32.totalorder %s233, %s235
      %p239 = scmp.eq.s32.totalorder %s26, 0
      %p240 = por %p238, %p239
      %p241 = scmp.ne.s32.totalorder %s233, %s235
      %p242 = scmp.eq.s32.totalorder %s31, 1
      %p243 = por %p241, %p242
      %p244 = scmp.ne.s32.totalorder %s235, %s236
      %p245 = scmp.eq.s32.totalorder %s31, 0
      %p246 = por %p244, %p245
      %p247 = scmp.ne.s32.totalorder %s235, %s236
      %p248 = scmp.eq.s32.totalorder %s32, 1
      %p249 = por %p247, %p248
      %p251 = scmp.ne.s32.totalorder %s236, %s250
      %p252 = scmp.eq.s32.totalorder %s32, 0
      %p253 = por %p251, %p252
      %s254 = ssub.s32 %s26, %s33
      %p255 = scmp.eq.s32.totalorder %s254, 0
      %s257 = sadd.s32 %s256, 1
      %s258 = scalar_select %p255, %s256, %s257
      %p261 = pneg %p255
      %p262 = scmp.eq.s32.totalorder %s26, 1
      %p263 = por %p261, %p262
      %p264 = scmp.ne.s32.totalorder %s256, %s259
      %p265 = scmp.eq.s32.totalorder %s26, 0
      %p266 = por %p264, %p265
      %p267 = scmp.ne.s32.totalorder %s256, %s259
      %p268 = scmp.eq.s32.totalorder %s31, 1
      %p269 = por %p267, %p268
      %p270 = scmp.ne.s32.totalorder %s259, %s260
      %p271 = scmp.eq.s32.totalorder %s31, 0
      %p272 = por %p270, %p271
      %p273 = scmp.ne.s32.totalorder %s259, %s260
      %p274 = scmp.eq.s32.totalorder %s32, 1
      %p275 = por %p273, %p274
      %p277 = scmp.ne.s32.totalorder %s260, %s276
      %p278 = scmp.eq.s32.totalorder %s32, 0
      %p279 = por %p277, %p278
      %p280 = scmp.le.s32.totalorder 1, %s26
      %p281 = scmp.lt.s32.totalorder %s26, 3
      %p282 = pnand %p280, %p281
      %p283 = pneg %p282
      // Predicated region
      $region9: #{tpu_custom_call.1} parent=5 // pred_check
        _
      $region10: #{tpu_custom_call.1} parent=5 // pred_check_branch
        %285 = sbr.rel (%p282) target = $region12
      $region11: #{tpu_custom_call.1} parent=5 // pred_region
        %s286 = ssub.s32 %s26, 1
        // Predicated region
        $region13: #{tpu_custom_call.1} parent=11 // pred_check
          %p287 = pneg %p99
        $region14: #{tpu_custom_call.1} parent=11 // pred_check_branch
          %289 = sbr.rel (%p287) target = $region16
        $region15: #{tpu_custom_call.1} parent=11 // pred_region
          %s291 = ssub.s32 1024, 1024
          %292 = vsyncadd [#allocation6], %s291
          %s293 = sshll.u32 [#allocation7], 4
          %s294 = int_to_ptr.vmem [resolvable:$true] %s293
          %299 = dma.hbm_to_vmem [thread:$0]  %s2, 1024, %s294, [#allocation6], 256, 256, 16
        $region16: #{tpu_custom_call.1} parent=11 // pred_fallthru
          _
        // Predicated region
        $region17: #{tpu_custom_call.1} parent=11 // pred_check
          %p300 = pneg %p120
        $region18: #{tpu_custom_call.1} parent=11 // pred_check_branch
          %302 = sbr.rel (%p300) target = $region20
        $region19: #{tpu_custom_call.1} parent=11 // pred_region
          _
        $region20: #{tpu_custom_call.1} parent=11 // pred_fallthru
          _
        // Predicated region
        $region21: #{tpu_custom_call.1} parent=11 // pred_check
          %p303 = pneg %p141
        $region22: #{tpu_custom_call.1} parent=11 // pred_check_branch
          %305 = sbr.rel (%p303) target = $region24
        $region23: #{tpu_custom_call.1} parent=11 // pred_region
          _
        $region24: #{tpu_custom_call.1} parent=11 // pred_fallthru
          _
        // Predicated region
        $region25: #{tpu_custom_call.1} parent=11 // pred_check
          %p306 = pneg %p162
        $region26: #{tpu_custom_call.1} parent=11 // pred_check_branch
          %308 = sbr.rel (%p306) target = $region28
        $region27: #{tpu_custom_call.1} parent=11 // pred_region
          %s310 = ssub.s32 8192, 8192
          %311 = vsyncadd [#allocation9], %s310
          %s312 = sshll.u32 [#allocation8], 4
          %s313 = int_to_ptr.vmem [resolvable:$true] %s312
          %318 = dma.hbm_to_vmem [thread:$0]  %s5, 8192, %s313, [#allocation9], 128, 128, 8
        $region28: #{tpu_custom_call.1} parent=11 // pred_fallthru
          _
        // Predicated region
        $region29: #{tpu_custom_call.1} parent=11 // pred_check
          %p319 = pneg %p183
        $region30: #{tpu_custom_call.1} parent=11 // pred_check_branch
          %321 = sbr.rel (%p319) target = $region32
        $region31: #{tpu_custom_call.1} parent=11 // pred_region
          _
        $region32: #{tpu_custom_call.1} parent=11 // pred_fallthru
          _
        // Predicated region
        $region33: #{tpu_custom_call.1} parent=11 // pred_check
          %p322 = pneg %p204
        $region34: #{tpu_custom_call.1} parent=11 // pred_check_branch
          %324 = sbr.rel (%p322) target = $region36
        $region35: #{tpu_custom_call.1} parent=11 // pred_region
          _
        $region36: #{tpu_custom_call.1} parent=11 // pred_fallthru
          _
        // Predicated region
        $region37: #{tpu_custom_call.1} parent=11 // pred_check
          %p325 = pneg %p225
        $region38: #{tpu_custom_call.1} parent=11 // pred_check_branch
          %327 = sbr.rel (%p325) target = $region40
        $region39: #{tpu_custom_call.1} parent=11 // pred_region
          %s329 = ssub.s32 2048, 2048
          %330 = vsyncadd [#allocation9], %s329
          %s331 = sshll.u32 [#allocation10], 4
          %s332 = int_to_ptr.vmem [resolvable:$true] %s331
          %337 = dma.hbm_to_vmem [thread:$0]  %s8, 2048, %s332, [#allocation9], 64, 64, 4
        $region40: #{tpu_custom_call.1} parent=11 // pred_fallthru
          _
        // Predicated region
        $region41: #{tpu_custom_call.1} parent=11 // pred_check
          %p338 = pneg %p246
        $region42: #{tpu_custom_call.1} parent=11 // pred_check_branch
          %340 = sbr.rel (%p338) target = $region44
        $region43: #{tpu_custom_call.1} parent=11 // pred_region
          _
        $region44: #{tpu_custom_call.1} parent=11 // pred_fallthru
          _
      $region12: #{tpu_custom_call.1} parent=5 // pred_fallthru
        _
      %p341 = scmp.lt.s32.totalorder %s26, 2
      // Predicated region
      $region45: #{tpu_custom_call.1} parent=5 // pred_check
        %p342 = pneg %p341
      $region46: #{tpu_custom_call.1} parent=5 // pred_check_branch
        %344 = sbr.rel (%p342) target = $region48
      $region47: #{tpu_custom_call.1} parent=5 // pred_region
        // Predicated region
        $region49: #{tpu_custom_call.1} parent=47 // pred_check
          %p345 = pneg %p46
        $region50: #{tpu_custom_call.1} parent=47 // pred_check_branch
          %347 = sbr.rel (%p345) target = $region52
        $region51: #{tpu_custom_call.1} parent=47 // pred_region
          %s348 = sand.u32 %s36, 1
          %s349 = scalar_lea.sflag [#allocation3], %s348
          %s350 = sand.u32 %s36, 1
          %s351 = smul.addr %s350, 128
          %s352 = scalar_lea.vmem [#allocation2], %s351
          %s353 = smul.u32 16, %s26
          %s355 = ssub.s32 2048, 2048
          %356 = vsyncadd %s349, %s355
          %s357 = smul.addr %s353, 128
          %s358 = scalar_lea.hbm %s0, %s357
          %s359 = sshll.u32 %s352, 4
          %s360 = int_to_ptr.vmem [resolvable:$true] %s359
          %365 = dma.hbm_to_vmem [thread:$0]  %s358, 2048, %s360, %s349, 128, 128, 8
        $region52: #{tpu_custom_call.1} parent=47 // pred_fallthru
          _
        // Predicated region
        $region53: #{tpu_custom_call.1} parent=47 // pred_check
          %p366 = pneg %p72
        $region54: #{tpu_custom_call.1} parent=47 // pred_check_branch
          %368 = sbr.rel (%p366) target = $region56
        $region55: #{tpu_custom_call.1} parent=47 // pred_region
          %s369 = sand.u32 %s26, 1
          %s370 = scalar_lea.sflag [#allocation6], %s369
          %s371 = sand.u32 %s62, 1
          %s372 = smul.addr %s371, 128
          %s373 = scalar_lea.vmem [#allocation5], %s372
          %s374 = smul.u32 16, %s26
          %s376 = ssub.s32 2048, 2048
          %377 = vsyncadd %s370, %s376
          %s378 = smul.addr %s374, 128
          %s379 = scalar_lea.hbm %s1, %s378
          %s380 = sshll.u32 %s373, 4
          %s381 = int_to_ptr.vmem [resolvable:$true] %s380
          %386 = dma.hbm_to_vmem [thread:$0]  %s379, 2048, %s381, %s370, 128, 128, 8
        $region56: #{tpu_custom_call.1} parent=47 // pred_fallthru
          _
      $region48: #{tpu_custom_call.1} parent=5 // pred_fallthru
        _
      %p387 = scmp.le.s32.totalorder 1, %s26
      %p388 = scmp.lt.s32.totalorder %s26, 3
      %p389 = pnand %p387, %p388
      %p390 = pneg %p389
      // Predicated region
      $region57: #{tpu_custom_call.1} parent=5 // pred_check
        _
      $region58: #{tpu_custom_call.1} parent=5 // pred_check_branch
        %392 = sbr.rel (%p389) target = $region60
      $region59: #{tpu_custom_call.1} parent=5 // pred_region
        %s393 = ssub.s32 %s26, 1
        %s394 = sand.u32 %s39, 1
        %s395 = scalar_lea.sflag [#allocation3], %s394
        %s396 = sand.u32 %s39, 1
        %s397 = smul.addr %s396, 128
        %s398 = scalar_lea.vmem [#allocation2], %s397
        // Predicated region
        $region61: #{tpu_custom_call.1} parent=59 // pred_check
          %p399 = pneg %p52
        $region62: #{tpu_custom_call.1} parent=59 // pred_check_branch
          %401 = sbr.rel (%p399) target = $region64
        $region63: #{tpu_custom_call.1} parent=59 // pred_region
          %402 = dma.done %s395, 2048
        $region64: #{tpu_custom_call.1} parent=59 // pred_fallthru
          _
        %s403 = sand.u32 %s31, 1
        %s404 = scalar_lea.sflag [#allocation6], %s403
        %s405 = sand.u32 %s65, 1
        %s406 = smul.addr %s405, 128
        %s407 = scalar_lea.vmem [#allocation5], %s406
        // Predicated region
        $region65: #{tpu_custom_call.1} parent=59 // pred_check
          %p408 = pneg %p78
        $region66: #{tpu_custom_call.1} parent=59 // pred_check_branch
          %410 = sbr.rel (%p408) target = $region68
        $region67: #{tpu_custom_call.1} parent=59 // pred_region
          %411 = dma.done %s404, 2048
        $region68: #{tpu_custom_call.1} parent=59 // pred_fallthru
          _
        // Predicated region
        $region69: #{tpu_custom_call.1} parent=59 // pred_check
          %p412 = pneg %p99
        $region70: #{tpu_custom_call.1} parent=59 // pred_check_branch
          %414 = sbr.rel (%p412) target = $region72
        $region71: #{tpu_custom_call.1} parent=59 // pred_region
          %415 = dma.done [#allocation6], 1024
        $region72: #{tpu_custom_call.1} parent=59 // pred_fallthru
          _
        // Predicated region
        $region73: #{tpu_custom_call.1} parent=59 // pred_check
          %p416 = pneg %p162
        $region74: #{tpu_custom_call.1} parent=59 // pred_check_branch
          %418 = sbr.rel (%p416) target = $region76
        $region75: #{tpu_custom_call.1} parent=59 // pred_region
          %419 = dma.done [#allocation9], 8192
        $region76: #{tpu_custom_call.1} parent=59 // pred_fallthru
          _
        // Predicated region
        $region77: #{tpu_custom_call.1} parent=59 // pred_check
          %p420 = pneg %p225
        $region78: #{tpu_custom_call.1} parent=59 // pred_check_branch
          %422 = sbr.rel (%p420) target = $region80
        $region79: #{tpu_custom_call.1} parent=59 // pred_region
          %423 = dma.done [#allocation9], 2048
        $region80: #{tpu_custom_call.1} parent=59 // pred_fallthru
          _
        %s424 = sand.u32 %s39, 1
        %s425 = scalar_lea.sflag [#allocation3], %s424
        %s426 = sand.u32 %s39, 1
        %s427 = smul.addr %s426, 128
        %s428 = scalar_lea.vmem [#allocation2], %s427
        %p429 = pneg %p52
        %p430 = pneg %p49
        %s431 = sand.u32 %s31, 1
        %s432 = scalar_lea.sflag [#allocation6], %s431
        %s433 = sand.u32 %s65, 1
        %s434 = smul.addr %s433, 128
        %s435 = scalar_lea.vmem [#allocation5], %s434
        %p436 = pneg %p78
        %p437 = pneg %p75
        %p438 = pneg %p99
        %p439 = pneg %p96
        %p440 = pneg %p120
        %p441 = pneg %p117
        %p442 = pneg %p141
        %p443 = pneg %p138
        %p444 = pneg %p162
        %p445 = pneg %p159
        %p446 = pneg %p183
        %p447 = pneg %p180
        %p448 = pneg %p204
        %p449 = pneg %p201
        %p450 = pneg %p225
        %p451 = pneg %p222
        %p452 = pneg %p246
        %p453 = pneg %p243
        %p454 = pneg %p272
        %p455 = pneg %p269
        %s456 = sand.u32 %s259, 1
        %s457 = scalar_lea.sflag [#allocation4], %s456
        %s458 = sand.u32 %s259, 1
        %s459 = smul.addr %s458, 128
        %s460 = scalar_lea.vmem [#allocation11], %s459
        %s461 = smul.u32 16, %s31
        %s462 = smul.u32 16, %s31
        %s463 = smul.u32 16, %s31
        %v465 = vld [vmem:[%s398] sm:$0xff]
        %v466 = vld [vmem:[%s398 + $0x8] sm:$0xff]
        %v467 = vld [vmem:[%s398 + $0x10] sm:$0xff]
        %v468 = vld [vmem:[%s398 + $0x18] sm:$0xff]
        %v469 = vld [vmem:[%s398 + $0x20] sm:$0xff]
        %v470 = vld [vmem:[%s398 + $0x28] sm:$0xff]
        %v471 = vld [vmem:[%s398 + $0x30] sm:$0xff]
        %v472 = vld [vmem:[%s398 + $0x38] sm:$0xff]
        %v473 = vld [vmem:[%s398 + $0x40] sm:$0xff]
        %v474 = vld [vmem:[%s398 + $0x48] sm:$0xff]
        %v475 = vld [vmem:[%s398 + $0x50] sm:$0xff]
        %v476 = vld [vmem:[%s398 + $0x58] sm:$0xff]
        %v477 = vld [vmem:[%s398 + $0x60] sm:$0xff]
        %v478 = vld [vmem:[%s398 + $0x68] sm:$0xff]
        %v479 = vld [vmem:[%s398 + $0x70] sm:$0xff]
        %v480 = vld [vmem:[%s398 + $0x78] sm:$0xff]
        %v481 = vpack.c.bf16 %v466, %v465
        %v482 = vpack.c.bf16 %v468, %v467
        %v483 = vpack.c.bf16 %v470, %v469
        %v484 = vpack.c.bf16 %v472, %v471
        %v485 = vpack.c.bf16 %v474, %v473
        %v486 = vpack.c.bf16 %v476, %v475
        %v487 = vpack.c.bf16 %v478, %v477
        %v488 = vpack.c.bf16 %v480, %v479
        %v489 = vld [vmem:[#allocation7] sm:$0xff]
        %v490 = vld [vmem:[#allocation7 + $0x8] sm:$0xff]
        %v491 = vld [vmem:[#allocation7 + $0x10] sm:$0xff]
        %v492 = vld [vmem:[#allocation7 + $0x18] sm:$0xff]
        %v493 = vld [vmem:[#allocation7 + $0x20] sm:$0xff]
        %v494 = vld [vmem:[#allocation7 + $0x28] sm:$0xff]
        %v495 = vld [vmem:[#allocation7 + $0x30] sm:$0xff]
        %v496 = vld [vmem:[#allocation7 + $0x38] sm:$0xff]
        %v505 = vunpack.c.l.b16 %v489
        %v506 = vunpack.c.h.b16 %v489
        %v507 = vunpack.c.l.b16 %v490
        %v508 = vunpack.c.h.b16 %v490
        %v509 = vunpack.c.l.b16 %v491
        %v510 = vunpack.c.h.b16 %v491
        %v511 = vunpack.c.l.b16 %v492
        %v512 = vunpack.c.h.b16 %v492
        %v513 = vunpack.c.l.b16 %v493
        %v514 = vunpack.c.h.b16 %v493
        %v515 = vunpack.c.l.b16 %v494
        %v516 = vunpack.c.h.b16 %v494
        %v517 = vunpack.c.l.b16 %v495
        %v518 = vunpack.c.h.b16 %v495
        %v519 = vunpack.c.l.b16 %v496
        %v520 = vunpack.c.h.b16 %v496
        %v521 = vpack.c.b16 %v509, %v505
        %v522 = vpack.c.b16 %v510, %v506
        %v523 = vpack.c.b16 %v511, %v507
        %v524 = vpack.c.b16 %v512, %v508
        %v525 = vpack.c.b16 %v517, %v513
        %v526 = vpack.c.b16 %v518, %v514
        %v527 = vpack.c.b16 %v519, %v515
        %v528 = vpack.c.b16 %v520, %v516
        %vm537 = vcmask 261120
        %v539 = vsel %vm537, %v481, 0
        %v542 = vsel %vm537, %v482, 0
        %v545 = vsel %vm537, %v483, 0
        %v548 = vsel %vm537, %v484, 0
        %v551 = vsel %vm537, %v485, 0
        %v554 = vsel %vm537, %v486, 0
        %v557 = vsel %vm537, %v487, 0
        %v560 = vsel %vm537, %v488, 0
        %562 = vmatprep.subr.bf16.mxu0 %v522
        %563 = vmatpush1.bf16.msra.mxu0 %v521
        %564 = vmatprep.subr.bf16.mxu0 %v526
        %565 = vmatpush1.bf16.msra.mxu0 %v525
        %566 = vmatprep.subr.bf16.mxu0 0
        %567 = vmatpush1.bf16.msra.mxu0 0
        %568 = vmatprep.subr.bf16.mxu0 0
        %569 = vmatpush1.bf16.msra.mxu0 0
        %570 = vmatprep.subr.bf16.mxu0 0
        %571 = vmatpush1.bf16.msra.mxu0 0
        %572 = vmatprep.subr.bf16.mxu0 0
        %573 = vmatpush1.bf16.msra.mxu0 0
        %574 = vmatprep.subr.bf16.mxu0 0
        %575 = vmatpush1.bf16.msra.mxu0 0
        %576 = vmatprep.subr.bf16.mxu0 0
        %577 = vmatpush1.bf16.msra.mxu0 0
        %578 = vmatprep.subr.bf16.mxu0 0
        %579 = vmatpush1.bf16.msra.mxu0 0
        %580 = vmatprep.subr.bf16.mxu0 0
        %581 = vmatpush1.bf16.msra.mxu0 0
        %582 = vmatprep.subr.bf16.mxu0 0
        %583 = vmatpush1.bf16.msra.mxu0 0
        %584 = vmatprep.subr.bf16.mxu0 0
        %585 = vmatpush1.bf16.msra.mxu0 0
        %586 = vmatprep.subr.bf16.mxu0 0
        %587 = vmatpush1.bf16.msra.mxu0 0
        %588 = vmatprep.subr.bf16.mxu0 0
        %589 = vmatpush1.bf16.msra.mxu0 0
        %590 = vmatprep.subr.bf16.mxu0 0
        %591 = vmatpush1.bf16.msra.mxu0 0
        %592 = vmatprep.subr.bf16.mxu0 0
        %593 = vmatpush1.bf16.msra.mxu0 0
        %594 = vmatprep.mubr.bf16.mxu0 0
        %595 = vmatmul.mubr.bf16.gmra.mrb[0].mxu0 %v539
        %v596 = vpop.f32.mrb[0].mxu0
        %v597 = vadd.f32 0.0, %v596
        %v598 = vpop.f32.mrb[0].mxu0
        %v599 = vadd.f32 0.0, %v598
        %v600 = vpop.f32.mrb[0].mxu0
        %v601 = vadd.f32 0.0, %v600
        %v602 = vpop.f32.mrb[0].mxu0
        %v603 = vadd.f32 0.0, %v602
        %604 = vmatprep.mubr.bf16.mxu0 0
        %605 = vmatmul.mubr.bf16.gmra.mrb[0].mxu0 %v542
        %v606 = vpop.f32.mrb[0].mxu0
        %v607 = vadd.f32 0.0, %v606
        %v608 = vpop.f32.mrb[0].mxu0
        %v609 = vadd.f32 0.0, %v608
        %v610 = vpop.f32.mrb[0].mxu0
        %v611 = vadd.f32 0.0, %v610
        %v612 = vpop.f32.mrb[0].mxu0
        %v613 = vadd.f32 0.0, %v612
        %614 = vmatprep.mubr.bf16.mxu0 0
        %615 = vmatmul.mubr.bf16.gmra.mrb[0].mxu0 %v545
        %v616 = vpop.f32.mrb[0].mxu0
        %v617 = vadd.f32 0.0, %v616
        %v618 = vpop.f32.mrb[0].mxu0
        %v619 = vadd.f32 0.0, %v618
        %v620 = vpop.f32.mrb[0].mxu0
        %v621 = vadd.f32 0.0, %v620
        %v622 = vpop.f32.mrb[0].mxu0
        %v623 = vadd.f32 0.0, %v622
        %624 = vmatprep.mubr.bf16.mxu0 0
        %625 = vmatmul.mubr.bf16.gmra.mrb[0].mxu0 %v548
        %v626 = vpop.f32.mrb[0].mxu0
        %v627 = vadd.f32 0.0, %v626
        %v628 = vpop.f32.mrb[0].mxu0
        %v629 = vadd.f32 0.0, %v628
        %v630 = vpop.f32.mrb[0].mxu0
        %v631 = vadd.f32 0.0, %v630
        %v632 = vpop.f32.mrb[0].mxu0
        %v633 = vadd.f32 0.0, %v632
        %634 = vmatprep.mubr.bf16.mxu0 0
        %635 = vmatmul.mubr.bf16.gmra.mrb[0].mxu0 %v551
        %v636 = vpop.f32.mrb[0].mxu0
        %v637 = vadd.f32 0.0, %v636
        %v638 = vpop.f32.mrb[0].mxu0
        %v639 = vadd.f32 0.0, %v638
        %v640 = vpop.f32.mrb[0].mxu0
        %v641 = vadd.f32 0.0, %v640
        %v642 = vpop.f32.mrb[0].mxu0
        %v643 = vadd.f32 0.0, %v642
        %644 = vmatprep.mubr.bf16.mxu0 0
        %645 = vmatmul.mubr.bf16.gmra.mrb[0].mxu0 %v554
        %v646 = vpop.f32.mrb[0].mxu0
        %v647 = vadd.f32 0.0, %v646
        %v648 = vpop.f32.mrb[0].mxu0
        %v649 = vadd.f32 0.0, %v648
        %v650 = vpop.f32.mrb[0].mxu0
        %v651 = vadd.f32 0.0, %v650
        %v652 = vpop.f32.mrb[0].mxu0
        %v653 = vadd.f32 0.0, %v652
        %654 = vmatprep.mubr.bf16.mxu0 0
        %655 = vmatmul.mubr.bf16.gmra.mrb[0].mxu0 %v557
        %v656 = vpop.f32.mrb[0].mxu0
        %v657 = vadd.f32 0.0, %v656
        %v658 = vpop.f32.mrb[0].mxu0
        %v659 = vadd.f32 0.0, %v658
        %v660 = vpop.f32.mrb[0].mxu0
        %v661 = vadd.f32 0.0, %v660
        %v662 = vpop.f32.mrb[0].mxu0
        %v663 = vadd.f32 0.0, %v662
        %664 = vmatprep.mubr.bf16.mxu0 0
        %665 = vmatmul.mubr.bf16.gmra.mrb[0].mxu0 %v560
        %v666 = vpop.f32.mrb[0].mxu0
        %v667 = vadd.f32 0.0, %v666
        %v668 = vpop.f32.mrb[0].mxu0
        %v669 = vadd.f32 0.0, %v668
        %v670 = vpop.f32.mrb[0].mxu0
        %v671 = vadd.f32 0.0, %v670
        %v672 = vpop.f32.mrb[0].mxu0
        %v673 = vadd.f32 0.0, %v672
        %674 = vdwg.mxu0
        %675 = vmatprep.subr.bf16.mxu0 %v524
        %676 = vmatpush1.bf16.msra.mxu0 %v523
        %677 = vmatprep.subr.bf16.mxu0 %v528
        %678 = vmatpush1.bf16.msra.mxu0 %v527
        %679 = vmatprep.subr.bf16.mxu0 0
        %680 = vmatpush1.bf16.msra.mxu0 0
        %681 = vmatprep.subr.bf16.mxu0 0
        %682 = vmatpush1.bf16.msra.mxu0 0
        %683 = vmatprep.subr.bf16.mxu0 0
        %684 = vmatpush1.bf16.msra.mxu0 0
        %685 = vmatprep.subr.bf16.mxu0 0
        %686 = vmatpush1.bf16.msra.mxu0 0
        %687 = vmatprep.subr.bf16.mxu0 0
        %688 = vmatpush1.bf16.msra.mxu0 0
        %689 = vmatprep.subr.bf16.mxu0 0
        %690 = vmatpush1.bf16.msra.mxu0 0
        %691 = vmatprep.subr.bf16.mxu0 0
        %692 = vmatpush1.bf16.msra.mxu0 0
        %693 = vmatprep.subr.bf16.mxu0 0
        %694 = vmatpush1.bf16.msra.mxu0 0
        %695 = vmatprep.subr.bf16.mxu0 0
        %696 = vmatpush1.bf16.msra.mxu0 0
        %697 = vmatprep.subr.bf16.mxu0 0
        %698 = vmatpush1.bf16.msra.mxu0 0
        %699 = vmatprep.subr.bf16.mxu0 0
        %700 = vmatpush1.bf16.msra.mxu0 0
        %701 = vmatprep.subr.bf16.mxu0 0
        %702 = vmatpush1.bf16.msra.mxu0 0
        %703 = vmatprep.subr.bf16.mxu0 0
        %704 = vmatpush1.bf16.msra.mxu0 0
        %705 = vmatprep.subr.bf16.mxu0 0
        %706 = vmatpush1.bf16.msra.mxu0 0
        %707 = vmatprep.mubr.bf16.mxu0 0
        %708 = vmatmul.mubr.bf16.gmra.mrb[0].mxu0 %v539
        %v709 = vpop.f32.mrb[0].mxu0
        %v710 = vadd.f32 0.0, %v709
        %v711 = vpop.f32.mrb[0].mxu0
        %v712 = vadd.f32 0.0, %v711
        %v713 = vpop.f32.mrb[0].mxu0
        %v714 = vadd.f32 0.0, %v713
        %v715 = vpop.f32.mrb[0].mxu0
        %v716 = vadd.f32 0.0, %v715
        %717 = vmatprep.mubr.bf16.mxu0 0
        %718 = vmatmul.mubr.bf16.gmra.mrb[0].mxu0 %v542
        %v719 = vpop.f32.mrb[0].mxu0
        %v720 = vadd.f32 0.0, %v719
        %v721 = vpop.f32.mrb[0].mxu0
        %v722 = vadd.f32 0.0, %v721
        %v723 = vpop.f32.mrb[0].mxu0
        %v724 = vadd.f32 0.0, %v723
        %v725 = vpop.f32.mrb[0].mxu0
        %v726 = vadd.f32 0.0, %v725
        %727 = vmatprep.mubr.bf16.mxu0 0
        %728 = vmatmul.mubr.bf16.gmra.mrb[0].mxu0 %v545
        %v729 = vpop.f32.mrb[0].mxu0
        %v730 = vadd.f32 0.0, %v729
        %v731 = vpop.f32.mrb[0].mxu0
        %v732 = vadd.f32 0.0, %v731
        %v733 = vpop.f32.mrb[0].mxu0
        %v734 = vadd.f32 0.0, %v733
        %v735 = vpop.f32.mrb[0].mxu0
        %v736 = vadd.f32 0.0, %v735
        %737 = vmatprep.mubr.bf16.mxu0 0
        %738 = vmatmul.mubr.bf16.gmra.mrb[0].mxu0 %v548
        %v739 = vpop.f32.mrb[0].mxu0
        %v740 = vadd.f32 0.0, %v739
        %v741 = vpop.f32.mrb[0].mxu0
        %v742 = vadd.f32 0.0, %v741
        %v743 = vpop.f32.mrb[0].mxu0
        %v744 = vadd.f32 0.0, %v743
        %v745 = vpop.f32.mrb[0].mxu0
        %v746 = vadd.f32 0.0, %v745
        %747 = vmatprep.mubr.bf16.mxu0 0
        %748 = vmatmul.mubr.bf16.gmra.mrb[0].mxu0 %v551
        %v749 = vpop.f32.mrb[0].mxu0
        %v750 = vadd.f32 0.0, %v749
        %v751 = vpop.f32.mrb[0].mxu0
        %v752 = vadd.f32 0.0, %v751
        %v753 = vpop.f32.mrb[0].mxu0
        %v754 = vadd.f32 0.0, %v753
        %v755 = vpop.f32.mrb[0].mxu0
        %v756 = vadd.f32 0.0, %v755
        %757 = vmatprep.mubr.bf16.mxu0 0
        %758 = vmatmul.mubr.bf16.gmra.mrb[0].mxu0 %v554
        %v759 = vpop.f32.mrb[0].mxu0
        %v760 = vadd.f32 0.0, %v759
        %v761 = vpop.f32.mrb[0].mxu0
        %v762 = vadd.f32 0.0, %v761
        %v763 = vpop.f32.mrb[0].mxu0
        %v764 = vadd.f32 0.0, %v763
        %v765 = vpop.f32.mrb[0].mxu0
        %v766 = vadd.f32 0.0, %v765
        %767 = vmatprep.mubr.bf16.mxu0 0
        %768 = vmatmul.mubr.bf16.gmra.mrb[0].mxu0 %v557
        %v769 = vpop.f32.mrb[0].mxu0
        %v770 = vadd.f32 0.0, %v769
        %v771 = vpop.f32.mrb[0].mxu0
        %v772 = vadd.f32 0.0, %v771
        %v773 = vpop.f32.mrb[0].mxu0
        %v774 = vadd.f32 0.0, %v773
        %v775 = vpop.f32.mrb[0].mxu0
        %v776 = vadd.f32 0.0, %v775
        %777 = vmatprep.mubr.bf16.mxu0 0
        %778 = vmatmul.mubr.bf16.gmra.mrb[0].mxu0 %v560
        %v779 = vpop.f32.mrb[0].mxu0
        %v780 = vadd.f32 0.0, %v779
        %v781 = vpop.f32.mrb[0].mxu0
        %v782 = vadd.f32 0.0, %v781
        %v783 = vpop.f32.mrb[0].mxu0
        %v784 = vadd.f32 0.0, %v783
        %v785 = vpop.f32.mrb[0].mxu0
        %v786 = vadd.f32 0.0, %v785
        %787 = vdwg.mxu0
        %v788 = vld [vmem:[%s3] sm:$0xf]
        %v789 = vld [vmem:[%s4] sm:$0xf]
        %v790 = vrot.slane %v597, 4
        %v791 = vadd.f32 %v597, %v790
        %v792 = vrot.slane %v791, 2
        %v793 = vadd.f32 %v791, %v792
        %v794 = vrot.slane %v793, 1
        %v795 = vadd.f32 %v793, %v794
        %v796 = vrot.slane %v599, 4
        %v797 = vadd.f32 %v599, %v796
        %v798 = vrot.slane %v797, 2
        %v799 = vadd.f32 %v797, %v798
        %v800 = vrot.slane %v799, 1
        %v801 = vadd.f32 %v799, %v800
        %v802 = vrot.slane %v710, 4
        %v803 = vadd.f32 %v710, %v802
        %v804 = vrot.slane %v803, 2
        %v805 = vadd.f32 %v803, %v804
        %v806 = vrot.slane %v805, 1
        %v807 = vadd.f32 %v805, %v806
        %v808 = vrot.slane %v712, 4
        %v809 = vadd.f32 %v712, %v808
        %v810 = vrot.slane %v809, 2
        %v811 = vadd.f32 %v809, %v810
        %v812 = vrot.slane %v811, 1
        %v813 = vadd.f32 %v811, %v812
        %v814 = vrot.slane %v601, 4
        %v815 = vadd.f32 %v601, %v814
        %v816 = vrot.slane %v815, 2
        %v817 = vadd.f32 %v815, %v816
        %v818 = vrot.slane %v817, 1
        %v819 = vadd.f32 %v817, %v818
        %v820 = vrot.slane %v603, 4
        %v821 = vadd.f32 %v603, %v820
        %v822 = vrot.slane %v821, 2
        %v823 = vadd.f32 %v821, %v822
        %v824 = vrot.slane %v823, 1
        %v825 = vadd.f32 %v823, %v824
        %v826 = vrot.slane %v714, 4
        %v827 = vadd.f32 %v714, %v826
        %v828 = vrot.slane %v827, 2
        %v829 = vadd.f32 %v827, %v828
        %v830 = vrot.slane %v829, 1
        %v831 = vadd.f32 %v829, %v830
        %v832 = vrot.slane %v716, 4
        %v833 = vadd.f32 %v716, %v832
        %v834 = vrot.slane %v833, 2
        %v835 = vadd.f32 %v833, %v834
        %v836 = vrot.slane %v835, 1
        %v837 = vadd.f32 %v835, %v836
        %v838 = vrot.slane %v607, 4
        %v839 = vadd.f32 %v607, %v838
        %v840 = vrot.slane %v839, 2
        %v841 = vadd.f32 %v839, %v840
        %v842 = vrot.slane %v841, 1
        %v843 = vadd.f32 %v841, %v842
        %v844 = vrot.slane %v609, 4
        %v845 = vadd.f32 %v609, %v844
        %v846 = vrot.slane %v845, 2
        %v847 = vadd.f32 %v845, %v846
        %v848 = vrot.slane %v847, 1
        %v849 = vadd.f32 %v847, %v848
        %v850 = vrot.slane %v720, 4
        %v851 = vadd.f32 %v720, %v850
        %v852 = vrot.slane %v851, 2
        %v853 = vadd.f32 %v851, %v852
        %v854 = vrot.slane %v853, 1
        %v855 = vadd.f32 %v853, %v854
        %v856 = vrot.slane %v722, 4
        %v857 = vadd.f32 %v722, %v856
        %v858 = vrot.slane %v857, 2
        %v859 = vadd.f32 %v857, %v858
        %v860 = vrot.slane %v859, 1
        %v861 = vadd.f32 %v859, %v860
        %v862 = vrot.slane %v611, 4
        %v863 = vadd.f32 %v611, %v862
        %v864 = vrot.slane %v863, 2
        %v865 = vadd.f32 %v863, %v864
        %v866 = vrot.slane %v865, 1
        %v867 = vadd.f32 %v865, %v866
        %v868 = vrot.slane %v613, 4
        %v869 = vadd.f32 %v613, %v868
        %v870 = vrot.slane %v869, 2
        %v871 = vadd.f32 %v869, %v870
        %v872 = vrot.slane %v871, 1
        %v873 = vadd.f32 %v871, %v872
        %v874 = vrot.slane %v724, 4
        %v875 = vadd.f32 %v724, %v874
        %v876 = vrot.slane %v875, 2
        %v877 = vadd.f32 %v875, %v876
        %v878 = vrot.slane %v877, 1
        %v879 = vadd.f32 %v877, %v878
        %v880 = vrot.slane %v726, 4
        %v881 = vadd.f32 %v726, %v880
        %v882 = vrot.slane %v881, 2
        %v883 = vadd.f32 %v881, %v882
        %v884 = vrot.slane %v883, 1
        %v885 = vadd.f32 %v883, %v884
        %v886 = vrot.slane %v617, 4
        %v887 = vadd.f32 %v617, %v886
        %v888 = vrot.slane %v887, 2
        %v889 = vadd.f32 %v887, %v888
        %v890 = vrot.slane %v889, 1
        %v891 = vadd.f32 %v889, %v890
        %v892 = vrot.slane %v619, 4
        %v893 = vadd.f32 %v619, %v892
        %v894 = vrot.slane %v893, 2
        %v895 = vadd.f32 %v893, %v894
        %v896 = vrot.slane %v895, 1
        %v897 = vadd.f32 %v895, %v896
        %v898 = vrot.slane %v730, 4
        %v899 = vadd.f32 %v730, %v898
        %v900 = vrot.slane %v899, 2
        %v901 = vadd.f32 %v899, %v900
        %v902 = vrot.slane %v901, 1
        %v903 = vadd.f32 %v901, %v902
        %v904 = vrot.slane %v732, 4
        %v905 = vadd.f32 %v732, %v904
        %v906 = vrot.slane %v905, 2
        %v907 = vadd.f32 %v905, %v906
        %v908 = vrot.slane %v907, 1
        %v909 = vadd.f32 %v907, %v908
        %v910 = vrot.slane %v621, 4
        %v911 = vadd.f32 %v621, %v910
        %v912 = vrot.slane %v911, 2
        %v913 = vadd.f32 %v911, %v912
        %v914 = vrot.slane %v913, 1
        %v915 = vadd.f32 %v913, %v914
        %v916 = vrot.slane %v623, 4
        %v917 = vadd.f32 %v623, %v916
        %v918 = vrot.slane %v917, 2
        %v919 = vadd.f32 %v917, %v918
        %v920 = vrot.slane %v919, 1
        %v921 = vadd.f32 %v919, %v920
        %v922 = vrot.slane %v734, 4
        %v923 = vadd.f32 %v734, %v922
        %v924 = vrot.slane %v923, 2
        %v925 = vadd.f32 %v923, %v924
        %v926 = vrot.slane %v925, 1
        %v927 = vadd.f32 %v925, %v926
        %v928 = vrot.slane %v736, 4
        %v929 = vadd.f32 %v736, %v928
        %v930 = vrot.slane %v929, 2
        %v931 = vadd.f32 %v929, %v930
        %v932 = vrot.slane %v931, 1
        %v933 = vadd.f32 %v931, %v932
        %v934 = vrot.slane %v627, 4
        %v935 = vadd.f32 %v627, %v934
        %v936 = vrot.slane %v935, 2
        %v937 = vadd.f32 %v935, %v936
        %v938 = vrot.slane %v937, 1
        %v939 = vadd.f32 %v937, %v938
        %v940 = vrot.slane %v629, 4
        %v941 = vadd.f32 %v629, %v940
        %v942 = vrot.slane %v941, 2
        %v943 = vadd.f32 %v941, %v942
        %v944 = vrot.slane %v943, 1
        %v945 = vadd.f32 %v943, %v944
        %v946 = vrot.slane %v740, 4
        %v947 = vadd.f32 %v740, %v946
        %v948 = vrot.slane %v947, 2
        %v949 = vadd.f32 %v947, %v948
        %v950 = vrot.slane %v949, 1
        %v951 = vadd.f32 %v949, %v950
        %v952 = vrot.slane %v742, 4
        %v953 = vadd.f32 %v742, %v952
        %v954 = vrot.slane %v953, 2
        %v955 = vadd.f32 %v953, %v954
        %v956 = vrot.slane %v955, 1
        %v957 = vadd.f32 %v955, %v956
        %v958 = vrot.slane %v631, 4
        %v959 = vadd.f32 %v631, %v958
        %v960 = vrot.slane %v959, 2
        %v961 = vadd.f32 %v959, %v960
        %v962 = vrot.slane %v961, 1
        %v963 = vadd.f32 %v961, %v962
        %v964 = vrot.slane %v633, 4
        %v965 = vadd.f32 %v633, %v964
        %v966 = vrot.slane %v965, 2
        %v967 = vadd.f32 %v965, %v966
        %v968 = vrot.slane %v967, 1
        %v969 = vadd.f32 %v967, %v968
        %v970 = vrot.slane %v744, 4
        %v971 = vadd.f32 %v744, %v970
        %v972 = vrot.slane %v971, 2
        %v973 = vadd.f32 %v971, %v972
        %v974 = vrot.slane %v973, 1
        %v975 = vadd.f32 %v973, %v974
        %v976 = vrot.slane %v746, 4
        %v977 = vadd.f32 %v746, %v976
        %v978 = vrot.slane %v977, 2
        %v979 = vadd.f32 %v977, %v978
        %v980 = vrot.slane %v979, 1
        %v981 = vadd.f32 %v979, %v980
        %v982 = vrot.slane %v637, 4
        %v983 = vadd.f32 %v637, %v982
        %v984 = vrot.slane %v983, 2
        %v985 = vadd.f32 %v983, %v984
        %v986 = vrot.slane %v985, 1
        %v987 = vadd.f32 %v985, %v986
        %v988 = vrot.slane %v639, 4
        %v989 = vadd.f32 %v639, %v988
        %v990 = vrot.slane %v989, 2
        %v991 = vadd.f32 %v989, %v990
        %v992 = vrot.slane %v991, 1
        %v993 = vadd.f32 %v991, %v992
        %v994 = vrot.slane %v750, 4
        %v995 = vadd.f32 %v750, %v994
        %v996 = vrot.slane %v995, 2
        %v997 = vadd.f32 %v995, %v996
        %v998 = vrot.slane %v997, 1
        %v999 = vadd.f32 %v997, %v998
        %v1000 = vrot.slane %v752, 4
        %v1001 = vadd.f32 %v752, %v1000
        %v1002 = vrot.slane %v1001, 2
        %v1003 = vadd.f32 %v1001, %v1002
        %v1004 = vrot.slane %v1003, 1
        %v1005 = vadd.f32 %v1003, %v1004
        %v1006 = vrot.slane %v641, 4
        %v1007 = vadd.f32 %v641, %v1006
        %v1008 = vrot.slane %v1007, 2
        %v1009 = vadd.f32 %v1007, %v1008
        %v1010 = vrot.slane %v1009, 1
        %v1011 = vadd.f32 %v1009, %v1010
        %v1012 = vrot.slane %v643, 4
        %v1013 = vadd.f32 %v643, %v1012
        %v1014 = vrot.slane %v1013, 2
        %v1015 = vadd.f32 %v1013, %v1014
        %v1016 = vrot.slane %v1015, 1
        %v1017 = vadd.f32 %v1015, %v1016
        %v1018 = vrot.slane %v754, 4
        %v1019 = vadd.f32 %v754, %v1018
        %v1020 = vrot.slane %v1019, 2
        %v1021 = vadd.f32 %v1019, %v1020
        %v1022 = vrot.slane %v1021, 1
        %v1023 = vadd.f32 %v1021, %v1022
        %v1024 = vrot.slane %v756, 4
        %v1025 = vadd.f32 %v756, %v1024
        %v1026 = vrot.slane %v1025, 2
        %v1027 = vadd.f32 %v1025, %v1026
        %v1028 = vrot.slane %v1027, 1
        %v1029 = vadd.f32 %v1027, %v1028
        %v1030 = vrot.slane %v647, 4
        %v1031 = vadd.f32 %v647, %v1030
        %v1032 = vrot.slane %v1031, 2
        %v1033 = vadd.f32 %v1031, %v1032
        %v1034 = vrot.slane %v1033, 1
        %v1035 = vadd.f32 %v1033, %v1034
        %v1036 = vrot.slane %v649, 4
        %v1037 = vadd.f32 %v649, %v1036
        %v1038 = vrot.slane %v1037, 2
        %v1039 = vadd.f32 %v1037, %v1038
        %v1040 = vrot.slane %v1039, 1
        %v1041 = vadd.f32 %v1039, %v1040
        %v1042 = vrot.slane %v760, 4
        %v1043 = vadd.f32 %v760, %v1042
        %v1044 = vrot.slane %v1043, 2
        %v1045 = vadd.f32 %v1043, %v1044
        %v1046 = vrot.slane %v1045, 1
        %v1047 = vadd.f32 %v1045, %v1046
        %v1048 = vrot.slane %v762, 4
        %v1049 = vadd.f32 %v762, %v1048
        %v1050 = vrot.slane %v1049, 2
        %v1051 = vadd.f32 %v1049, %v1050
        %v1052 = vrot.slane %v1051, 1
        %v1053 = vadd.f32 %v1051, %v1052
        %v1054 = vrot.slane %v651, 4
        %v1055 = vadd.f32 %v651, %v1054
        %v1056 = vrot.slane %v1055, 2
        %v1057 = vadd.f32 %v1055, %v1056
        %v1058 = vrot.slane %v1057, 1
        %v1059 = vadd.f32 %v1057, %v1058
        %v1060 = vrot.slane %v653, 4
        %v1061 = vadd.f32 %v653, %v1060
        %v1062 = vrot.slane %v1061, 2
        %v1063 = vadd.f32 %v1061, %v1062
        %v1064 = vrot.slane %v1063, 1
        %v1065 = vadd.f32 %v1063, %v1064
        %v1066 = vrot.slane %v764, 4
        %v1067 = vadd.f32 %v764, %v1066
        %v1068 = vrot.slane %v1067, 2
        %v1069 = vadd.f32 %v1067, %v1068
        %v1070 = vrot.slane %v1069, 1
        %v1071 = vadd.f32 %v1069, %v1070
        %v1072 = vrot.slane %v766, 4
        %v1073 = vadd.f32 %v766, %v1072
        %v1074 = vrot.slane %v1073, 2
        %v1075 = vadd.f32 %v1073, %v1074
        %v1076 = vrot.slane %v1075, 1
        %v1077 = vadd.f32 %v1075, %v1076
        %v1078 = vrot.slane %v657, 4
        %v1079 = vadd.f32 %v657, %v1078
        %v1080 = vrot.slane %v1079, 2
        %v1081 = vadd.f32 %v1079, %v1080
        %v1082 = vrot.slane %v1081, 1
        %v1083 = vadd.f32 %v1081, %v1082
        %v1084 = vrot.slane %v659, 4
        %v1085 = vadd.f32 %v659, %v1084
        %v1086 = vrot.slane %v1085, 2
        %v1087 = vadd.f32 %v1085, %v1086
        %v1088 = vrot.slane %v1087, 1
        %v1089 = vadd.f32 %v1087, %v1088
        %v1090 = vrot.slane %v770, 4
        %v1091 = vadd.f32 %v770, %v1090
        %v1092 = vrot.slane %v1091, 2
        %v1093 = vadd.f32 %v1091, %v1092
        %v1094 = vrot.slane %v1093, 1
        %v1095 = vadd.f32 %v1093, %v1094
        %v1096 = vrot.slane %v772, 4
        %v1097 = vadd.f32 %v772, %v1096
        %v1098 = vrot.slane %v1097, 2
        %v1099 = vadd.f32 %v1097, %v1098
        %v1100 = vrot.slane %v1099, 1
        %v1101 = vadd.f32 %v1099, %v1100
        %v1102 = vrot.slane %v661, 4
        %v1103 = vadd.f32 %v661, %v1102
        %v1104 = vrot.slane %v1103, 2
        %v1105 = vadd.f32 %v1103, %v1104
        %v1106 = vrot.slane %v1105, 1
        %v1107 = vadd.f32 %v1105, %v1106
        %v1108 = vrot.slane %v663, 4
        %v1109 = vadd.f32 %v663, %v1108
        %v1110 = vrot.slane %v1109, 2
        %v1111 = vadd.f32 %v1109, %v1110
        %v1112 = vrot.slane %v1111, 1
        %v1113 = vadd.f32 %v1111, %v1112
        %v1114 = vrot.slane %v774, 4
        %v1115 = vadd.f32 %v774, %v1114
        %v1116 = vrot.slane %v1115, 2
        %v1117 = vadd.f32 %v1115, %v1116
        %v1118 = vrot.slane %v1117, 1
        %v1119 = vadd.f32 %v1117, %v1118
        %v1120 = vrot.slane %v776, 4
        %v1121 = vadd.f32 %v776, %v1120
        %v1122 = vrot.slane %v1121, 2
        %v1123 = vadd.f32 %v1121, %v1122
        %v1124 = vrot.slane %v1123, 1
        %v1125 = vadd.f32 %v1123, %v1124
        %v1126 = vrot.slane %v667, 4
        %v1127 = vadd.f32 %v667, %v1126
        %v1128 = vrot.slane %v1127, 2
        %v1129 = vadd.f32 %v1127, %v1128
        %v1130 = vrot.slane %v1129, 1
        %v1131 = vadd.f32 %v1129, %v1130
        %v1132 = vrot.slane %v669, 4
        %v1133 = vadd.f32 %v669, %v1132
        %v1134 = vrot.slane %v1133, 2
        %v1135 = vadd.f32 %v1133, %v1134
        %v1136 = vrot.slane %v1135, 1
        %v1137 = vadd.f32 %v1135, %v1136
        %v1138 = vrot.slane %v780, 4
        %v1139 = vadd.f32 %v780, %v1138
        %v1140 = vrot.slane %v1139, 2
        %v1141 = vadd.f32 %v1139, %v1140
        %v1142 = vrot.slane %v1141, 1
        %v1143 = vadd.f32 %v1141, %v1142
        %v1144 = vrot.slane %v782, 4
        %v1145 = vadd.f32 %v782, %v1144
        %v1146 = vrot.slane %v1145, 2
        %v1147 = vadd.f32 %v1145, %v1146
        %v1148 = vrot.slane %v1147, 1
        %v1149 = vadd.f32 %v1147, %v1148
        %v1150 = vrot.slane %v671, 4
        %v1151 = vadd.f32 %v671, %v1150
        %v1152 = vrot.slane %v1151, 2
        %v1153 = vadd.f32 %v1151, %v1152
        %v1154 = vrot.slane %v1153, 1
        %v1155 = vadd.f32 %v1153, %v1154
        %v1156 = vrot.slane %v673, 4
        %v1157 = vadd.f32 %v673, %v1156
        %v1158 = vrot.slane %v1157, 2
        %v1159 = vadd.f32 %v1157, %v1158
        %v1160 = vrot.slane %v1159, 1
        %v1161 = vadd.f32 %v1159, %v1160
        %v1162 = vrot.slane %v784, 4
        %v1163 = vadd.f32 %v784, %v1162
        %v1164 = vrot.slane %v1163, 2
        %v1165 = vadd.f32 %v1163, %v1164
        %v1166 = vrot.slane %v1165, 1
        %v1167 = vadd.f32 %v1165, %v1166
        %v1168 = vrot.slane %v786, 4
        %v1169 = vadd.f32 %v786, %v1168
        %v1170 = vrot.slane %v1169, 2
        %v1171 = vadd.f32 %v1169, %v1170
        %v1172 = vrot.slane %v1171, 1
        %v1173 = vadd.f32 %v1171, %v1172
        %v1174 = vrcp.pop 8.0
        %v1175 = vmul.f32 %v795, %v1174
        %v1176 = vmul.f32 %v801, %v1174
        %v1177 = vmul.f32 %v807, %v1174
        %v1178 = vmul.f32 %v813, %v1174
        %v1179 = vmul.f32 %v819, %v1174
        %v1180 = vmul.f32 %v825, %v1174
        %v1181 = vmul.f32 %v831, %v1174
        %v1182 = vmul.f32 %v837, %v1174
        %v1183 = vmul.f32 %v843, %v1174
        %v1184 = vmul.f32 %v849, %v1174
        %v1185 = vmul.f32 %v855, %v1174
        %v1186 = vmul.f32 %v861, %v1174
        %v1187 = vmul.f32 %v867, %v1174
        %v1188 = vmul.f32 %v873, %v1174
        %v1189 = vmul.f32 %v879, %v1174
        %v1190 = vmul.f32 %v885, %v1174
        %v1191 = vmul.f32 %v891, %v1174
        %v1192 = vmul.f32 %v897, %v1174
        %v1193 = vmul.f32 %v903, %v1174
        %v1194 = vmul.f32 %v909, %v1174
        %v1195 = vmul.f32 %v915, %v1174
        %v1196 = vmul.f32 %v921, %v1174
        %v1197 = vmul.f32 %v927, %v1174
        %v1198 = vmul.f32 %v933, %v1174
        %v1199 = vmul.f32 %v939, %v1174
        %v1200 = vmul.f32 %v945, %v1174
        %v1201 = vmul.f32 %v951, %v1174
        %v1202 = vmul.f32 %v957, %v1174
        %v1203 = vmul.f32 %v963, %v1174
        %v1204 = vmul.f32 %v969, %v1174
        %v1205 = vmul.f32 %v975, %v1174
        %v1206 = vmul.f32 %v981, %v1174
        %v1207 = vmul.f32 %v987, %v1174
        %v1208 = vmul.f32 %v993, %v1174
        %v1209 = vmul.f32 %v999, %v1174
        %v1210 = vmul.f32 %v1005, %v1174
        %v1211 = vmul.f32 %v1011, %v1174
        %v1212 = vmul.f32 %v1017, %v1174
        %v1213 = vmul.f32 %v1023, %v1174
        %v1214 = vmul.f32 %v1029, %v1174
        %v1215 = vmul.f32 %v1035, %v1174
        %v1216 = vmul.f32 %v1041, %v1174
        %v1217 = vmul.f32 %v1047, %v1174
        %v1218 = vmul.f32 %v1053, %v1174
        %v1219 = vmul.f32 %v1059, %v1174
        %v1220 = vmul.f32 %v1065, %v1174
        %v1221 = vmul.f32 %v1071, %v1174
        %v1222 = vmul.f32 %v1077, %v1174
        %v1223 = vmul.f32 %v1083, %v1174
        %v1224 = vmul.f32 %v1089, %v1174
        %v1225 = vmul.f32 %v1095, %v1174
        %v1226 = vmul.f32 %v1101, %v1174
        %v1227 = vmul.f32 %v1107, %v1174
        %v1228 = vmul.f32 %v1113, %v1174
        %v1229 = vmul.f32 %v1119, %v1174
        %v1230 = vmul.f32 %v1125, %v1174
        %v1231 = vmul.f32 %v1131, %v1174
        %v1232 = vmul.f32 %v1137, %v1174
        %v1233 = vmul.f32 %v1143, %v1174
        %v1234 = vmul.f32 %v1149, %v1174
        %v1235 = vmul.f32 %v1155, %v1174
        %v1236 = vmul.f32 %v1161, %v1174
        %v1237 = vmul.f32 %v1167, %v1174
        %v1238 = vmul.f32 %v1173, %v1174
        %v1239 = vmul.f32 %v597, %v597
        %v1240 = vmul.f32 %v599, %v599
        %v1241 = vmul.f32 %v710, %v710
        %v1242 = vmul.f32 %v712, %v712
        %v1243 = vmul.f32 %v601, %v601
        %v1244 = vmul.f32 %v603, %v603
        %v1245 = vmul.f32 %v714, %v714
        %v1246 = vmul.f32 %v716, %v716
        %v1247 = vmul.f32 %v607, %v607
        %v1248 = vmul.f32 %v609, %v609
        %v1249 = vmul.f32 %v720, %v720
        %v1250 = vmul.f32 %v722, %v722
        %v1251 = vmul.f32 %v611, %v611
        %v1252 = vmul.f32 %v613, %v613
        %v1253 = vmul.f32 %v724, %v724
        %v1254 = vmul.f32 %v726, %v726
        %v1255 = vmul.f32 %v617, %v617
        %v1256 = vmul.f32 %v619, %v619
        %v1257 = vmul.f32 %v730, %v730
        %v1258 = vmul.f32 %v732, %v732
        %v1259 = vmul.f32 %v621, %v621
        %v1260 = vmul.f32 %v623, %v623
        %v1261 = vmul.f32 %v734, %v734
        %v1262 = vmul.f32 %v736, %v736
        %v1263 = vmul.f32 %v627, %v627
        %v1264 = vmul.f32 %v629, %v629
        %v1265 = vmul.f32 %v740, %v740
        %v1266 = vmul.f32 %v742, %v742
        %v1267 = vmul.f32 %v631, %v631
        %v1268 = vmul.f32 %v633, %v633
        %v1269 = vmul.f32 %v744, %v744
        %v1270 = vmul.f32 %v746, %v746
        %v1271 = vmul.f32 %v637, %v637
        %v1272 = vmul.f32 %v639, %v639
        %v1273 = vmul.f32 %v750, %v750
        %v1274 = vmul.f32 %v752, %v752
        %v1275 = vmul.f32 %v641, %v641
        %v1276 = vmul.f32 %v643, %v643
        %v1277 = vmul.f32 %v754, %v754
        %v1278 = vmul.f32 %v756, %v756
        %v1279 = vmul.f32 %v647, %v647
        %v1280 = vmul.f32 %v649, %v649
        %v1281 = vmul.f32 %v760, %v760
        %v1282 = vmul.f32 %v762, %v762
        %v1283 = vmul.f32 %v651, %v651
        %v1284 = vmul.f32 %v653, %v653
        %v1285 = vmul.f32 %v764, %v764
        %v1286 = vmul.f32 %v766, %v766
        %v1287 = vmul.f32 %v657, %v657
        %v1288 = vmul.f32 %v659, %v659
        %v1289 = vmul.f32 %v770, %v770
        %v1290 = vmul.f32 %v772, %v772
        %v1291 = vmul.f32 %v661, %v661
        %v1292 = vmul.f32 %v663, %v663
        %v1293 = vmul.f32 %v774, %v774
        %v1294 = vmul.f32 %v776, %v776
        %v1295 = vmul.f32 %v667, %v667
        %v1296 = vmul.f32 %v669, %v669
        %v1297 = vmul.f32 %v780, %v780
        %v1298 = vmul.f32 %v782, %v782
        %v1299 = vmul.f32 %v671, %v671
        %v1300 = vmul.f32 %v673, %v673
        %v1301 = vmul.f32 %v784, %v784
        %v1302 = vmul.f32 %v786, %v786
        %v1303 = vrot.slane %v1239, 4
        %v1304 = vadd.f32 %v1239, %v1303
        %v1305 = vrot.slane %v1304, 2
        %v1306 = vadd.f32 %v1304, %v1305
        %v1307 = vrot.slane %v1306, 1
        %v1308 = vadd.f32 %v1306, %v1307
        %v1309 = vrot.slane %v1240, 4
        %v1310 = vadd.f32 %v1240, %v1309
        %v1311 = vrot.slane %v1310, 2
        %v1312 = vadd.f32 %v1310, %v1311
        %v1313 = vrot.slane %v1312, 1
        %v1314 = vadd.f32 %v1312, %v1313
        %v1315 = vrot.slane %v1241, 4
        %v1316 = vadd.f32 %v1241, %v1315
        %v1317 = vrot.slane %v1316, 2
        %v1318 = vadd.f32 %v1316, %v1317
        %v1319 = vrot.slane %v1318, 1
        %v1320 = vadd.f32 %v1318, %v1319
        %v1321 = vrot.slane %v1242, 4
        %v1322 = vadd.f32 %v1242, %v1321
        %v1323 = vrot.slane %v1322, 2
        %v1324 = vadd.f32 %v1322, %v1323
        %v1325 = vrot.slane %v1324, 1
        %v1326 = vadd.f32 %v1324, %v1325
        %v1327 = vrot.slane %v1243, 4
        %v1328 = vadd.f32 %v1243, %v1327
        %v1329 = vrot.slane %v1328, 2
        %v1330 = vadd.f32 %v1328, %v1329
        %v1331 = vrot.slane %v1330, 1
        %v1332 = vadd.f32 %v1330, %v1331
        %v1333 = vrot.slane %v1244, 4
        %v1334 = vadd.f32 %v1244, %v1333
        %v1335 = vrot.slane %v1334, 2
        %v1336 = vadd.f32 %v1334, %v1335
        %v1337 = vrot.slane %v1336, 1
        %v1338 = vadd.f32 %v1336, %v1337
        %v1339 = vrot.slane %v1245, 4
        %v1340 = vadd.f32 %v1245, %v1339
        %v1341 = vrot.slane %v1340, 2
        %v1342 = vadd.f32 %v1340, %v1341
        %v1343 = vrot.slane %v1342, 1
        %v1344 = vadd.f32 %v1342, %v1343
        %v1345 = vrot.slane %v1246, 4
        %v1346 = vadd.f32 %v1246, %v1345
        %v1347 = vrot.slane %v1346, 2
        %v1348 = vadd.f32 %v1346, %v1347
        %v1349 = vrot.slane %v1348, 1
        %v1350 = vadd.f32 %v1348, %v1349
        %v1351 = vrot.slane %v1247, 4
        %v1352 = vadd.f32 %v1247, %v1351
        %v1353 = vrot.slane %v1352, 2
        %v1354 = vadd.f32 %v1352, %v1353
        %v1355 = vrot.slane %v1354, 1
        %v1356 = vadd.f32 %v1354, %v1355
        %v1357 = vrot.slane %v1248, 4
        %v1358 = vadd.f32 %v1248, %v1357
        %v1359 = vrot.slane %v1358, 2
        %v1360 = vadd.f32 %v1358, %v1359
        %v1361 = vrot.slane %v1360, 1
        %v1362 = vadd.f32 %v1360, %v1361
        %v1363 = vrot.slane %v1249, 4
        %v1364 = vadd.f32 %v1249, %v1363
        %v1365 = vrot.slane %v1364, 2
        %v1366 = vadd.f32 %v1364, %v1365
        %v1367 = vrot.slane %v1366, 1
        %v1368 = vadd.f32 %v1366, %v1367
        %v1369 = vrot.slane %v1250, 4
        %v1370 = vadd.f32 %v1250, %v1369
        %v1371 = vrot.slane %v1370, 2
        %v1372 = vadd.f32 %v1370, %v1371
        %v1373 = vrot.slane %v1372, 1
        %v1374 = vadd.f32 %v1372, %v1373
        %v1375 = vrot.slane %v1251, 4
        %v1376 = vadd.f32 %v1251, %v1375
        %v1377 = vrot.slane %v1376, 2
        %v1378 = vadd.f32 %v1376, %v1377
        %v1379 = vrot.slane %v1378, 1
        %v1380 = vadd.f32 %v1378, %v1379
        %v1381 = vrot.slane %v1252, 4
        %v1382 = vadd.f32 %v1252, %v1381
        %v1383 = vrot.slane %v1382, 2
        %v1384 = vadd.f32 %v1382, %v1383
        %v1385 = vrot.slane %v1384, 1
        %v1386 = vadd.f32 %v1384, %v1385
        %v1387 = vrot.slane %v1253, 4
        %v1388 = vadd.f32 %v1253, %v1387
        %v1389 = vrot.slane %v1388, 2
        %v1390 = vadd.f32 %v1388, %v1389
        %v1391 = vrot.slane %v1390, 1
        %v1392 = vadd.f32 %v1390, %v1391
        %v1393 = vrot.slane %v1254, 4
        %v1394 = vadd.f32 %v1254, %v1393
        %v1395 = vrot.slane %v1394, 2
        %v1396 = vadd.f32 %v1394, %v1395
        %v1397 = vrot.slane %v1396, 1
        %v1398 = vadd.f32 %v1396, %v1397
        %v1399 = vrot.slane %v1255, 4
        %v1400 = vadd.f32 %v1255, %v1399
        %v1401 = vrot.slane %v1400, 2
        %v1402 = vadd.f32 %v1400, %v1401
        %v1403 = vrot.slane %v1402, 1
        %v1404 = vadd.f32 %v1402, %v1403
        %v1405 = vrot.slane %v1256, 4
        %v1406 = vadd.f32 %v1256, %v1405
        %v1407 = vrot.slane %v1406, 2
        %v1408 = vadd.f32 %v1406, %v1407
        %v1409 = vrot.slane %v1408, 1
        %v1410 = vadd.f32 %v1408, %v1409
        %v1411 = vrot.slane %v1257, 4
        %v1412 = vadd.f32 %v1257, %v1411
        %v1413 = vrot.slane %v1412, 2
        %v1414 = vadd.f32 %v1412, %v1413
        %v1415 = vrot.slane %v1414, 1
        %v1416 = vadd.f32 %v1414, %v1415
        %v1417 = vrot.slane %v1258, 4
        %v1418 = vadd.f32 %v1258, %v1417
        %v1419 = vrot.slane %v1418, 2
        %v1420 = vadd.f32 %v1418, %v1419
        %v1421 = vrot.slane %v1420, 1
        %v1422 = vadd.f32 %v1420, %v1421
        %v1423 = vrot.slane %v1259, 4
        %v1424 = vadd.f32 %v1259, %v1423
        %v1425 = vrot.slane %v1424, 2
        %v1426 = vadd.f32 %v1424, %v1425
        %v1427 = vrot.slane %v1426, 1
        %v1428 = vadd.f32 %v1426, %v1427
        %v1429 = vrot.slane %v1260, 4
        %v1430 = vadd.f32 %v1260, %v1429
        %v1431 = vrot.slane %v1430, 2
        %v1432 = vadd.f32 %v1430, %v1431
        %v1433 = vrot.slane %v1432, 1
        %v1434 = vadd.f32 %v1432, %v1433
        %v1435 = vrot.slane %v1261, 4
        %v1436 = vadd.f32 %v1261, %v1435
        %v1437 = vrot.slane %v1436, 2
        %v1438 = vadd.f32 %v1436, %v1437
        %v1439 = vrot.slane %v1438, 1
        %v1440 = vadd.f32 %v1438, %v1439
        %v1441 = vrot.slane %v1262, 4
        %v1442 = vadd.f32 %v1262, %v1441
        %v1443 = vrot.slane %v1442, 2
        %v1444 = vadd.f32 %v1442, %v1443
        %v1445 = vrot.slane %v1444, 1
        %v1446 = vadd.f32 %v1444, %v1445
        %v1447 = vrot.slane %v1263, 4
        %v1448 = vadd.f32 %v1263, %v1447
        %v1449 = vrot.slane %v1448, 2
        %v1450 = vadd.f32 %v1448, %v1449
        %v1451 = vrot.slane %v1450, 1
        %v1452 = vadd.f32 %v1450, %v1451
        %v1453 = vrot.slane %v1264, 4
        %v1454 = vadd.f32 %v1264, %v1453
        %v1455 = vrot.slane %v1454, 2
        %v1456 = vadd.f32 %v1454, %v1455
        %v1457 = vrot.slane %v1456, 1
        %v1458 = vadd.f32 %v1456, %v1457
        %v1459 = vrot.slane %v1265, 4
        %v1460 = vadd.f32 %v1265, %v1459
        %v1461 = vrot.slane %v1460, 2
        %v1462 = vadd.f32 %v1460, %v1461
        %v1463 = vrot.slane %v1462, 1
        %v1464 = vadd.f32 %v1462, %v1463
        %v1465 = vrot.slane %v1266, 4
        %v1466 = vadd.f32 %v1266, %v1465
        %v1467 = vrot.slane %v1466, 2
        %v1468 = vadd.f32 %v1466, %v1467
        %v1469 = vrot.slane %v1468, 1
        %v1470 = vadd.f32 %v1468, %v1469
        %v1471 = vrot.slane %v1267, 4
        %v1472 = vadd.f32 %v1267, %v1471
        %v1473 = vrot.slane %v1472, 2
        %v1474 = vadd.f32 %v1472, %v1473
        %v1475 = vrot.slane %v1474, 1
        %v1476 = vadd.f32 %v1474, %v1475
        %v1477 = vrot.slane %v1268, 4
        %v1478 = vadd.f32 %v1268, %v1477
        %v1479 = vrot.slane %v1478, 2
        %v1480 = vadd.f32 %v1478, %v1479
        %v1481 = vrot.slane %v1480, 1
        %v1482 = vadd.f32 %v1480, %v1481
        %v1483 = vrot.slane %v1269, 4
        %v1484 = vadd.f32 %v1269, %v1483
        %v1485 = vrot.slane %v1484, 2
        %v1486 = vadd.f32 %v1484, %v1485
        %v1487 = vrot.slane %v1486, 1
        %v1488 = vadd.f32 %v1486, %v1487
        %v1489 = vrot.slane %v1270, 4
        %v1490 = vadd.f32 %v1270, %v1489
        %v1491 = vrot.slane %v1490, 2
        %v1492 = vadd.f32 %v1490, %v1491
        %v1493 = vrot.slane %v1492, 1
        %v1494 = vadd.f32 %v1492, %v1493
        %v1495 = vrot.slane %v1271, 4
        %v1496 = vadd.f32 %v1271, %v1495
        %v1497 = vrot.slane %v1496, 2
        %v1498 = vadd.f32 %v1496, %v1497
        %v1499 = vrot.slane %v1498, 1
        %v1500 = vadd.f32 %v1498, %v1499
        %v1501 = vrot.slane %v1272, 4
        %v1502 = vadd.f32 %v1272, %v1501
        %v1503 = vrot.slane %v1502, 2
        %v1504 = vadd.f32 %v1502, %v1503
        %v1505 = vrot.slane %v1504, 1
        %v1506 = vadd.f32 %v1504, %v1505
        %v1507 = vrot.slane %v1273, 4
        %v1508 = vadd.f32 %v1273, %v1507
        %v1509 = vrot.slane %v1508, 2
        %v1510 = vadd.f32 %v1508, %v1509
        %v1511 = vrot.slane %v1510, 1
        %v1512 = vadd.f32 %v1510, %v1511
        %v1513 = vrot.slane %v1274, 4
        %v1514 = vadd.f32 %v1274, %v1513
        %v1515 = vrot.slane %v1514, 2
        %v1516 = vadd.f32 %v1514, %v1515
        %v1517 = vrot.slane %v1516, 1
        %v1518 = vadd.f32 %v1516, %v1517
        %v1519 = vrot.slane %v1275, 4
        %v1520 = vadd.f32 %v1275, %v1519
        %v1521 = vrot.slane %v1520, 2
        %v1522 = vadd.f32 %v1520, %v1521
        %v1523 = vrot.slane %v1522, 1
        %v1524 = vadd.f32 %v1522, %v1523
        %v1525 = vrot.slane %v1276, 4
        %v1526 = vadd.f32 %v1276, %v1525
        %v1527 = vrot.slane %v1526, 2
        %v1528 = vadd.f32 %v1526, %v1527
        %v1529 = vrot.slane %v1528, 1
        %v1530 = vadd.f32 %v1528, %v1529
        %v1531 = vrot.slane %v1277, 4
        %v1532 = vadd.f32 %v1277, %v1531
        %v1533 = vrot.slane %v1532, 2
        %v1534 = vadd.f32 %v1532, %v1533
        %v1535 = vrot.slane %v1534, 1
        %v1536 = vadd.f32 %v1534, %v1535
        %v1537 = vrot.slane %v1278, 4
        %v1538 = vadd.f32 %v1278, %v1537
        %v1539 = vrot.slane %v1538, 2
        %v1540 = vadd.f32 %v1538, %v1539
        %v1541 = vrot.slane %v1540, 1
        %v1542 = vadd.f32 %v1540, %v1541
        %v1543 = vrot.slane %v1279, 4
        %v1544 = vadd.f32 %v1279, %v1543
        %v1545 = vrot.slane %v1544, 2
        %v1546 = vadd.f32 %v1544, %v1545
        %v1547 = vrot.slane %v1546, 1
        %v1548 = vadd.f32 %v1546, %v1547
        %v1549 = vrot.slane %v1280, 4
        %v1550 = vadd.f32 %v1280, %v1549
        %v1551 = vrot.slane %v1550, 2
        %v1552 = vadd.f32 %v1550, %v1551
        %v1553 = vrot.slane %v1552, 1
        %v1554 = vadd.f32 %v1552, %v1553
        %v1555 = vrot.slane %v1281, 4
        %v1556 = vadd.f32 %v1281, %v1555
        %v1557 = vrot.slane %v1556, 2
        %v1558 = vadd.f32 %v1556, %v1557
        %v1559 = vrot.slane %v1558, 1
        %v1560 = vadd.f32 %v1558, %v1559
        %v1561 = vrot.slane %v1282, 4
        %v1562 = vadd.f32 %v1282, %v1561
        %v1563 = vrot.slane %v1562, 2
        %v1564 = vadd.f32 %v1562, %v1563
        %v1565 = vrot.slane %v1564, 1
        %v1566 = vadd.f32 %v1564, %v1565
        %v1567 = vrot.slane %v1283, 4
        %v1568 = vadd.f32 %v1283, %v1567
        %v1569 = vrot.slane %v1568, 2
        %v1570 = vadd.f32 %v1568, %v1569
        %v1571 = vrot.slane %v1570, 1
        %v1572 = vadd.f32 %v1570, %v1571
        %v1573 = vrot.slane %v1284, 4
        %v1574 = vadd.f32 %v1284, %v1573
        %v1575 = vrot.slane %v1574, 2
        %v1576 = vadd.f32 %v1574, %v1575
        %v1577 = vrot.slane %v1576, 1
        %v1578 = vadd.f32 %v1576, %v1577
        %v1579 = vrot.slane %v1285, 4
        %v1580 = vadd.f32 %v1285, %v1579
        %v1581 = vrot.slane %v1580, 2
        %v1582 = vadd.f32 %v1580, %v1581
        %v1583 = vrot.slane %v1582, 1
        %v1584 = vadd.f32 %v1582, %v1583
        %v1585 = vrot.slane %v1286, 4
        %v1586 = vadd.f32 %v1286, %v1585
        %v1587 = vrot.slane %v1586, 2
        %v1588 = vadd.f32 %v1586, %v1587
        %v1589 = vrot.slane %v1588, 1
        %v1590 = vadd.f32 %v1588, %v1589
        %v1591 = vrot.slane %v1287, 4
        %v1592 = vadd.f32 %v1287, %v1591
        %v1593 = vrot.slane %v1592, 2
        %v1594 = vadd.f32 %v1592, %v1593
        %v1595 = vrot.slane %v1594, 1
        %v1596 = vadd.f32 %v1594, %v1595
        %v1597 = vrot.slane %v1288, 4
        %v1598 = vadd.f32 %v1288, %v1597
        %v1599 = vrot.slane %v1598, 2
        %v1600 = vadd.f32 %v1598, %v1599
        %v1601 = vrot.slane %v1600, 1
        %v1602 = vadd.f32 %v1600, %v1601
        %v1603 = vrot.slane %v1289, 4
        %v1604 = vadd.f32 %v1289, %v1603
        %v1605 = vrot.slane %v1604, 2
        %v1606 = vadd.f32 %v1604, %v1605
        %v1607 = vrot.slane %v1606, 1
        %v1608 = vadd.f32 %v1606, %v1607
        %v1609 = vrot.slane %v1290, 4
        %v1610 = vadd.f32 %v1290, %v1609
        %v1611 = vrot.slane %v1610, 2
        %v1612 = vadd.f32 %v1610, %v1611
        %v1613 = vrot.slane %v1612, 1
        %v1614 = vadd.f32 %v1612, %v1613
        %v1615 = vrot.slane %v1291, 4
        %v1616 = vadd.f32 %v1291, %v1615
        %v1617 = vrot.slane %v1616, 2
        %v1618 = vadd.f32 %v1616, %v1617
        %v1619 = vrot.slane %v1618, 1
        %v1620 = vadd.f32 %v1618, %v1619
        %v1621 = vrot.slane %v1292, 4
        %v1622 = vadd.f32 %v1292, %v1621
        %v1623 = vrot.slane %v1622, 2
        %v1624 = vadd.f32 %v1622, %v1623
        %v1625 = vrot.slane %v1624, 1
        %v1626 = vadd.f32 %v1624, %v1625
        %v1627 = vrot.slane %v1293, 4
        %v1628 = vadd.f32 %v1293, %v1627
        %v1629 = vrot.slane %v1628, 2
        %v1630 = vadd.f32 %v1628, %v1629
        %v1631 = vrot.slane %v1630, 1
        %v1632 = vadd.f32 %v1630, %v1631
        %v1633 = vrot.slane %v1294, 4
        %v1634 = vadd.f32 %v1294, %v1633
        %v1635 = vrot.slane %v1634, 2
        %v1636 = vadd.f32 %v1634, %v1635
        %v1637 = vrot.slane %v1636, 1
        %v1638 = vadd.f32 %v1636, %v1637
        %v1639 = vrot.slane %v1295, 4
        %v1640 = vadd.f32 %v1295, %v1639
        %v1641 = vrot.slane %v1640, 2
        %v1642 = vadd.f32 %v1640, %v1641
        %v1643 = vrot.slane %v1642, 1
        %v1644 = vadd.f32 %v1642, %v1643
        %v1645 = vrot.slane %v1296, 4
        %v1646 = vadd.f32 %v1296, %v1645
        %v1647 = vrot.slane %v1646, 2
        %v1648 = vadd.f32 %v1646, %v1647
        %v1649 = vrot.slane %v1648, 1
        %v1650 = vadd.f32 %v1648, %v1649
        %v1651 = vrot.slane %v1297, 4
        %v1652 = vadd.f32 %v1297, %v1651
        %v1653 = vrot.slane %v1652, 2
        %v1654 = vadd.f32 %v1652, %v1653
        %v1655 = vrot.slane %v1654, 1
        %v1656 = vadd.f32 %v1654, %v1655
        %v1657 = vrot.slane %v1298, 4
        %v1658 = vadd.f32 %v1298, %v1657
        %v1659 = vrot.slane %v1658, 2
        %v1660 = vadd.f32 %v1658, %v1659
        %v1661 = vrot.slane %v1660, 1
        %v1662 = vadd.f32 %v1660, %v1661
        %v1663 = vrot.slane %v1299, 4
        %v1664 = vadd.f32 %v1299, %v1663
        %v1665 = vrot.slane %v1664, 2
        %v1666 = vadd.f32 %v1664, %v1665
        %v1667 = vrot.slane %v1666, 1
        %v1668 = vadd.f32 %v1666, %v1667
        %v1669 = vrot.slane %v1300, 4
        %v1670 = vadd.f32 %v1300, %v1669
        %v1671 = vrot.slane %v1670, 2
        %v1672 = vadd.f32 %v1670, %v1671
        %v1673 = vrot.slane %v1672, 1
        %v1674 = vadd.f32 %v1672, %v1673
        %v1675 = vrot.slane %v1301, 4
        %v1676 = vadd.f32 %v1301, %v1675
        %v1677 = vrot.slane %v1676, 2
        %v1678 = vadd.f32 %v1676, %v1677
        %v1679 = vrot.slane %v1678, 1
        %v1680 = vadd.f32 %v1678, %v1679
        %v1681 = vrot.slane %v1302, 4
        %v1682 = vadd.f32 %v1302, %v1681
        %v1683 = vrot.slane %v1682, 2
        %v1684 = vadd.f32 %v1682, %v1683
        %v1685 = vrot.slane %v1684, 1
        %v1686 = vadd.f32 %v1684, %v1685
        %v1687 = vmul.f32 %v1308, %v1174
        %v1688 = vmul.f32 %v1314, %v1174
        %v1689 = vmul.f32 %v1320, %v1174
        %v1690 = vmul.f32 %v1326, %v1174
        %v1691 = vmul.f32 %v1332, %v1174
        %v1692 = vmul.f32 %v1338, %v1174
        %v1693 = vmul.f32 %v1344, %v1174
        %v1694 = vmul.f32 %v1350, %v1174
        %v1695 = vmul.f32 %v1356, %v1174
        %v1696 = vmul.f32 %v1362, %v1174
        %v1697 = vmul.f32 %v1368, %v1174
        %v1698 = vmul.f32 %v1374, %v1174
        %v1699 = vmul.f32 %v1380, %v1174
        %v1700 = vmul.f32 %v1386, %v1174
        %v1701 = vmul.f32 %v1392, %v1174
        %v1702 = vmul.f32 %v1398, %v1174
        %v1703 = vmul.f32 %v1404, %v1174
        %v1704 = vmul.f32 %v1410, %v1174
        %v1705 = vmul.f32 %v1416, %v1174
        %v1706 = vmul.f32 %v1422, %v1174
        %v1707 = vmul.f32 %v1428, %v1174
        %v1708 = vmul.f32 %v1434, %v1174
        %v1709 = vmul.f32 %v1440, %v1174
        %v1710 = vmul.f32 %v1446, %v1174
        %v1711 = vmul.f32 %v1452, %v1174
        %v1712 = vmul.f32 %v1458, %v1174
        %v1713 = vmul.f32 %v1464, %v1174
        %v1714 = vmul.f32 %v1470, %v1174
        %v1715 = vmul.f32 %v1476, %v1174
        %v1716 = vmul.f32 %v1482, %v1174
        %v1717 = vmul.f32 %v1488, %v1174
        %v1718 = vmul.f32 %v1494, %v1174
        %v1719 = vmul.f32 %v1500, %v1174
        %v1720 = vmul.f32 %v1506, %v1174
        %v1721 = vmul.f32 %v1512, %v1174
        %v1722 = vmul.f32 %v1518, %v1174
        %v1723 = vmul.f32 %v1524, %v1174
        %v1724 = vmul.f32 %v1530, %v1174
        %v1725 = vmul.f32 %v1536, %v1174
        %v1726 = vmul.f32 %v1542, %v1174
        %v1727 = vmul.f32 %v1548, %v1174
        %v1728 = vmul.f32 %v1554, %v1174
        %v1729 = vmul.f32 %v1560, %v1174
        %v1730 = vmul.f32 %v1566, %v1174
        %v1731 = vmul.f32 %v1572, %v1174
        %v1732 = vmul.f32 %v1578, %v1174
        %v1733 = vmul.f32 %v1584, %v1174
        %v1734 = vmul.f32 %v1590, %v1174
        %v1735 = vmul.f32 %v1596, %v1174
        %v1736 = vmul.f32 %v1602, %v1174
        %v1737 = vmul.f32 %v1608, %v1174
        %v1738 = vmul.f32 %v1614, %v1174
        %v1739 = vmul.f32 %v1620, %v1174
        %v1740 = vmul.f32 %v1626, %v1174
        %v1741 = vmul.f32 %v1632, %v1174
        %v1742 = vmul.f32 %v1638, %v1174
        %v1743 = vmul.f32 %v1644, %v1174
        %v1744 = vmul.f32 %v1650, %v1174
        %v1745 = vmul.f32 %v1656, %v1174
        %v1746 = vmul.f32 %v1662, %v1174
        %v1747 = vmul.f32 %v1668, %v1174
        %v1748 = vmul.f32 %v1674, %v1174
        %v1749 = vmul.f32 %v1680, %v1174
        %v1750 = vmul.f32 %v1686, %v1174
        %v1751 = vmul.f32 %v1175, %v1175
        %v1752 = vmul.f32 %v1176, %v1176
        %v1753 = vmul.f32 %v1177, %v1177
        %v1754 = vmul.f32 %v1178, %v1178
        %v1755 = vmul.f32 %v1179, %v1179
        %v1756 = vmul.f32 %v1180, %v1180
        %v1757 = vmul.f32 %v1181, %v1181
        %v1758 = vmul.f32 %v1182, %v1182
        %v1759 = vmul.f32 %v1183, %v1183
        %v1760 = vmul.f32 %v1184, %v1184
        %v1761 = vmul.f32 %v1185, %v1185
        %v1762 = vmul.f32 %v1186, %v1186
        %v1763 = vmul.f32 %v1187, %v1187
        %v1764 = vmul.f32 %v1188, %v1188
        %v1765 = vmul.f32 %v1189, %v1189
        %v1766 = vmul.f32 %v1190, %v1190
        %v1767 = vmul.f32 %v1191, %v1191
        %v1768 = vmul.f32 %v1192, %v1192
        %v1769 = vmul.f32 %v1193, %v1193
        %v1770 = vmul.f32 %v1194, %v1194
        %v1771 = vmul.f32 %v1195, %v1195
        %v1772 = vmul.f32 %v1196, %v1196
        %v1773 = vmul.f32 %v1197, %v1197
        %v1774 = vmul.f32 %v1198, %v1198
        %v1775 = vmul.f32 %v1199, %v1199
        %v1776 = vmul.f32 %v1200, %v1200
        %v1777 = vmul.f32 %v1201, %v1201
        %v1778 = vmul.f32 %v1202, %v1202
        %v1779 = vmul.f32 %v1203, %v1203
        %v1780 = vmul.f32 %v1204, %v1204
        %v1781 = vmul.f32 %v1205, %v1205
        %v1782 = vmul.f32 %v1206, %v1206
        %v1783 = vmul.f32 %v1207, %v1207
        %v1784 = vmul.f32 %v1208, %v1208
        %v1785 = vmul.f32 %v1209, %v1209
        %v1786 = vmul.f32 %v1210, %v1210
        %v1787 = vmul.f32 %v1211, %v1211
        %v1788 = vmul.f32 %v1212, %v1212
        %v1789 = vmul.f32 %v1213, %v1213
        %v1790 = vmul.f32 %v1214, %v1214
        %v1791 = vmul.f32 %v1215, %v1215
        %v1792 = vmul.f32 %v1216, %v1216
        %v1793 = vmul.f32 %v1217, %v1217
        %v1794 = vmul.f32 %v1218, %v1218
        %v1795 = vmul.f32 %v1219, %v1219
        %v1796 = vmul.f32 %v1220, %v1220
        %v1797 = vmul.f32 %v1221, %v1221
        %v1798 = vmul.f32 %v1222, %v1222
        %v1799 = vmul.f32 %v1223, %v1223
        %v1800 = vmul.f32 %v1224, %v1224
        %v1801 = vmul.f32 %v1225, %v1225
        %v1802 = vmul.f32 %v1226, %v1226
        %v1803 = vmul.f32 %v1227, %v1227
        %v1804 = vmul.f32 %v1228, %v1228
        %v1805 = vmul.f32 %v1229, %v1229
        %v1806 = vmul.f32 %v1230, %v1230
        %v1807 = vmul.f32 %v1231, %v1231
        %v1808 = vmul.f32 %v1232, %v1232
        %v1809 = vmul.f32 %v1233, %v1233
        %v1810 = vmul.f32 %v1234, %v1234
        %v1811 = vmul.f32 %v1235, %v1235
        %v1812 = vmul.f32 %v1236, %v1236
        %v1813 = vmul.f32 %v1237, %v1237
        %v1814 = vmul.f32 %v1238, %v1238
        %v1815 = vsub.f32 %v1687, %v1751
        %v1816 = vsub.f32 %v1688, %v1752
        %v1817 = vsub.f32 %v1689, %v1753
        %v1818 = vsub.f32 %v1690, %v1754
        %v1819 = vsub.f32 %v1691, %v1755
        %v1820 = vsub.f32 %v1692, %v1756
        %v1821 = vsub.f32 %v1693, %v1757
        %v1822 = vsub.f32 %v1694, %v1758
        %v1823 = vsub.f32 %v1695, %v1759
        %v1824 = vsub.f32 %v1696, %v1760
        %v1825 = vsub.f32 %v1697, %v1761
        %v1826 = vsub.f32 %v1698, %v1762
        %v1827 = vsub.f32 %v1699, %v1763
        %v1828 = vsub.f32 %v1700, %v1764
        %v1829 = vsub.f32 %v1701, %v1765
        %v1830 = vsub.f32 %v1702, %v1766
        %v1831 = vsub.f32 %v1703, %v1767
        %v1832 = vsub.f32 %v1704, %v1768
        %v1833 = vsub.f32 %v1705, %v1769
        %v1834 = vsub.f32 %v1706, %v1770
        %v1835 = vsub.f32 %v1707, %v1771
        %v1836 = vsub.f32 %v1708, %v1772
        %v1837 = vsub.f32 %v1709, %v1773
        %v1838 = vsub.f32 %v1710, %v1774
        %v1839 = vsub.f32 %v1711, %v1775
        %v1840 = vsub.f32 %v1712, %v1776
        %v1841 = vsub.f32 %v1713, %v1777
        %v1842 = vsub.f32 %v1714, %v1778
        %v1843 = vsub.f32 %v1715, %v1779
        %v1844 = vsub.f32 %v1716, %v1780
        %v1845 = vsub.f32 %v1717, %v1781
        %v1846 = vsub.f32 %v1718, %v1782
        %v1847 = vsub.f32 %v1719, %v1783
        %v1848 = vsub.f32 %v1720, %v1784
        %v1849 = vsub.f32 %v1721, %v1785
        %v1850 = vsub.f32 %v1722, %v1786
        %v1851 = vsub.f32 %v1723, %v1787
        %v1852 = vsub.f32 %v1724, %v1788
        %v1853 = vsub.f32 %v1725, %v1789
        %v1854 = vsub.f32 %v1726, %v1790
        %v1855 = vsub.f32 %v1727, %v1791
        %v1856 = vsub.f32 %v1728, %v1792
        %v1857 = vsub.f32 %v1729, %v1793
        %v1858 = vsub.f32 %v1730, %v1794
        %v1859 = vsub.f32 %v1731, %v1795
        %v1860 = vsub.f32 %v1732, %v1796
        %v1861 = vsub.f32 %v1733, %v1797
        %v1862 = vsub.f32 %v1734, %v1798
        %v1863 = vsub.f32 %v1735, %v1799
        %v1864 = vsub.f32 %v1736, %v1800
        %v1865 = vsub.f32 %v1737, %v1801
        %v1866 = vsub.f32 %v1738, %v1802
        %v1867 = vsub.f32 %v1739, %v1803
        %v1868 = vsub.f32 %v1740, %v1804
        %v1869 = vsub.f32 %v1741, %v1805
        %v1870 = vsub.f32 %v1742, %v1806
        %v1871 = vsub.f32 %v1743, %v1807
        %v1872 = vsub.f32 %v1744, %v1808
        %v1873 = vsub.f32 %v1745, %v1809
        %v1874 = vsub.f32 %v1746, %v1810
        %v1875 = vsub.f32 %v1747, %v1811
        %v1876 = vsub.f32 %v1748, %v1812
        %v1877 = vsub.f32 %v1749, %v1813
        %v1878 = vsub.f32 %v1750, %v1814
        %v1879 = vmax.f32 %v1815, 0.0
        %v1880 = vmax.f32 %v1816, 0.0
        %v1881 = vmax.f32 %v1817, 0.0
        %v1882 = vmax.f32 %v1818, 0.0
        %v1883 = vmax.f32 %v1819, 0.0
        %v1884 = vmax.f32 %v1820, 0.0
        %v1885 = vmax.f32 %v1821, 0.0
        %v1886 = vmax.f32 %v1822, 0.0
        %v1887 = vmax.f32 %v1823, 0.0
        %v1888 = vmax.f32 %v1824, 0.0
        %v1889 = vmax.f32 %v1825, 0.0
        %v1890 = vmax.f32 %v1826, 0.0
        %v1891 = vmax.f32 %v1827, 0.0
        %v1892 = vmax.f32 %v1828, 0.0
        %v1893 = vmax.f32 %v1829, 0.0
        %v1894 = vmax.f32 %v1830, 0.0
        %v1895 = vmax.f32 %v1831, 0.0
        %v1896 = vmax.f32 %v1832, 0.0
        %v1897 = vmax.f32 %v1833, 0.0
        %v1898 = vmax.f32 %v1834, 0.0
        %v1899 = vmax.f32 %v1835, 0.0
        %v1900 = vmax.f32 %v1836, 0.0
        %v1901 = vmax.f32 %v1837, 0.0
        %v1902 = vmax.f32 %v1838, 0.0
        %v1903 = vmax.f32 %v1839, 0.0
        %v1904 = vmax.f32 %v1840, 0.0
        %v1905 = vmax.f32 %v1841, 0.0
        %v1906 = vmax.f32 %v1842, 0.0
        %v1907 = vmax.f32 %v1843, 0.0
        %v1908 = vmax.f32 %v1844, 0.0
        %v1909 = vmax.f32 %v1845, 0.0
        %v1910 = vmax.f32 %v1846, 0.0
        %v1911 = vmax.f32 %v1847, 0.0
        %v1912 = vmax.f32 %v1848, 0.0
        %v1913 = vmax.f32 %v1849, 0.0
        %v1914 = vmax.f32 %v1850, 0.0
        %v1915 = vmax.f32 %v1851, 0.0
        %v1916 = vmax.f32 %v1852, 0.0
        %v1917 = vmax.f32 %v1853, 0.0
        %v1918 = vmax.f32 %v1854, 0.0
        %v1919 = vmax.f32 %v1855, 0.0
        %v1920 = vmax.f32 %v1856, 0.0
        %v1921 = vmax.f32 %v1857, 0.0
        %v1922 = vmax.f32 %v1858, 0.0
        %v1923 = vmax.f32 %v1859, 0.0
        %v1924 = vmax.f32 %v1860, 0.0
        %v1925 = vmax.f32 %v1861, 0.0
        %v1926 = vmax.f32 %v1862, 0.0
        %v1927 = vmax.f32 %v1863, 0.0
        %v1928 = vmax.f32 %v1864, 0.0
        %v1929 = vmax.f32 %v1865, 0.0
        %v1930 = vmax.f32 %v1866, 0.0
        %v1931 = vmax.f32 %v1867, 0.0
        %v1932 = vmax.f32 %v1868, 0.0
        %v1933 = vmax.f32 %v1869, 0.0
        %v1934 = vmax.f32 %v1870, 0.0
        %v1935 = vmax.f32 %v1871, 0.0
        %v1936 = vmax.f32 %v1872, 0.0
        %v1937 = vmax.f32 %v1873, 0.0
        %v1938 = vmax.f32 %v1874, 0.0
        %v1939 = vmax.f32 %v1875, 0.0
        %v1940 = vmax.f32 %v1876, 0.0
        %v1941 = vmax.f32 %v1877, 0.0
        %v1942 = vmax.f32 %v1878, 0.0
        %v1943 = vadd.f32 %v1879, 1e-05
        %v1944 = vadd.f32 %v1880, 1e-05
        %v1945 = vadd.f32 %v1881, 1e-05
        %v1946 = vadd.f32 %v1882, 1e-05
        %v1947 = vadd.f32 %v1883, 1e-05
        %v1948 = vadd.f32 %v1884, 1e-05
        %v1949 = vadd.f32 %v1885, 1e-05
        %v1950 = vadd.f32 %v1886, 1e-05
        %v1951 = vadd.f32 %v1887, 1e-05
        %v1952 = vadd.f32 %v1888, 1e-05
        %v1953 = vadd.f32 %v1889, 1e-05
        %v1954 = vadd.f32 %v1890, 1e-05
        %v1955 = vadd.f32 %v1891, 1e-05
        %v1956 = vadd.f32 %v1892, 1e-05
        %v1957 = vadd.f32 %v1893, 1e-05
        %v1958 = vadd.f32 %v1894, 1e-05
        %v1959 = vadd.f32 %v1895, 1e-05
        %v1960 = vadd.f32 %v1896, 1e-05
        %v1961 = vadd.f32 %v1897, 1e-05
        %v1962 = vadd.f32 %v1898, 1e-05
        %v1963 = vadd.f32 %v1899, 1e-05
        %v1964 = vadd.f32 %v1900, 1e-05
        %v1965 = vadd.f32 %v1901, 1e-05
        %v1966 = vadd.f32 %v1902, 1e-05
        %v1967 = vadd.f32 %v1903, 1e-05
        %v1968 = vadd.f32 %v1904, 1e-05
        %v1969 = vadd.f32 %v1905, 1e-05
        %v1970 = vadd.f32 %v1906, 1e-05
        %v1971 = vadd.f32 %v1907, 1e-05
        %v1972 = vadd.f32 %v1908, 1e-05
        %v1973 = vadd.f32 %v1909, 1e-05
        %v1974 = vadd.f32 %v1910, 1e-05
        %v1975 = vadd.f32 %v1911, 1e-05
        %v1976 = vadd.f32 %v1912, 1e-05
        %v1977 = vadd.f32 %v1913, 1e-05
        %v1978 = vadd.f32 %v1914, 1e-05
        %v1979 = vadd.f32 %v1915, 1e-05
        %v1980 = vadd.f32 %v1916, 1e-05
        %v1981 = vadd.f32 %v1917, 1e-05
        %v1982 = vadd.f32 %v1918, 1e-05
        %v1983 = vadd.f32 %v1919, 1e-05
        %v1984 = vadd.f32 %v1920, 1e-05
        %v1985 = vadd.f32 %v1921, 1e-05
        %v1986 = vadd.f32 %v1922, 1e-05
        %v1987 = vadd.f32 %v1923, 1e-05
        %v1988 = vadd.f32 %v1924, 1e-05
        %v1989 = vadd.f32 %v1925, 1e-05
        %v1990 = vadd.f32 %v1926, 1e-05
        %v1991 = vadd.f32 %v1927, 1e-05
        %v1992 = vadd.f32 %v1928, 1e-05
        %v1993 = vadd.f32 %v1929, 1e-05
        %v1994 = vadd.f32 %v1930, 1e-05
        %v1995 = vadd.f32 %v1931, 1e-05
        %v1996 = vadd.f32 %v1932, 1e-05
        %v1997 = vadd.f32 %v1933, 1e-05
        %v1998 = vadd.f32 %v1934, 1e-05
        %v1999 = vadd.f32 %v1935, 1e-05
        %v2000 = vadd.f32 %v1936, 1e-05
        %v2001 = vadd.f32 %v1937, 1e-05
        %v2002 = vadd.f32 %v1938, 1e-05
        %v2003 = vadd.f32 %v1939, 1e-05
        %v2004 = vadd.f32 %v1940, 1e-05
        %v2005 = vadd.f32 %v1941, 1e-05
        %v2006 = vadd.f32 %v1942, 1e-05
        %v2007 = vrsqrt.pop %v1943
        %v2008 = vrsqrt.pop %v1944
        %v2009 = vrsqrt.pop %v1945
        %v2010 = vrsqrt.pop %v1946
        %v2011 = vrsqrt.pop %v1947
        %v2012 = vrsqrt.pop %v1948
        %v2013 = vrsqrt.pop %v1949
        %v2014 = vrsqrt.pop %v1950
        %v2015 = vrsqrt.pop %v1951
        %v2016 = vrsqrt.pop %v1952
        %v2017 = vrsqrt.pop %v1953
        %v2018 = vrsqrt.pop %v1954
        %v2019 = vrsqrt.pop %v1955
        %v2020 = vrsqrt.pop %v1956
        %v2021 = vrsqrt.pop %v1957
        %v2022 = vrsqrt.pop %v1958
        %v2023 = vrsqrt.pop %v1959
        %v2024 = vrsqrt.pop %v1960
        %v2025 = vrsqrt.pop %v1961
        %v2026 = vrsqrt.pop %v1962
        %v2027 = vrsqrt.pop %v1963
        %v2028 = vrsqrt.pop %v1964
        %v2029 = vrsqrt.pop %v1965
        %v2030 = vrsqrt.pop %v1966
        %v2031 = vrsqrt.pop %v1967
        %v2032 = vrsqrt.pop %v1968
        %v2033 = vrsqrt.pop %v1969
        %v2034 = vrsqrt.pop %v1970
        %v2035 = vrsqrt.pop %v1971
        %v2036 = vrsqrt.pop %v1972
        %v2037 = vrsqrt.pop %v1973
        %v2038 = vrsqrt.pop %v1974
        %v2039 = vrsqrt.pop %v1975
        %v2040 = vrsqrt.pop %v1976
        %v2041 = vrsqrt.pop %v1977
        %v2042 = vrsqrt.pop %v1978
        %v2043 = vrsqrt.pop %v1979
        %v2044 = vrsqrt.pop %v1980
        %v2045 = vrsqrt.pop %v1981
        %v2046 = vrsqrt.pop %v1982
        %v2047 = vrsqrt.pop %v1983
        %v2048 = vrsqrt.pop %v1984
        %v2049 = vrsqrt.pop %v1985
        %v2050 = vrsqrt.pop %v1986
        %v2051 = vrsqrt.pop %v1987
        %v2052 = vrsqrt.pop %v1988
        %v2053 = vrsqrt.pop %v1989
        %v2054 = vrsqrt.pop %v1990
        %v2055 = vrsqrt.pop %v1991
        %v2056 = vrsqrt.pop %v1992
        %v2057 = vrsqrt.pop %v1993
        %v2058 = vrsqrt.pop %v1994
        %v2059 = vrsqrt.pop %v1995
        %v2060 = vrsqrt.pop %v1996
        %v2061 = vrsqrt.pop %v1997
        %v2062 = vrsqrt.pop %v1998
        %v2063 = vrsqrt.pop %v1999
        %v2064 = vrsqrt.pop %v2000
        %v2065 = vrsqrt.pop %v2001
        %v2066 = vrsqrt.pop %v2002
        %v2067 = vrsqrt.pop %v2003
        %v2068 = vrsqrt.pop %v2004
        %v2069 = vrsqrt.pop %v2005
        %v2070 = vrsqrt.pop %v2006
        %v2135 = vcombine.low %v2007, %v2008
        %v2136 = vcombine.low %v2009, %v2010
        %v2138 = vunpack.c.l.s4 1966171168
        %v2139 = vunpack.c.0.s8 %v2138
        %v2140 = vlaneseq
        %v2141 = vshrl.u32 %v2140, 7
        %v2142 = vsub.s32 %v2139, %v2141
        %v2143 = vrot.slane %v2135, %v2142
        %v2145 = vunpack.c.l.s4 1966171168
        %v2146 = vunpack.c.0.s8 %v2145
        %v2147 = vlaneseq
        %v2148 = vshrl.u32 %v2147, 7
        %v2149 = vsub.s32 %v2146, %v2148
        %v2150 = vrot.slane %v2136, %v2149
        %v2151 = vcombine.low %v2143, %v2150
        %v2153 = vunpack.c.l.s4 1966171168
        %v2154 = vunpack.c.0.s8 %v2153
        %v2155 = vlaneseq
        %v2156 = vshrl.u32 %v2155, 7
        %v2157 = vsub.s32 %v2154, %v2156
        %v2158 = vrot.slane %v2151, %v2157
        %v2159 = vcombine.low %v2011, %v2012
        %v2160 = vcombine.low %v2013, %v2014
        %v2162 = vunpack.c.l.s4 1966171168
        %v2163 = vunpack.c.0.s8 %v2162
        %v2164 = vlaneseq
        %v2165 = vshrl.u32 %v2164, 7
        %v2166 = vsub.s32 %v2163, %v2165
        %v2167 = vrot.slane %v2159, %v2166
        %v2169 = vunpack.c.l.s4 1966171168
        %v2170 = vunpack.c.0.s8 %v2169
        %v2171 = vlaneseq
        %v2172 = vshrl.u32 %v2171, 7
        %v2173 = vsub.s32 %v2170, %v2172
        %v2174 = vrot.slane %v2160, %v2173
        %v2175 = vcombine.low %v2167, %v2174
        %v2177 = vunpack.c.l.s4 1966171168
        %v2178 = vunpack.c.0.s8 %v2177
        %v2179 = vlaneseq
        %v2180 = vshrl.u32 %v2179, 7
        %v2181 = vsub.s32 %v2178, %v2180
        %v2182 = vrot.slane %v2175, %v2181
        %v2183 = vcombine.low %v2015, %v2016
        %v2184 = vcombine.low %v2017, %v2018
        %v2186 = vunpack.c.l.s4 1966171168
        %v2187 = vunpack.c.0.s8 %v2186
        %v2188 = vlaneseq
        %v2189 = vshrl.u32 %v2188, 7
        %v2190 = vsub.s32 %v2187, %v2189
        %v2191 = vrot.slane %v2183, %v2190
        %v2193 = vunpack.c.l.s4 1966171168
        %v2194 = vunpack.c.0.s8 %v2193
        %v2195 = vlaneseq
        %v2196 = vshrl.u32 %v2195, 7
        %v2197 = vsub.s32 %v2194, %v2196
        %v2198 = vrot.slane %v2184, %v2197
        %v2199 = vcombine.low %v2191, %v2198
        %v2201 = vunpack.c.l.s4 1966171168
        %v2202 = vunpack.c.0.s8 %v2201
        %v2203 = vlaneseq
        %v2204 = vshrl.u32 %v2203, 7
        %v2205 = vsub.s32 %v2202, %v2204
        %v2206 = vrot.slane %v2199, %v2205
        %v2207 = vcombine.low %v2019, %v2020
        %v2208 = vcombine.low %v2021, %v2022
        %v2210 = vunpack.c.l.s4 1966171168
        %v2211 = vunpack.c.0.s8 %v2210
        %v2212 = vlaneseq
        %v2213 = vshrl.u32 %v2212, 7
        %v2214 = vsub.s32 %v2211, %v2213
        %v2215 = vrot.slane %v2207, %v2214
        %v2217 = vunpack.c.l.s4 1966171168
        %v2218 = vunpack.c.0.s8 %v2217
        %v2219 = vlaneseq
        %v2220 = vshrl.u32 %v2219, 7
        %v2221 = vsub.s32 %v2218, %v2220
        %v2222 = vrot.slane %v2208, %v2221
        %v2223 = vcombine.low %v2215, %v2222
        %v2225 = vunpack.c.l.s4 1966171168
        %v2226 = vunpack.c.0.s8 %v2225
        %v2227 = vlaneseq
        %v2228 = vshrl.u32 %v2227, 7
        %v2229 = vsub.s32 %v2226, %v2228
        %v2230 = vrot.slane %v2223, %v2229
        %v2231 = vcombine.low %v2023, %v2024
        %v2232 = vcombine.low %v2025, %v2026
        %v2234 = vunpack.c.l.s4 1966171168
        %v2235 = vunpack.c.0.s8 %v2234
        %v2236 = vlaneseq
        %v2237 = vshrl.u32 %v2236, 7
        %v2238 = vsub.s32 %v2235, %v2237
        %v2239 = vrot.slane %v2231, %v2238
        %v2241 = vunpack.c.l.s4 1966171168
        %v2242 = vunpack.c.0.s8 %v2241
        %v2243 = vlaneseq
        %v2244 = vshrl.u32 %v2243, 7
        %v2245 = vsub.s32 %v2242, %v2244
        %v2246 = vrot.slane %v2232, %v2245
        %v2247 = vcombine.low %v2239, %v2246
        %v2249 = vunpack.c.l.s4 1966171168
        %v2250 = vunpack.c.0.s8 %v2249
        %v2251 = vlaneseq
        %v2252 = vshrl.u32 %v2251, 7
        %v2253 = vsub.s32 %v2250, %v2252
        %v2254 = vrot.slane %v2247, %v2253
        %v2255 = vcombine.low %v2027, %v2028
        %v2256 = vcombine.low %v2029, %v2030
        %v2258 = vunpack.c.l.s4 1966171168
        %v2259 = vunpack.c.0.s8 %v2258
        %v2260 = vlaneseq
        %v2261 = vshrl.u32 %v2260, 7
        %v2262 = vsub.s32 %v2259, %v2261
        %v2263 = vrot.slane %v2255, %v2262
        %v2265 = vunpack.c.l.s4 1966171168
        %v2266 = vunpack.c.0.s8 %v2265
        %v2267 = vlaneseq
        %v2268 = vshrl.u32 %v2267, 7
        %v2269 = vsub.s32 %v2266, %v2268
        %v2270 = vrot.slane %v2256, %v2269
        %v2271 = vcombine.low %v2263, %v2270
        %v2273 = vunpack.c.l.s4 1966171168
        %v2274 = vunpack.c.0.s8 %v2273
        %v2275 = vlaneseq
        %v2276 = vshrl.u32 %v2275, 7
        %v2277 = vsub.s32 %v2274, %v2276
        %v2278 = vrot.slane %v2271, %v2277
        %v2279 = vcombine.low %v2031, %v2032
        %v2280 = vcombine.low %v2033, %v2034
        %v2282 = vunpack.c.l.s4 1966171168
        %v2283 = vunpack.c.0.s8 %v2282
        %v2284 = vlaneseq
        %v2285 = vshrl.u32 %v2284, 7
        %v2286 = vsub.s32 %v2283, %v2285
        %v2287 = vrot.slane %v2279, %v2286
        %v2289 = vunpack.c.l.s4 1966171168
        %v2290 = vunpack.c.0.s8 %v2289
        %v2291 = vlaneseq
        %v2292 = vshrl.u32 %v2291, 7
        %v2293 = vsub.s32 %v2290, %v2292
        %v2294 = vrot.slane %v2280, %v2293
        %v2295 = vcombine.low %v2287, %v2294
        %v2297 = vunpack.c.l.s4 1966171168
        %v2298 = vunpack.c.0.s8 %v2297
        %v2299 = vlaneseq
        %v2300 = vshrl.u32 %v2299, 7
        %v2301 = vsub.s32 %v2298, %v2300
        %v2302 = vrot.slane %v2295, %v2301
        %v2303 = vcombine.low %v2035, %v2036
        %v2304 = vcombine.low %v2037, %v2038
        %v2306 = vunpack.c.l.s4 1966171168
        %v2307 = vunpack.c.0.s8 %v2306
        %v2308 = vlaneseq
        %v2309 = vshrl.u32 %v2308, 7
        %v2310 = vsub.s32 %v2307, %v2309
        %v2311 = vrot.slane %v2303, %v2310
        %v2313 = vunpack.c.l.s4 1966171168
        %v2314 = vunpack.c.0.s8 %v2313
        %v2315 = vlaneseq
        %v2316 = vshrl.u32 %v2315, 7
        %v2317 = vsub.s32 %v2314, %v2316
        %v2318 = vrot.slane %v2304, %v2317
        %v2319 = vcombine.low %v2311, %v2318
        %v2321 = vunpack.c.l.s4 1966171168
        %v2322 = vunpack.c.0.s8 %v2321
        %v2323 = vlaneseq
        %v2324 = vshrl.u32 %v2323, 7
        %v2325 = vsub.s32 %v2322, %v2324
        %v2326 = vrot.slane %v2319, %v2325
        %v2327 = vcombine.low %v2039, %v2040
        %v2328 = vcombine.low %v2041, %v2042
        %v2330 = vunpack.c.l.s4 1966171168
        %v2331 = vunpack.c.0.s8 %v2330
        %v2332 = vlaneseq
        %v2333 = vshrl.u32 %v2332, 7
        %v2334 = vsub.s32 %v2331, %v2333
        %v2335 = vrot.slane %v2327, %v2334
        %v2337 = vunpack.c.l.s4 1966171168
        %v2338 = vunpack.c.0.s8 %v2337
        %v2339 = vlaneseq
        %v2340 = vshrl.u32 %v2339, 7
        %v2341 = vsub.s32 %v2338, %v2340
        %v2342 = vrot.slane %v2328, %v2341
        %v2343 = vcombine.low %v2335, %v2342
        %v2345 = vunpack.c.l.s4 1966171168
        %v2346 = vunpack.c.0.s8 %v2345
        %v2347 = vlaneseq
        %v2348 = vshrl.u32 %v2347, 7
        %v2349 = vsub.s32 %v2346, %v2348
        %v2350 = vrot.slane %v2343, %v2349
        %v2351 = vcombine.low %v2043, %v2044
        %v2352 = vcombine.low %v2045, %v2046
        %v2354 = vunpack.c.l.s4 1966171168
        %v2355 = vunpack.c.0.s8 %v2354
        %v2356 = vlaneseq
        %v2357 = vshrl.u32 %v2356, 7
        %v2358 = vsub.s32 %v2355, %v2357
        %v2359 = vrot.slane %v2351, %v2358
        %v2361 = vunpack.c.l.s4 1966171168
        %v2362 = vunpack.c.0.s8 %v2361
        %v2363 = vlaneseq
        %v2364 = vshrl.u32 %v2363, 7
        %v2365 = vsub.s32 %v2362, %v2364
        %v2366 = vrot.slane %v2352, %v2365
        %v2367 = vcombine.low %v2359, %v2366
        %v2369 = vunpack.c.l.s4 1966171168
        %v2370 = vunpack.c.0.s8 %v2369
        %v2371 = vlaneseq
        %v2372 = vshrl.u32 %v2371, 7
        %v2373 = vsub.s32 %v2370, %v2372
        %v2374 = vrot.slane %v2367, %v2373
        %v2375 = vcombine.low %v2047, %v2048
        %v2376 = vcombine.low %v2049, %v2050
        %v2378 = vunpack.c.l.s4 1966171168
        %v2379 = vunpack.c.0.s8 %v2378
        %v2380 = vlaneseq
        %v2381 = vshrl.u32 %v2380, 7
        %v2382 = vsub.s32 %v2379, %v2381
        %v2383 = vrot.slane %v2375, %v2382
        %v2385 = vunpack.c.l.s4 1966171168
        %v2386 = vunpack.c.0.s8 %v2385
        %v2387 = vlaneseq
        %v2388 = vshrl.u32 %v2387, 7
        %v2389 = vsub.s32 %v2386, %v2388
        %v2390 = vrot.slane %v2376, %v2389
        %v2391 = vcombine.low %v2383, %v2390
        %v2393 = vunpack.c.l.s4 1966171168
        %v2394 = vunpack.c.0.s8 %v2393
        %v2395 = vlaneseq
        %v2396 = vshrl.u32 %v2395, 7
        %v2397 = vsub.s32 %v2394, %v2396
        %v2398 = vrot.slane %v2391, %v2397
        %v2399 = vcombine.low %v2051, %v2052
        %v2400 = vcombine.low %v2053, %v2054
        %v2402 = vunpack.c.l.s4 1966171168
        %v2403 = vunpack.c.0.s8 %v2402
        %v2404 = vlaneseq
        %v2405 = vshrl.u32 %v2404, 7
        %v2406 = vsub.s32 %v2403, %v2405
        %v2407 = vrot.slane %v2399, %v2406
        %v2409 = vunpack.c.l.s4 1966171168
        %v2410 = vunpack.c.0.s8 %v2409
        %v2411 = vlaneseq
        %v2412 = vshrl.u32 %v2411, 7
        %v2413 = vsub.s32 %v2410, %v2412
        %v2414 = vrot.slane %v2400, %v2413
        %v2415 = vcombine.low %v2407, %v2414
        %v2417 = vunpack.c.l.s4 1966171168
        %v2418 = vunpack.c.0.s8 %v2417
        %v2419 = vlaneseq
        %v2420 = vshrl.u32 %v2419, 7
        %v2421 = vsub.s32 %v2418, %v2420
        %v2422 = vrot.slane %v2415, %v2421
        %v2423 = vcombine.low %v2055, %v2056
        %v2424 = vcombine.low %v2057, %v2058
        %v2426 = vunpack.c.l.s4 1966171168
        %v2427 = vunpack.c.0.s8 %v2426
        %v2428 = vlaneseq
        %v2429 = vshrl.u32 %v2428, 7
        %v2430 = vsub.s32 %v2427, %v2429
        %v2431 = vrot.slane %v2423, %v2430
        %v2433 = vunpack.c.l.s4 1966171168
        %v2434 = vunpack.c.0.s8 %v2433
        %v2435 = vlaneseq
        %v2436 = vshrl.u32 %v2435, 7
        %v2437 = vsub.s32 %v2434, %v2436
        %v2438 = vrot.slane %v2424, %v2437
        %v2439 = vcombine.low %v2431, %v2438
        %v2441 = vunpack.c.l.s4 1966171168
        %v2442 = vunpack.c.0.s8 %v2441
        %v2443 = vlaneseq
        %v2444 = vshrl.u32 %v2443, 7
        %v2445 = vsub.s32 %v2442, %v2444
        %v2446 = vrot.slane %v2439, %v2445
        %v2447 = vcombine.low %v2059, %v2060
        %v2448 = vcombine.low %v2061, %v2062
        %v2450 = vunpack.c.l.s4 1966171168
        %v2451 = vunpack.c.0.s8 %v2450
        %v2452 = vlaneseq
        %v2453 = vshrl.u32 %v2452, 7
        %v2454 = vsub.s32 %v2451, %v2453
        %v2455 = vrot.slane %v2447, %v2454
        %v2457 = vunpack.c.l.s4 1966171168
        %v2458 = vunpack.c.0.s8 %v2457
        %v2459 = vlaneseq
        %v2460 = vshrl.u32 %v2459, 7
        %v2461 = vsub.s32 %v2458, %v2460
        %v2462 = vrot.slane %v2448, %v2461
        %v2463 = vcombine.low %v2455, %v2462
        %v2465 = vunpack.c.l.s4 1966171168
        %v2466 = vunpack.c.0.s8 %v2465
        %v2467 = vlaneseq
        %v2468 = vshrl.u32 %v2467, 7
        %v2469 = vsub.s32 %v2466, %v2468
        %v2470 = vrot.slane %v2463, %v2469
        %v2471 = vcombine.low %v2063, %v2064
        %v2472 = vcombine.low %v2065, %v2066
        %v2474 = vunpack.c.l.s4 1966171168
        %v2475 = vunpack.c.0.s8 %v2474
        %v2476 = vlaneseq
        %v2477 = vshrl.u32 %v2476, 7
        %v2478 = vsub.s32 %v2475, %v2477
        %v2479 = vrot.slane %v2471, %v2478
        %v2481 = vunpack.c.l.s4 1966171168
        %v2482 = vunpack.c.0.s8 %v2481
        %v2483 = vlaneseq
        %v2484 = vshrl.u32 %v2483, 7
        %v2485 = vsub.s32 %v2482, %v2484
        %v2486 = vrot.slane %v2472, %v2485
        %v2487 = vcombine.low %v2479, %v2486
        %v2489 = vunpack.c.l.s4 1966171168
        %v2490 = vunpack.c.0.s8 %v2489
        %v2491 = vlaneseq
        %v2492 = vshrl.u32 %v2491, 7
        %v2493 = vsub.s32 %v2490, %v2492
        %v2494 = vrot.slane %v2487, %v2493
        %v2495 = vcombine.low %v2067, %v2068
        %v2496 = vcombine.low %v2069, %v2070
        %v2498 = vunpack.c.l.s4 1966171168
        %v2499 = vunpack.c.0.s8 %v2498
        %v2500 = vlaneseq
        %v2501 = vshrl.u32 %v2500, 7
        %v2502 = vsub.s32 %v2499, %v2501
        %v2503 = vrot.slane %v2495, %v2502
        %v2505 = vunpack.c.l.s4 1966171168
        %v2506 = vunpack.c.0.s8 %v2505
        %v2507 = vlaneseq
        %v2508 = vshrl.u32 %v2507, 7
        %v2509 = vsub.s32 %v2506, %v2508
        %v2510 = vrot.slane %v2496, %v2509
        %v2511 = vcombine.low %v2503, %v2510
        %v2513 = vunpack.c.l.s4 1966171168
        %v2514 = vunpack.c.0.s8 %v2513
        %v2515 = vlaneseq
        %v2516 = vshrl.u32 %v2515, 7
        %v2517 = vsub.s32 %v2514, %v2516
        %v2518 = vrot.slane %v2511, %v2517
        %v2535 = vmul.f32 %v788, %v2158
        %v2536 = vmul.f32 %v788, %v2182
        %v2537 = vmul.f32 %v788, %v2206
        %v2538 = vmul.f32 %v788, %v2230
        %v2539 = vmul.f32 %v788, %v2254
        %v2540 = vmul.f32 %v788, %v2278
        %v2541 = vmul.f32 %v788, %v2302
        %v2542 = vmul.f32 %v788, %v2326
        %v2543 = vmul.f32 %v788, %v2350
        %v2544 = vmul.f32 %v788, %v2374
        %v2545 = vmul.f32 %v788, %v2398
        %v2546 = vmul.f32 %v788, %v2422
        %v2547 = vmul.f32 %v788, %v2446
        %v2548 = vmul.f32 %v788, %v2470
        %v2549 = vmul.f32 %v788, %v2494
        %v2550 = vmul.f32 %v788, %v2518
        %v2567 = vlaneseq
        %v2568 = vshrl.u32 %v2567, 7
        %v2569 = vsub.s32 0, %v2568
        %v2570 = vrot.slane %v2535, %v2569
        %v2571 = vlaneseq
        %v2572 = vshrl.u32 %v2571, 7
        %v2573 = vsub.s32 1, %v2572
        %v2574 = vrot.slane %v2535, %v2573
        %v2575 = vlaneseq
        %v2576 = vshrl.u32 %v2575, 7
        %v2577 = vsub.s32 2, %v2576
        %v2578 = vrot.slane %v2535, %v2577
        %v2579 = vlaneseq
        %v2580 = vshrl.u32 %v2579, 7
        %v2581 = vsub.s32 3, %v2580
        %v2582 = vrot.slane %v2535, %v2581
        %v2583 = vlaneseq
        %v2584 = vshrl.u32 %v2583, 7
        %v2585 = vsub.s32 0, %v2584
        %v2586 = vrot.slane %v2536, %v2585
        %v2587 = vlaneseq
        %v2588 = vshrl.u32 %v2587, 7
        %v2589 = vsub.s32 1, %v2588
        %v2590 = vrot.slane %v2536, %v2589
        %v2591 = vlaneseq
        %v2592 = vshrl.u32 %v2591, 7
        %v2593 = vsub.s32 2, %v2592
        %v2594 = vrot.slane %v2536, %v2593
        %v2595 = vlaneseq
        %v2596 = vshrl.u32 %v2595, 7
        %v2597 = vsub.s32 3, %v2596
        %v2598 = vrot.slane %v2536, %v2597
        %v2599 = vlaneseq
        %v2600 = vshrl.u32 %v2599, 7
        %v2601 = vsub.s32 0, %v2600
        %v2602 = vrot.slane %v2537, %v2601
        %v2603 = vlaneseq
        %v2604 = vshrl.u32 %v2603, 7
        %v2605 = vsub.s32 1, %v2604
        %v2606 = vrot.slane %v2537, %v2605
        %v2607 = vlaneseq
        %v2608 = vshrl.u32 %v2607, 7
        %v2609 = vsub.s32 2, %v2608
        %v2610 = vrot.slane %v2537, %v2609
        %v2611 = vlaneseq
        %v2612 = vshrl.u32 %v2611, 7
        %v2613 = vsub.s32 3, %v2612
        %v2614 = vrot.slane %v2537, %v2613
        %v2615 = vlaneseq
        %v2616 = vshrl.u32 %v2615, 7
        %v2617 = vsub.s32 0, %v2616
        %v2618 = vrot.slane %v2538, %v2617
        %v2619 = vlaneseq
        %v2620 = vshrl.u32 %v2619, 7
        %v2621 = vsub.s32 1, %v2620
        %v2622 = vrot.slane %v2538, %v2621
        %v2623 = vlaneseq
        %v2624 = vshrl.u32 %v2623, 7
        %v2625 = vsub.s32 2, %v2624
        %v2626 = vrot.slane %v2538, %v2625
        %v2627 = vlaneseq
        %v2628 = vshrl.u32 %v2627, 7
        %v2629 = vsub.s32 3, %v2628
        %v2630 = vrot.slane %v2538, %v2629
        %v2631 = vlaneseq
        %v2632 = vshrl.u32 %v2631, 7
        %v2633 = vsub.s32 0, %v2632
        %v2634 = vrot.slane %v2539, %v2633
        %v2635 = vlaneseq
        %v2636 = vshrl.u32 %v2635, 7
        %v2637 = vsub.s32 1, %v2636
        %v2638 = vrot.slane %v2539, %v2637
        %v2639 = vlaneseq
        %v2640 = vshrl.u32 %v2639, 7
        %v2641 = vsub.s32 2, %v2640
        %v2642 = vrot.slane %v2539, %v2641
        %v2643 = vlaneseq
        %v2644 = vshrl.u32 %v2643, 7
        %v2645 = vsub.s32 3, %v2644
        %v2646 = vrot.slane %v2539, %v2645
        %v2647 = vlaneseq
        %v2648 = vshrl.u32 %v2647, 7
        %v2649 = vsub.s32 0, %v2648
        %v2650 = vrot.slane %v2540, %v2649
        %v2651 = vlaneseq
        %v2652 = vshrl.u32 %v2651, 7
        %v2653 = vsub.s32 1, %v2652
        %v2654 = vrot.slane %v2540, %v2653
        %v2655 = vlaneseq
        %v2656 = vshrl.u32 %v2655, 7
        %v2657 = vsub.s32 2, %v2656
        %v2658 = vrot.slane %v2540, %v2657
        %v2659 = vlaneseq
        %v2660 = vshrl.u32 %v2659, 7
        %v2661 = vsub.s32 3, %v2660
        %v2662 = vrot.slane %v2540, %v2661
        %v2663 = vlaneseq
        %v2664 = vshrl.u32 %v2663, 7
        %v2665 = vsub.s32 0, %v2664
        %v2666 = vrot.slane %v2541, %v2665
        %v2667 = vlaneseq
        %v2668 = vshrl.u32 %v2667, 7
        %v2669 = vsub.s32 1, %v2668
        %v2670 = vrot.slane %v2541, %v2669
        %v2671 = vlaneseq
        %v2672 = vshrl.u32 %v2671, 7
        %v2673 = vsub.s32 2, %v2672
        %v2674 = vrot.slane %v2541, %v2673
        %v2675 = vlaneseq
        %v2676 = vshrl.u32 %v2675, 7
        %v2677 = vsub.s32 3, %v2676
        %v2678 = vrot.slane %v2541, %v2677
        %v2679 = vlaneseq
        %v2680 = vshrl.u32 %v2679, 7
        %v2681 = vsub.s32 0, %v2680
        %v2682 = vrot.slane %v2542, %v2681
        %v2683 = vlaneseq
        %v2684 = vshrl.u32 %v2683, 7
        %v2685 = vsub.s32 1, %v2684
        %v2686 = vrot.slane %v2542, %v2685
        %v2687 = vlaneseq
        %v2688 = vshrl.u32 %v2687, 7
        %v2689 = vsub.s32 2, %v2688
        %v2690 = vrot.slane %v2542, %v2689
        %v2691 = vlaneseq
        %v2692 = vshrl.u32 %v2691, 7
        %v2693 = vsub.s32 3, %v2692
        %v2694 = vrot.slane %v2542, %v2693
        %v2695 = vlaneseq
        %v2696 = vshrl.u32 %v2695, 7
        %v2697 = vsub.s32 0, %v2696
        %v2698 = vrot.slane %v2543, %v2697
        %v2699 = vlaneseq
        %v2700 = vshrl.u32 %v2699, 7
        %v2701 = vsub.s32 1, %v2700
        %v2702 = vrot.slane %v2543, %v2701
        %v2703 = vlaneseq
        %v2704 = vshrl.u32 %v2703, 7
        %v2705 = vsub.s32 2, %v2704
        %v2706 = vrot.slane %v2543, %v2705
        %v2707 = vlaneseq
        %v2708 = vshrl.u32 %v2707, 7
        %v2709 = vsub.s32 3, %v2708
        %v2710 = vrot.slane %v2543, %v2709
        %v2711 = vlaneseq
        %v2712 = vshrl.u32 %v2711, 7
        %v2713 = vsub.s32 0, %v2712
        %v2714 = vrot.slane %v2544, %v2713
        %v2715 = vlaneseq
        %v2716 = vshrl.u32 %v2715, 7
        %v2717 = vsub.s32 1, %v2716
        %v2718 = vrot.slane %v2544, %v2717
        %v2719 = vlaneseq
        %v2720 = vshrl.u32 %v2719, 7
        %v2721 = vsub.s32 2, %v2720
        %v2722 = vrot.slane %v2544, %v2721
        %v2723 = vlaneseq
        %v2724 = vshrl.u32 %v2723, 7
        %v2725 = vsub.s32 3, %v2724
        %v2726 = vrot.slane %v2544, %v2725
        %v2727 = vlaneseq
        %v2728 = vshrl.u32 %v2727, 7
        %v2729 = vsub.s32 0, %v2728
        %v2730 = vrot.slane %v2545, %v2729
        %v2731 = vlaneseq
        %v2732 = vshrl.u32 %v2731, 7
        %v2733 = vsub.s32 1, %v2732
        %v2734 = vrot.slane %v2545, %v2733
        %v2735 = vlaneseq
        %v2736 = vshrl.u32 %v2735, 7
        %v2737 = vsub.s32 2, %v2736
        %v2738 = vrot.slane %v2545, %v2737
        %v2739 = vlaneseq
        %v2740 = vshrl.u32 %v2739, 7
        %v2741 = vsub.s32 3, %v2740
        %v2742 = vrot.slane %v2545, %v2741
        %v2743 = vlaneseq
        %v2744 = vshrl.u32 %v2743, 7
        %v2745 = vsub.s32 0, %v2744
        %v2746 = vrot.slane %v2546, %v2745
        %v2747 = vlaneseq
        %v2748 = vshrl.u32 %v2747, 7
        %v2749 = vsub.s32 1, %v2748
        %v2750 = vrot.slane %v2546, %v2749
        %v2751 = vlaneseq
        %v2752 = vshrl.u32 %v2751, 7
        %v2753 = vsub.s32 2, %v2752
        %v2754 = vrot.slane %v2546, %v2753
        %v2755 = vlaneseq
        %v2756 = vshrl.u32 %v2755, 7
        %v2757 = vsub.s32 3, %v2756
        %v2758 = vrot.slane %v2546, %v2757
        %v2759 = vlaneseq
        %v2760 = vshrl.u32 %v2759, 7
        %v2761 = vsub.s32 0, %v2760
        %v2762 = vrot.slane %v2547, %v2761
        %v2763 = vlaneseq
        %v2764 = vshrl.u32 %v2763, 7
        %v2765 = vsub.s32 1, %v2764
        %v2766 = vrot.slane %v2547, %v2765
        %v2767 = vlaneseq
        %v2768 = vshrl.u32 %v2767, 7
        %v2769 = vsub.s32 2, %v2768
        %v2770 = vrot.slane %v2547, %v2769
        %v2771 = vlaneseq
        %v2772 = vshrl.u32 %v2771, 7
        %v2773 = vsub.s32 3, %v2772
        %v2774 = vrot.slane %v2547, %v2773
        %v2775 = vlaneseq
        %v2776 = vshrl.u32 %v2775, 7
        %v2777 = vsub.s32 0, %v2776
        %v2778 = vrot.slane %v2548, %v2777
        %v2779 = vlaneseq
        %v2780 = vshrl.u32 %v2779, 7
        %v2781 = vsub.s32 1, %v2780
        %v2782 = vrot.slane %v2548, %v2781
        %v2783 = vlaneseq
        %v2784 = vshrl.u32 %v2783, 7
        %v2785 = vsub.s32 2, %v2784
        %v2786 = vrot.slane %v2548, %v2785
        %v2787 = vlaneseq
        %v2788 = vshrl.u32 %v2787, 7
        %v2789 = vsub.s32 3, %v2788
        %v2790 = vrot.slane %v2548, %v2789
        %v2791 = vlaneseq
        %v2792 = vshrl.u32 %v2791, 7
        %v2793 = vsub.s32 0, %v2792
        %v2794 = vrot.slane %v2549, %v2793
        %v2795 = vlaneseq
        %v2796 = vshrl.u32 %v2795, 7
        %v2797 = vsub.s32 1, %v2796
        %v2798 = vrot.slane %v2549, %v2797
        %v2799 = vlaneseq
        %v2800 = vshrl.u32 %v2799, 7
        %v2801 = vsub.s32 2, %v2800
        %v2802 = vrot.slane %v2549, %v2801
        %v2803 = vlaneseq
        %v2804 = vshrl.u32 %v2803, 7
        %v2805 = vsub.s32 3, %v2804
        %v2806 = vrot.slane %v2549, %v2805
        %v2807 = vlaneseq
        %v2808 = vshrl.u32 %v2807, 7
        %v2809 = vsub.s32 0, %v2808
        %v2810 = vrot.slane %v2550, %v2809
        %v2811 = vlaneseq
        %v2812 = vshrl.u32 %v2811, 7
        %v2813 = vsub.s32 1, %v2812
        %v2814 = vrot.slane %v2550, %v2813
        %v2815 = vlaneseq
        %v2816 = vshrl.u32 %v2815, 7
        %v2817 = vsub.s32 2, %v2816
        %v2818 = vrot.slane %v2550, %v2817
        %v2819 = vlaneseq
        %v2820 = vshrl.u32 %v2819, 7
        %v2821 = vsub.s32 3, %v2820
        %v2822 = vrot.slane %v2550, %v2821
        %v2887 = vmul.f32 %v1175, %v2570
        %v2888 = vmul.f32 %v1176, %v2574
        %v2889 = vmul.f32 %v1177, %v2578
        %v2890 = vmul.f32 %v1178, %v2582
        %v2891 = vmul.f32 %v1179, %v2586
        %v2892 = vmul.f32 %v1180, %v2590
        %v2893 = vmul.f32 %v1181, %v2594
        %v2894 = vmul.f32 %v1182, %v2598
        %v2895 = vmul.f32 %v1183, %v2602
        %v2896 = vmul.f32 %v1184, %v2606
        %v2897 = vmul.f32 %v1185, %v2610
        %v2898 = vmul.f32 %v1186, %v2614
        %v2899 = vmul.f32 %v1187, %v2618
        %v2900 = vmul.f32 %v1188, %v2622
        %v2901 = vmul.f32 %v1189, %v2626
        %v2902 = vmul.f32 %v1190, %v2630
        %v2903 = vmul.f32 %v1191, %v2634
        %v2904 = vmul.f32 %v1192, %v2638
        %v2905 = vmul.f32 %v1193, %v2642
        %v2906 = vmul.f32 %v1194, %v2646
        %v2907 = vmul.f32 %v1195, %v2650
        %v2908 = vmul.f32 %v1196, %v2654
        %v2909 = vmul.f32 %v1197, %v2658
        %v2910 = vmul.f32 %v1198, %v2662
        %v2911 = vmul.f32 %v1199, %v2666
        %v2912 = vmul.f32 %v1200, %v2670
        %v2913 = vmul.f32 %v1201, %v2674
        %v2914 = vmul.f32 %v1202, %v2678
        %v2915 = vmul.f32 %v1203, %v2682
        %v2916 = vmul.f32 %v1204, %v2686
        %v2917 = vmul.f32 %v1205, %v2690
        %v2918 = vmul.f32 %v1206, %v2694
        %v2919 = vmul.f32 %v1207, %v2698
        %v2920 = vmul.f32 %v1208, %v2702
        %v2921 = vmul.f32 %v1209, %v2706
        %v2922 = vmul.f32 %v1210, %v2710
        %v2923 = vmul.f32 %v1211, %v2714
        %v2924 = vmul.f32 %v1212, %v2718
        %v2925 = vmul.f32 %v1213, %v2722
        %v2926 = vmul.f32 %v1214, %v2726
        %v2927 = vmul.f32 %v1215, %v2730
        %v2928 = vmul.f32 %v1216, %v2734
        %v2929 = vmul.f32 %v1217, %v2738
        %v2930 = vmul.f32 %v1218, %v2742
        %v2931 = vmul.f32 %v1219, %v2746
        %v2932 = vmul.f32 %v1220, %v2750
        %v2933 = vmul.f32 %v1221, %v2754
        %v2934 = vmul.f32 %v1222, %v2758
        %v2935 = vmul.f32 %v1223, %v2762
        %v2936 = vmul.f32 %v1224, %v2766
        %v2937 = vmul.f32 %v1225, %v2770
        %v2938 = vmul.f32 %v1226, %v2774
        %v2939 = vmul.f32 %v1227, %v2778
        %v2940 = vmul.f32 %v1228, %v2782
        %v2941 = vmul.f32 %v1229, %v2786
        %v2942 = vmul.f32 %v1230, %v2790
        %v2943 = vmul.f32 %v1231, %v2794
        %v2944 = vmul.f32 %v1232, %v2798
        %v2945 = vmul.f32 %v1233, %v2802
        %v2946 = vmul.f32 %v1234, %v2806
        %v2947 = vmul.f32 %v1235, %v2810
        %v2948 = vmul.f32 %v1236, %v2814
        %v2949 = vmul.f32 %v1237, %v2818
        %v2950 = vmul.f32 %v1238, %v2822
        %v3015 = vcombine.low %v2887, %v2888
        %v3016 = vcombine.low %v2889, %v2890
        %v3018 = vunpack.c.l.s4 1966171168
        %v3019 = vunpack.c.0.s8 %v3018
        %v3020 = vlaneseq
        %v3021 = vshrl.u32 %v3020, 7
        %v3022 = vsub.s32 %v3019, %v3021
        %v3023 = vrot.slane %v3015, %v3022
        %v3025 = vunpack.c.l.s4 1966171168
        %v3026 = vunpack.c.0.s8 %v3025
        %v3027 = vlaneseq
        %v3028 = vshrl.u32 %v3027, 7
        %v3029 = vsub.s32 %v3026, %v3028
        %v3030 = vrot.slane %v3016, %v3029
        %v3031 = vcombine.low %v3023, %v3030
        %v3033 = vunpack.c.l.s4 1966171168
        %v3034 = vunpack.c.0.s8 %v3033
        %v3035 = vlaneseq
        %v3036 = vshrl.u32 %v3035, 7
        %v3037 = vsub.s32 %v3034, %v3036
        %v3038 = vrot.slane %v3031, %v3037
        %v3039 = vcombine.low %v2891, %v2892
        %v3040 = vcombine.low %v2893, %v2894
        %v3042 = vunpack.c.l.s4 1966171168
        %v3043 = vunpack.c.0.s8 %v3042
        %v3044 = vlaneseq
        %v3045 = vshrl.u32 %v3044, 7
        %v3046 = vsub.s32 %v3043, %v3045
        %v3047 = vrot.slane %v3039, %v3046
        %v3049 = vunpack.c.l.s4 1966171168
        %v3050 = vunpack.c.0.s8 %v3049
        %v3051 = vlaneseq
        %v3052 = vshrl.u32 %v3051, 7
        %v3053 = vsub.s32 %v3050, %v3052
        %v3054 = vrot.slane %v3040, %v3053
        %v3055 = vcombine.low %v3047, %v3054
        %v3057 = vunpack.c.l.s4 1966171168
        %v3058 = vunpack.c.0.s8 %v3057
        %v3059 = vlaneseq
        %v3060 = vshrl.u32 %v3059, 7
        %v3061 = vsub.s32 %v3058, %v3060
        %v3062 = vrot.slane %v3055, %v3061
        %v3063 = vcombine.low %v2895, %v2896
        %v3064 = vcombine.low %v2897, %v2898
        %v3066 = vunpack.c.l.s4 1966171168
        %v3067 = vunpack.c.0.s8 %v3066
        %v3068 = vlaneseq
        %v3069 = vshrl.u32 %v3068, 7
        %v3070 = vsub.s32 %v3067, %v3069
        %v3071 = vrot.slane %v3063, %v3070
        %v3073 = vunpack.c.l.s4 1966171168
        %v3074 = vunpack.c.0.s8 %v3073
        %v3075 = vlaneseq
        %v3076 = vshrl.u32 %v3075, 7
        %v3077 = vsub.s32 %v3074, %v3076
        %v3078 = vrot.slane %v3064, %v3077
        %v3079 = vcombine.low %v3071, %v3078
        %v3081 = vunpack.c.l.s4 1966171168
        %v3082 = vunpack.c.0.s8 %v3081
        %v3083 = vlaneseq
        %v3084 = vshrl.u32 %v3083, 7
        %v3085 = vsub.s32 %v3082, %v3084
        %v3086 = vrot.slane %v3079, %v3085
        %v3087 = vcombine.low %v2899, %v2900
        %v3088 = vcombine.low %v2901, %v2902
        %v3090 = vunpack.c.l.s4 1966171168
        %v3091 = vunpack.c.0.s8 %v3090
        %v3092 = vlaneseq
        %v3093 = vshrl.u32 %v3092, 7
        %v3094 = vsub.s32 %v3091, %v3093
        %v3095 = vrot.slane %v3087, %v3094
        %v3097 = vunpack.c.l.s4 1966171168
        %v3098 = vunpack.c.0.s8 %v3097
        %v3099 = vlaneseq
        %v3100 = vshrl.u32 %v3099, 7
        %v3101 = vsub.s32 %v3098, %v3100
        %v3102 = vrot.slane %v3088, %v3101
        %v3103 = vcombine.low %v3095, %v3102
        %v3105 = vunpack.c.l.s4 1966171168
        %v3106 = vunpack.c.0.s8 %v3105
        %v3107 = vlaneseq
        %v3108 = vshrl.u32 %v3107, 7
        %v3109 = vsub.s32 %v3106, %v3108
        %v3110 = vrot.slane %v3103, %v3109
        %v3111 = vcombine.low %v2903, %v2904
        %v3112 = vcombine.low %v2905, %v2906
        %v3114 = vunpack.c.l.s4 1966171168
        %v3115 = vunpack.c.0.s8 %v3114
        %v3116 = vlaneseq
        %v3117 = vshrl.u32 %v3116, 7
        %v3118 = vsub.s32 %v3115, %v3117
        %v3119 = vrot.slane %v3111, %v3118
        %v3121 = vunpack.c.l.s4 1966171168
        %v3122 = vunpack.c.0.s8 %v3121
        %v3123 = vlaneseq
        %v3124 = vshrl.u32 %v3123, 7
        %v3125 = vsub.s32 %v3122, %v3124
        %v3126 = vrot.slane %v3112, %v3125
        %v3127 = vcombine.low %v3119, %v3126
        %v3129 = vunpack.c.l.s4 1966171168
        %v3130 = vunpack.c.0.s8 %v3129
        %v3131 = vlaneseq
        %v3132 = vshrl.u32 %v3131, 7
        %v3133 = vsub.s32 %v3130, %v3132
        %v3134 = vrot.slane %v3127, %v3133
        %v3135 = vcombine.low %v2907, %v2908
        %v3136 = vcombine.low %v2909, %v2910
        %v3138 = vunpack.c.l.s4 1966171168
        %v3139 = vunpack.c.0.s8 %v3138
        %v3140 = vlaneseq
        %v3141 = vshrl.u32 %v3140, 7
        %v3142 = vsub.s32 %v3139, %v3141
        %v3143 = vrot.slane %v3135, %v3142
        %v3145 = vunpack.c.l.s4 1966171168
        %v3146 = vunpack.c.0.s8 %v3145
        %v3147 = vlaneseq
        %v3148 = vshrl.u32 %v3147, 7
        %v3149 = vsub.s32 %v3146, %v3148
        %v3150 = vrot.slane %v3136, %v3149
        %v3151 = vcombine.low %v3143, %v3150
        %v3153 = vunpack.c.l.s4 1966171168
        %v3154 = vunpack.c.0.s8 %v3153
        %v3155 = vlaneseq
        %v3156 = vshrl.u32 %v3155, 7
        %v3157 = vsub.s32 %v3154, %v3156
        %v3158 = vrot.slane %v3151, %v3157
        %v3159 = vcombine.low %v2911, %v2912
        %v3160 = vcombine.low %v2913, %v2914
        %v3162 = vunpack.c.l.s4 1966171168
        %v3163 = vunpack.c.0.s8 %v3162
        %v3164 = vlaneseq
        %v3165 = vshrl.u32 %v3164, 7
        %v3166 = vsub.s32 %v3163, %v3165
        %v3167 = vrot.slane %v3159, %v3166
        %v3169 = vunpack.c.l.s4 1966171168
        %v3170 = vunpack.c.0.s8 %v3169
        %v3171 = vlaneseq
        %v3172 = vshrl.u32 %v3171, 7
        %v3173 = vsub.s32 %v3170, %v3172
        %v3174 = vrot.slane %v3160, %v3173
        %v3175 = vcombine.low %v3167, %v3174
        %v3177 = vunpack.c.l.s4 1966171168
        %v3178 = vunpack.c.0.s8 %v3177
        %v3179 = vlaneseq
        %v3180 = vshrl.u32 %v3179, 7
        %v3181 = vsub.s32 %v3178, %v3180
        %v3182 = vrot.slane %v3175, %v3181
        %v3183 = vcombine.low %v2915, %v2916
        %v3184 = vcombine.low %v2917, %v2918
        %v3186 = vunpack.c.l.s4 1966171168
        %v3187 = vunpack.c.0.s8 %v3186
        %v3188 = vlaneseq
        %v3189 = vshrl.u32 %v3188, 7
        %v3190 = vsub.s32 %v3187, %v3189
        %v3191 = vrot.slane %v3183, %v3190
        %v3193 = vunpack.c.l.s4 1966171168
        %v3194 = vunpack.c.0.s8 %v3193
        %v3195 = vlaneseq
        %v3196 = vshrl.u32 %v3195, 7
        %v3197 = vsub.s32 %v3194, %v3196
        %v3198 = vrot.slane %v3184, %v3197
        %v3199 = vcombine.low %v3191, %v3198
        %v3201 = vunpack.c.l.s4 1966171168
        %v3202 = vunpack.c.0.s8 %v3201
        %v3203 = vlaneseq
        %v3204 = vshrl.u32 %v3203, 7
        %v3205 = vsub.s32 %v3202, %v3204
        %v3206 = vrot.slane %v3199, %v3205
        %v3207 = vcombine.low %v2919, %v2920
        %v3208 = vcombine.low %v2921, %v2922
        %v3210 = vunpack.c.l.s4 1966171168
        %v3211 = vunpack.c.0.s8 %v3210
        %v3212 = vlaneseq
        %v3213 = vshrl.u32 %v3212, 7
        %v3214 = vsub.s32 %v3211, %v3213
        %v3215 = vrot.slane %v3207, %v3214
        %v3217 = vunpack.c.l.s4 1966171168
        %v3218 = vunpack.c.0.s8 %v3217
        %v3219 = vlaneseq
        %v3220 = vshrl.u32 %v3219, 7
        %v3221 = vsub.s32 %v3218, %v3220
        %v3222 = vrot.slane %v3208, %v3221
        %v3223 = vcombine.low %v3215, %v3222
        %v3225 = vunpack.c.l.s4 1966171168
        %v3226 = vunpack.c.0.s8 %v3225
        %v3227 = vlaneseq
        %v3228 = vshrl.u32 %v3227, 7
        %v3229 = vsub.s32 %v3226, %v3228
        %v3230 = vrot.slane %v3223, %v3229
        %v3231 = vcombine.low %v2923, %v2924
        %v3232 = vcombine.low %v2925, %v2926
        %v3234 = vunpack.c.l.s4 1966171168
        %v3235 = vunpack.c.0.s8 %v3234
        %v3236 = vlaneseq
        %v3237 = vshrl.u32 %v3236, 7
        %v3238 = vsub.s32 %v3235, %v3237
        %v3239 = vrot.slane %v3231, %v3238
        %v3241 = vunpack.c.l.s4 1966171168
        %v3242 = vunpack.c.0.s8 %v3241
        %v3243 = vlaneseq
        %v3244 = vshrl.u32 %v3243, 7
        %v3245 = vsub.s32 %v3242, %v3244
        %v3246 = vrot.slane %v3232, %v3245
        %v3247 = vcombine.low %v3239, %v3246
        %v3249 = vunpack.c.l.s4 1966171168
        %v3250 = vunpack.c.0.s8 %v3249
        %v3251 = vlaneseq
        %v3252 = vshrl.u32 %v3251, 7
        %v3253 = vsub.s32 %v3250, %v3252
        %v3254 = vrot.slane %v3247, %v3253
        %v3255 = vcombine.low %v2927, %v2928
        %v3256 = vcombine.low %v2929, %v2930
        %v3258 = vunpack.c.l.s4 1966171168
        %v3259 = vunpack.c.0.s8 %v3258
        %v3260 = vlaneseq
        %v3261 = vshrl.u32 %v3260, 7
        %v3262 = vsub.s32 %v3259, %v3261
        %v3263 = vrot.slane %v3255, %v3262
        %v3265 = vunpack.c.l.s4 1966171168
        %v3266 = vunpack.c.0.s8 %v3265
        %v3267 = vlaneseq
        %v3268 = vshrl.u32 %v3267, 7
        %v3269 = vsub.s32 %v3266, %v3268
        %v3270 = vrot.slane %v3256, %v3269
        %v3271 = vcombine.low %v3263, %v3270
        %v3273 = vunpack.c.l.s4 1966171168
        %v3274 = vunpack.c.0.s8 %v3273
        %v3275 = vlaneseq
        %v3276 = vshrl.u32 %v3275, 7
        %v3277 = vsub.s32 %v3274, %v3276
        %v3278 = vrot.slane %v3271, %v3277
        %v3279 = vcombine.low %v2931, %v2932
        %v3280 = vcombine.low %v2933, %v2934
        %v3282 = vunpack.c.l.s4 1966171168
        %v3283 = vunpack.c.0.s8 %v3282
        %v3284 = vlaneseq
        %v3285 = vshrl.u32 %v3284, 7
        %v3286 = vsub.s32 %v3283, %v3285
        %v3287 = vrot.slane %v3279, %v3286
        %v3289 = vunpack.c.l.s4 1966171168
        %v3290 = vunpack.c.0.s8 %v3289
        %v3291 = vlaneseq
        %v3292 = vshrl.u32 %v3291, 7
        %v3293 = vsub.s32 %v3290, %v3292
        %v3294 = vrot.slane %v3280, %v3293
        %v3295 = vcombine.low %v3287, %v3294
        %v3297 = vunpack.c.l.s4 1966171168
        %v3298 = vunpack.c.0.s8 %v3297
        %v3299 = vlaneseq
        %v3300 = vshrl.u32 %v3299, 7
        %v3301 = vsub.s32 %v3298, %v3300
        %v3302 = vrot.slane %v3295, %v3301
        %v3303 = vcombine.low %v2935, %v2936
        %v3304 = vcombine.low %v2937, %v2938
        %v3306 = vunpack.c.l.s4 1966171168
        %v3307 = vunpack.c.0.s8 %v3306
        %v3308 = vlaneseq
        %v3309 = vshrl.u32 %v3308, 7
        %v3310 = vsub.s32 %v3307, %v3309
        %v3311 = vrot.slane %v3303, %v3310
        %v3313 = vunpack.c.l.s4 1966171168
        %v3314 = vunpack.c.0.s8 %v3313
        %v3315 = vlaneseq
        %v3316 = vshrl.u32 %v3315, 7
        %v3317 = vsub.s32 %v3314, %v3316
        %v3318 = vrot.slane %v3304, %v3317
        %v3319 = vcombine.low %v3311, %v3318
        %v3321 = vunpack.c.l.s4 1966171168
        %v3322 = vunpack.c.0.s8 %v3321
        %v3323 = vlaneseq
        %v3324 = vshrl.u32 %v3323, 7
        %v3325 = vsub.s32 %v3322, %v3324
        %v3326 = vrot.slane %v3319, %v3325
        %v3327 = vcombine.low %v2939, %v2940
        %v3328 = vcombine.low %v2941, %v2942
        %v3330 = vunpack.c.l.s4 1966171168
        %v3331 = vunpack.c.0.s8 %v3330
        %v3332 = vlaneseq
        %v3333 = vshrl.u32 %v3332, 7
        %v3334 = vsub.s32 %v3331, %v3333
        %v3335 = vrot.slane %v3327, %v3334
        %v3337 = vunpack.c.l.s4 1966171168
        %v3338 = vunpack.c.0.s8 %v3337
        %v3339 = vlaneseq
        %v3340 = vshrl.u32 %v3339, 7
        %v3341 = vsub.s32 %v3338, %v3340
        %v3342 = vrot.slane %v3328, %v3341
        %v3343 = vcombine.low %v3335, %v3342
        %v3345 = vunpack.c.l.s4 1966171168
        %v3346 = vunpack.c.0.s8 %v3345
        %v3347 = vlaneseq
        %v3348 = vshrl.u32 %v3347, 7
        %v3349 = vsub.s32 %v3346, %v3348
        %v3350 = vrot.slane %v3343, %v3349
        %v3351 = vcombine.low %v2943, %v2944
        %v3352 = vcombine.low %v2945, %v2946
        %v3354 = vunpack.c.l.s4 1966171168
        %v3355 = vunpack.c.0.s8 %v3354
        %v3356 = vlaneseq
        %v3357 = vshrl.u32 %v3356, 7
        %v3358 = vsub.s32 %v3355, %v3357
        %v3359 = vrot.slane %v3351, %v3358
        %v3361 = vunpack.c.l.s4 1966171168
        %v3362 = vunpack.c.0.s8 %v3361
        %v3363 = vlaneseq
        %v3364 = vshrl.u32 %v3363, 7
        %v3365 = vsub.s32 %v3362, %v3364
        %v3366 = vrot.slane %v3352, %v3365
        %v3367 = vcombine.low %v3359, %v3366
        %v3369 = vunpack.c.l.s4 1966171168
        %v3370 = vunpack.c.0.s8 %v3369
        %v3371 = vlaneseq
        %v3372 = vshrl.u32 %v3371, 7
        %v3373 = vsub.s32 %v3370, %v3372
        %v3374 = vrot.slane %v3367, %v3373
        %v3375 = vcombine.low %v2947, %v2948
        %v3376 = vcombine.low %v2949, %v2950
        %v3378 = vunpack.c.l.s4 1966171168
        %v3379 = vunpack.c.0.s8 %v3378
        %v3380 = vlaneseq
        %v3381 = vshrl.u32 %v3380, 7
        %v3382 = vsub.s32 %v3379, %v3381
        %v3383 = vrot.slane %v3375, %v3382
        %v3385 = vunpack.c.l.s4 1966171168
        %v3386 = vunpack.c.0.s8 %v3385
        %v3387 = vlaneseq
        %v3388 = vshrl.u32 %v3387, 7
        %v3389 = vsub.s32 %v3386, %v3388
        %v3390 = vrot.slane %v3376, %v3389
        %v3391 = vcombine.low %v3383, %v3390
        %v3393 = vunpack.c.l.s4 1966171168
        %v3394 = vunpack.c.0.s8 %v3393
        %v3395 = vlaneseq
        %v3396 = vshrl.u32 %v3395, 7
        %v3397 = vsub.s32 %v3394, %v3396
        %v3398 = vrot.slane %v3391, %v3397
        %v3415 = vsub.f32 %v789, %v3038
        %v3416 = vsub.f32 %v789, %v3062
        %v3417 = vsub.f32 %v789, %v3086
        %v3418 = vsub.f32 %v789, %v3110
        %v3419 = vsub.f32 %v789, %v3134
        %v3420 = vsub.f32 %v789, %v3158
        %v3421 = vsub.f32 %v789, %v3182
        %v3422 = vsub.f32 %v789, %v3206
        %v3423 = vsub.f32 %v789, %v3230
        %v3424 = vsub.f32 %v789, %v3254
        %v3425 = vsub.f32 %v789, %v3278
        %v3426 = vsub.f32 %v789, %v3302
        %v3427 = vsub.f32 %v789, %v3326
        %v3428 = vsub.f32 %v789, %v3350
        %v3429 = vsub.f32 %v789, %v3374
        %v3430 = vsub.f32 %v789, %v3398
        %v3431 = vmul.f32 %v597, %v2570
        %v3432 = vmul.f32 %v599, %v2574
        %v3433 = vmul.f32 %v710, %v2578
        %v3434 = vmul.f32 %v712, %v2582
        %v3435 = vmul.f32 %v601, %v2586
        %v3436 = vmul.f32 %v603, %v2590
        %v3437 = vmul.f32 %v714, %v2594
        %v3438 = vmul.f32 %v716, %v2598
        %v3439 = vmul.f32 %v607, %v2602
        %v3440 = vmul.f32 %v609, %v2606
        %v3441 = vmul.f32 %v720, %v2610
        %v3442 = vmul.f32 %v722, %v2614
        %v3443 = vmul.f32 %v611, %v2618
        %v3444 = vmul.f32 %v613, %v2622
        %v3445 = vmul.f32 %v724, %v2626
        %v3446 = vmul.f32 %v726, %v2630
        %v3447 = vmul.f32 %v617, %v2634
        %v3448 = vmul.f32 %v619, %v2638
        %v3449 = vmul.f32 %v730, %v2642
        %v3450 = vmul.f32 %v732, %v2646
        %v3451 = vmul.f32 %v621, %v2650
        %v3452 = vmul.f32 %v623, %v2654
        %v3453 = vmul.f32 %v734, %v2658
        %v3454 = vmul.f32 %v736, %v2662
        %v3455 = vmul.f32 %v627, %v2666
        %v3456 = vmul.f32 %v629, %v2670
        %v3457 = vmul.f32 %v740, %v2674
        %v3458 = vmul.f32 %v742, %v2678
        %v3459 = vmul.f32 %v631, %v2682
        %v3460 = vmul.f32 %v633, %v2686
        %v3461 = vmul.f32 %v744, %v2690
        %v3462 = vmul.f32 %v746, %v2694
        %v3463 = vmul.f32 %v637, %v2698
        %v3464 = vmul.f32 %v639, %v2702
        %v3465 = vmul.f32 %v750, %v2706
        %v3466 = vmul.f32 %v752, %v2710
        %v3467 = vmul.f32 %v641, %v2714
        %v3468 = vmul.f32 %v643, %v2718
        %v3469 = vmul.f32 %v754, %v2722
        %v3470 = vmul.f32 %v756, %v2726
        %v3471 = vmul.f32 %v647, %v2730
        %v3472 = vmul.f32 %v649, %v2734
        %v3473 = vmul.f32 %v760, %v2738
        %v3474 = vmul.f32 %v762, %v2742
        %v3475 = vmul.f32 %v651, %v2746
        %v3476 = vmul.f32 %v653, %v2750
        %v3477 = vmul.f32 %v764, %v2754
        %v3478 = vmul.f32 %v766, %v2758
        %v3479 = vmul.f32 %v657, %v2762
        %v3480 = vmul.f32 %v659, %v2766
        %v3481 = vmul.f32 %v770, %v2770
        %v3482 = vmul.f32 %v772, %v2774
        %v3483 = vmul.f32 %v661, %v2778
        %v3484 = vmul.f32 %v663, %v2782
        %v3485 = vmul.f32 %v774, %v2786
        %v3486 = vmul.f32 %v776, %v2790
        %v3487 = vmul.f32 %v667, %v2794
        %v3488 = vmul.f32 %v669, %v2798
        %v3489 = vmul.f32 %v780, %v2802
        %v3490 = vmul.f32 %v782, %v2806
        %v3491 = vmul.f32 %v671, %v2810
        %v3492 = vmul.f32 %v673, %v2814
        %v3493 = vmul.f32 %v784, %v2818
        %v3494 = vmul.f32 %v786, %v2822
        %v3511 = vlaneseq
        %v3512 = vshrl.u32 %v3511, 7
        %v3513 = vsub.s32 0, %v3512
        %v3514 = vrot.slane %v3415, %v3513
        %v3515 = vlaneseq
        %v3516 = vshrl.u32 %v3515, 7
        %v3517 = vsub.s32 1, %v3516
        %v3518 = vrot.slane %v3415, %v3517
        %v3519 = vlaneseq
        %v3520 = vshrl.u32 %v3519, 7
        %v3521 = vsub.s32 2, %v3520
        %v3522 = vrot.slane %v3415, %v3521
        %v3523 = vlaneseq
        %v3524 = vshrl.u32 %v3523, 7
        %v3525 = vsub.s32 3, %v3524
        %v3526 = vrot.slane %v3415, %v3525
        %v3527 = vlaneseq
        %v3528 = vshrl.u32 %v3527, 7
        %v3529 = vsub.s32 0, %v3528
        %v3530 = vrot.slane %v3416, %v3529
        %v3531 = vlaneseq
        %v3532 = vshrl.u32 %v3531, 7
        %v3533 = vsub.s32 1, %v3532
        %v3534 = vrot.slane %v3416, %v3533
        %v3535 = vlaneseq
        %v3536 = vshrl.u32 %v3535, 7
        %v3537 = vsub.s32 2, %v3536
        %v3538 = vrot.slane %v3416, %v3537
        %v3539 = vlaneseq
        %v3540 = vshrl.u32 %v3539, 7
        %v3541 = vsub.s32 3, %v3540
        %v3542 = vrot.slane %v3416, %v3541
        %v3543 = vlaneseq
        %v3544 = vshrl.u32 %v3543, 7
        %v3545 = vsub.s32 0, %v3544
        %v3546 = vrot.slane %v3417, %v3545
        %v3547 = vlaneseq
        %v3548 = vshrl.u32 %v3547, 7
        %v3549 = vsub.s32 1, %v3548
        %v3550 = vrot.slane %v3417, %v3549
        %v3551 = vlaneseq
        %v3552 = vshrl.u32 %v3551, 7
        %v3553 = vsub.s32 2, %v3552
        %v3554 = vrot.slane %v3417, %v3553
        %v3555 = vlaneseq
        %v3556 = vshrl.u32 %v3555, 7
        %v3557 = vsub.s32 3, %v3556
        %v3558 = vrot.slane %v3417, %v3557
        %v3559 = vlaneseq
        %v3560 = vshrl.u32 %v3559, 7
        %v3561 = vsub.s32 0, %v3560
        %v3562 = vrot.slane %v3418, %v3561
        %v3563 = vlaneseq
        %v3564 = vshrl.u32 %v3563, 7
        %v3565 = vsub.s32 1, %v3564
        %v3566 = vrot.slane %v3418, %v3565
        %v3567 = vlaneseq
        %v3568 = vshrl.u32 %v3567, 7
        %v3569 = vsub.s32 2, %v3568
        %v3570 = vrot.slane %v3418, %v3569
        %v3571 = vlaneseq
        %v3572 = vshrl.u32 %v3571, 7
        %v3573 = vsub.s32 3, %v3572
        %v3574 = vrot.slane %v3418, %v3573
        %v3575 = vlaneseq
        %v3576 = vshrl.u32 %v3575, 7
        %v3577 = vsub.s32 0, %v3576
        %v3578 = vrot.slane %v3419, %v3577
        %v3579 = vlaneseq
        %v3580 = vshrl.u32 %v3579, 7
        %v3581 = vsub.s32 1, %v3580
        %v3582 = vrot.slane %v3419, %v3581
        %v3583 = vlaneseq
        %v3584 = vshrl.u32 %v3583, 7
        %v3585 = vsub.s32 2, %v3584
        %v3586 = vrot.slane %v3419, %v3585
        %v3587 = vlaneseq
        %v3588 = vshrl.u32 %v3587, 7
        %v3589 = vsub.s32 3, %v3588
        %v3590 = vrot.slane %v3419, %v3589
        %v3591 = vlaneseq
        %v3592 = vshrl.u32 %v3591, 7
        %v3593 = vsub.s32 0, %v3592
        %v3594 = vrot.slane %v3420, %v3593
        %v3595 = vlaneseq
        %v3596 = vshrl.u32 %v3595, 7
        %v3597 = vsub.s32 1, %v3596
        %v3598 = vrot.slane %v3420, %v3597
        %v3599 = vlaneseq
        %v3600 = vshrl.u32 %v3599, 7
        %v3601 = vsub.s32 2, %v3600
        %v3602 = vrot.slane %v3420, %v3601
        %v3603 = vlaneseq
        %v3604 = vshrl.u32 %v3603, 7
        %v3605 = vsub.s32 3, %v3604
        %v3606 = vrot.slane %v3420, %v3605
        %v3607 = vlaneseq
        %v3608 = vshrl.u32 %v3607, 7
        %v3609 = vsub.s32 0, %v3608
        %v3610 = vrot.slane %v3421, %v3609
        %v3611 = vlaneseq
        %v3612 = vshrl.u32 %v3611, 7
        %v3613 = vsub.s32 1, %v3612
        %v3614 = vrot.slane %v3421, %v3613
        %v3615 = vlaneseq
        %v3616 = vshrl.u32 %v3615, 7
        %v3617 = vsub.s32 2, %v3616
        %v3618 = vrot.slane %v3421, %v3617
        %v3619 = vlaneseq
        %v3620 = vshrl.u32 %v3619, 7
        %v3621 = vsub.s32 3, %v3620
        %v3622 = vrot.slane %v3421, %v3621
        %v3623 = vlaneseq
        %v3624 = vshrl.u32 %v3623, 7
        %v3625 = vsub.s32 0, %v3624
        %v3626 = vrot.slane %v3422, %v3625
        %v3627 = vlaneseq
        %v3628 = vshrl.u32 %v3627, 7
        %v3629 = vsub.s32 1, %v3628
        %v3630 = vrot.slane %v3422, %v3629
        %v3631 = vlaneseq
        %v3632 = vshrl.u32 %v3631, 7
        %v3633 = vsub.s32 2, %v3632
        %v3634 = vrot.slane %v3422, %v3633
        %v3635 = vlaneseq
        %v3636 = vshrl.u32 %v3635, 7
        %v3637 = vsub.s32 3, %v3636
        %v3638 = vrot.slane %v3422, %v3637
        %v3639 = vlaneseq
        %v3640 = vshrl.u32 %v3639, 7
        %v3641 = vsub.s32 0, %v3640
        %v3642 = vrot.slane %v3423, %v3641
        %v3643 = vlaneseq
        %v3644 = vshrl.u32 %v3643, 7
        %v3645 = vsub.s32 1, %v3644
        %v3646 = vrot.slane %v3423, %v3645
        %v3647 = vlaneseq
        %v3648 = vshrl.u32 %v3647, 7
        %v3649 = vsub.s32 2, %v3648
        %v3650 = vrot.slane %v3423, %v3649
        %v3651 = vlaneseq
        %v3652 = vshrl.u32 %v3651, 7
        %v3653 = vsub.s32 3, %v3652
        %v3654 = vrot.slane %v3423, %v3653
        %v3655 = vlaneseq
        %v3656 = vshrl.u32 %v3655, 7
        %v3657 = vsub.s32 0, %v3656
        %v3658 = vrot.slane %v3424, %v3657
        %v3659 = vlaneseq
        %v3660 = vshrl.u32 %v3659, 7
        %v3661 = vsub.s32 1, %v3660
        %v3662 = vrot.slane %v3424, %v3661
        %v3663 = vlaneseq
        %v3664 = vshrl.u32 %v3663, 7
        %v3665 = vsub.s32 2, %v3664
        %v3666 = vrot.slane %v3424, %v3665
        %v3667 = vlaneseq
        %v3668 = vshrl.u32 %v3667, 7
        %v3669 = vsub.s32 3, %v3668
        %v3670 = vrot.slane %v3424, %v3669
        %v3671 = vlaneseq
        %v3672 = vshrl.u32 %v3671, 7
        %v3673 = vsub.s32 0, %v3672
        %v3674 = vrot.slane %v3425, %v3673
        %v3675 = vlaneseq
        %v3676 = vshrl.u32 %v3675, 7
        %v3677 = vsub.s32 1, %v3676
        %v3678 = vrot.slane %v3425, %v3677
        %v3679 = vlaneseq
        %v3680 = vshrl.u32 %v3679, 7
        %v3681 = vsub.s32 2, %v3680
        %v3682 = vrot.slane %v3425, %v3681
        %v3683 = vlaneseq
        %v3684 = vshrl.u32 %v3683, 7
        %v3685 = vsub.s32 3, %v3684
        %v3686 = vrot.slane %v3425, %v3685
        %v3687 = vlaneseq
        %v3688 = vshrl.u32 %v3687, 7
        %v3689 = vsub.s32 0, %v3688
        %v3690 = vrot.slane %v3426, %v3689
        %v3691 = vlaneseq
        %v3692 = vshrl.u32 %v3691, 7
        %v3693 = vsub.s32 1, %v3692
        %v3694 = vrot.slane %v3426, %v3693
        %v3695 = vlaneseq
        %v3696 = vshrl.u32 %v3695, 7
        %v3697 = vsub.s32 2, %v3696
        %v3698 = vrot.slane %v3426, %v3697
        %v3699 = vlaneseq
        %v3700 = vshrl.u32 %v3699, 7
        %v3701 = vsub.s32 3, %v3700
        %v3702 = vrot.slane %v3426, %v3701
        %v3703 = vlaneseq
        %v3704 = vshrl.u32 %v3703, 7
        %v3705 = vsub.s32 0, %v3704
        %v3706 = vrot.slane %v3427, %v3705
        %v3707 = vlaneseq
        %v3708 = vshrl.u32 %v3707, 7
        %v3709 = vsub.s32 1, %v3708
        %v3710 = vrot.slane %v3427, %v3709
        %v3711 = vlaneseq
        %v3712 = vshrl.u32 %v3711, 7
        %v3713 = vsub.s32 2, %v3712
        %v3714 = vrot.slane %v3427, %v3713
        %v3715 = vlaneseq
        %v3716 = vshrl.u32 %v3715, 7
        %v3717 = vsub.s32 3, %v3716
        %v3718 = vrot.slane %v3427, %v3717
        %v3719 = vlaneseq
        %v3720 = vshrl.u32 %v3719, 7
        %v3721 = vsub.s32 0, %v3720
        %v3722 = vrot.slane %v3428, %v3721
        %v3723 = vlaneseq
        %v3724 = vshrl.u32 %v3723, 7
        %v3725 = vsub.s32 1, %v3724
        %v3726 = vrot.slane %v3428, %v3725
        %v3727 = vlaneseq
        %v3728 = vshrl.u32 %v3727, 7
        %v3729 = vsub.s32 2, %v3728
        %v3730 = vrot.slane %v3428, %v3729
        %v3731 = vlaneseq
        %v3732 = vshrl.u32 %v3731, 7
        %v3733 = vsub.s32 3, %v3732
        %v3734 = vrot.slane %v3428, %v3733
        %v3735 = vlaneseq
        %v3736 = vshrl.u32 %v3735, 7
        %v3737 = vsub.s32 0, %v3736
        %v3738 = vrot.slane %v3429, %v3737
        %v3739 = vlaneseq
        %v3740 = vshrl.u32 %v3739, 7
        %v3741 = vsub.s32 1, %v3740
        %v3742 = vrot.slane %v3429, %v3741
        %v3743 = vlaneseq
        %v3744 = vshrl.u32 %v3743, 7
        %v3745 = vsub.s32 2, %v3744
        %v3746 = vrot.slane %v3429, %v3745
        %v3747 = vlaneseq
        %v3748 = vshrl.u32 %v3747, 7
        %v3749 = vsub.s32 3, %v3748
        %v3750 = vrot.slane %v3429, %v3749
        %v3751 = vlaneseq
        %v3752 = vshrl.u32 %v3751, 7
        %v3753 = vsub.s32 0, %v3752
        %v3754 = vrot.slane %v3430, %v3753
        %v3755 = vlaneseq
        %v3756 = vshrl.u32 %v3755, 7
        %v3757 = vsub.s32 1, %v3756
        %v3758 = vrot.slane %v3430, %v3757
        %v3759 = vlaneseq
        %v3760 = vshrl.u32 %v3759, 7
        %v3761 = vsub.s32 2, %v3760
        %v3762 = vrot.slane %v3430, %v3761
        %v3763 = vlaneseq
        %v3764 = vshrl.u32 %v3763, 7
        %v3765 = vsub.s32 3, %v3764
        %v3766 = vrot.slane %v3430, %v3765
        %v3831 = vadd.f32 %v3431, %v3514
        %v3832 = vadd.f32 %v3432, %v3518
        %v3833 = vadd.f32 %v3433, %v3522
        %v3834 = vadd.f32 %v3434, %v3526
        %v3835 = vadd.f32 %v3435, %v3530
        %v3836 = vadd.f32 %v3436, %v3534
        %v3837 = vadd.f32 %v3437, %v3538
        %v3838 = vadd.f32 %v3438, %v3542
        %v3839 = vadd.f32 %v3439, %v3546
        %v3840 = vadd.f32 %v3440, %v3550
        %v3841 = vadd.f32 %v3441, %v3554
        %v3842 = vadd.f32 %v3442, %v3558
        %v3843 = vadd.f32 %v3443, %v3562
        %v3844 = vadd.f32 %v3444, %v3566
        %v3845 = vadd.f32 %v3445, %v3570
        %v3846 = vadd.f32 %v3446, %v3574
        %v3847 = vadd.f32 %v3447, %v3578
        %v3848 = vadd.f32 %v3448, %v3582
        %v3849 = vadd.f32 %v3449, %v3586
        %v3850 = vadd.f32 %v3450, %v3590
        %v3851 = vadd.f32 %v3451, %v3594
        %v3852 = vadd.f32 %v3452, %v3598
        %v3853 = vadd.f32 %v3453, %v3602
        %v3854 = vadd.f32 %v3454, %v3606
        %v3855 = vadd.f32 %v3455, %v3610
        %v3856 = vadd.f32 %v3456, %v3614
        %v3857 = vadd.f32 %v3457, %v3618
        %v3858 = vadd.f32 %v3458, %v3622
        %v3859 = vadd.f32 %v3459, %v3626
        %v3860 = vadd.f32 %v3460, %v3630
        %v3861 = vadd.f32 %v3461, %v3634
        %v3862 = vadd.f32 %v3462, %v3638
        %v3863 = vadd.f32 %v3463, %v3642
        %v3864 = vadd.f32 %v3464, %v3646
        %v3865 = vadd.f32 %v3465, %v3650
        %v3866 = vadd.f32 %v3466, %v3654
        %v3867 = vadd.f32 %v3467, %v3658
        %v3868 = vadd.f32 %v3468, %v3662
        %v3869 = vadd.f32 %v3469, %v3666
        %v3870 = vadd.f32 %v3470, %v3670
        %v3871 = vadd.f32 %v3471, %v3674
        %v3872 = vadd.f32 %v3472, %v3678
        %v3873 = vadd.f32 %v3473, %v3682
        %v3874 = vadd.f32 %v3474, %v3686
        %v3875 = vadd.f32 %v3475, %v3690
        %v3876 = vadd.f32 %v3476, %v3694
        %v3877 = vadd.f32 %v3477, %v3698
        %v3878 = vadd.f32 %v3478, %v3702
        %v3879 = vadd.f32 %v3479, %v3706
        %v3880 = vadd.f32 %v3480, %v3710
        %v3881 = vadd.f32 %v3481, %v3714
        %v3882 = vadd.f32 %v3482, %v3718
        %v3883 = vadd.f32 %v3483, %v3722
        %v3884 = vadd.f32 %v3484, %v3726
        %v3885 = vadd.f32 %v3485, %v3730
        %v3886 = vadd.f32 %v3486, %v3734
        %v3887 = vadd.f32 %v3487, %v3738
        %v3888 = vadd.f32 %v3488, %v3742
        %v3889 = vadd.f32 %v3489, %v3746
        %v3890 = vadd.f32 %v3490, %v3750
        %v3891 = vadd.f32 %v3491, %v3754
        %v3892 = vadd.f32 %v3492, %v3758
        %v3893 = vadd.f32 %v3493, %v3762
        %v3894 = vadd.f32 %v3494, %v3766
        %vm3895 = vcmp.gt.f32.partialorder %v3831, 0.0
        %vm3896 = vcmp.gt.f32.partialorder %v3832, 0.0
        %vm3897 = vcmp.gt.f32.partialorder %v3833, 0.0
        %vm3898 = vcmp.gt.f32.partialorder %v3834, 0.0
        %vm3899 = vcmp.gt.f32.partialorder %v3835, 0.0
        %vm3900 = vcmp.gt.f32.partialorder %v3836, 0.0
        %vm3901 = vcmp.gt.f32.partialorder %v3837, 0.0
        %vm3902 = vcmp.gt.f32.partialorder %v3838, 0.0
        %vm3903 = vcmp.gt.f32.partialorder %v3839, 0.0
        %vm3904 = vcmp.gt.f32.partialorder %v3840, 0.0
        %vm3905 = vcmp.gt.f32.partialorder %v3841, 0.0
        %vm3906 = vcmp.gt.f32.partialorder %v3842, 0.0
        %vm3907 = vcmp.gt.f32.partialorder %v3843, 0.0
        %vm3908 = vcmp.gt.f32.partialorder %v3844, 0.0
        %vm3909 = vcmp.gt.f32.partialorder %v3845, 0.0
        %vm3910 = vcmp.gt.f32.partialorder %v3846, 0.0
        %vm3911 = vcmp.gt.f32.partialorder %v3847, 0.0
        %vm3912 = vcmp.gt.f32.partialorder %v3848, 0.0
        %vm3913 = vcmp.gt.f32.partialorder %v3849, 0.0
        %vm3914 = vcmp.gt.f32.partialorder %v3850, 0.0
        %vm3915 = vcmp.gt.f32.partialorder %v3851, 0.0
        %vm3916 = vcmp.gt.f32.partialorder %v3852, 0.0
        %vm3917 = vcmp.gt.f32.partialorder %v3853, 0.0
        %vm3918 = vcmp.gt.f32.partialorder %v3854, 0.0
        %vm3919 = vcmp.gt.f32.partialorder %v3855, 0.0
        %vm3920 = vcmp.gt.f32.partialorder %v3856, 0.0
        %vm3921 = vcmp.gt.f32.partialorder %v3857, 0.0
        %vm3922 = vcmp.gt.f32.partialorder %v3858, 0.0
        %vm3923 = vcmp.gt.f32.partialorder %v3859, 0.0
        %vm3924 = vcmp.gt.f32.partialorder %v3860, 0.0
        %vm3925 = vcmp.gt.f32.partialorder %v3861, 0.0
        %vm3926 = vcmp.gt.f32.partialorder %v3862, 0.0
        %vm3927 = vcmp.gt.f32.partialorder %v3863, 0.0
        %vm3928 = vcmp.gt.f32.partialorder %v3864, 0.0
        %vm3929 = vcmp.gt.f32.partialorder %v3865, 0.0
        %vm3930 = vcmp.gt.f32.partialorder %v3866, 0.0
        %vm3931 = vcmp.gt.f32.partialorder %v3867, 0.0
        %vm3932 = vcmp.gt.f32.partialorder %v3868, 0.0
        %vm3933 = vcmp.gt.f32.partialorder %v3869, 0.0
        %vm3934 = vcmp.gt.f32.partialorder %v3870, 0.0
        %vm3935 = vcmp.gt.f32.partialorder %v3871, 0.0
        %vm3936 = vcmp.gt.f32.partialorder %v3872, 0.0
        %vm3937 = vcmp.gt.f32.partialorder %v3873, 0.0
        %vm3938 = vcmp.gt.f32.partialorder %v3874, 0.0
        %vm3939 = vcmp.gt.f32.partialorder %v3875, 0.0
        %vm3940 = vcmp.gt.f32.partialorder %v3876, 0.0
        %vm3941 = vcmp.gt.f32.partialorder %v3877, 0.0
        %vm3942 = vcmp.gt.f32.partialorder %v3878, 0.0
        %vm3943 = vcmp.gt.f32.partialorder %v3879, 0.0
        %vm3944 = vcmp.gt.f32.partialorder %v3880, 0.0
        %vm3945 = vcmp.gt.f32.partialorder %v3881, 0.0
        %vm3946 = vcmp.gt.f32.partialorder %v3882, 0.0
        %vm3947 = vcmp.gt.f32.partialorder %v3883, 0.0
        %vm3948 = vcmp.gt.f32.partialorder %v3884, 0.0
        %vm3949 = vcmp.gt.f32.partialorder %v3885, 0.0
        %vm3950 = vcmp.gt.f32.partialorder %v3886, 0.0
        %vm3951 = vcmp.gt.f32.partialorder %v3887, 0.0
        %vm3952 = vcmp.gt.f32.partialorder %v3888, 0.0
        %vm3953 = vcmp.gt.f32.partialorder %v3889, 0.0
        %vm3954 = vcmp.gt.f32.partialorder %v3890, 0.0
        %vm3955 = vcmp.gt.f32.partialorder %v3891, 0.0
        %vm3956 = vcmp.gt.f32.partialorder %v3892, 0.0
        %vm3957 = vcmp.gt.f32.partialorder %v3893, 0.0
        %vm3958 = vcmp.gt.f32.partialorder %v3894, 0.0
        %v3959 = vmin.f32 %v3831, 0.0
        %v3960 = vmin.f32 %v3832, 0.0
        %v3961 = vmin.f32 %v3833, 0.0
        %v3962 = vmin.f32 %v3834, 0.0
        %v3963 = vmin.f32 %v3835, 0.0
        %v3964 = vmin.f32 %v3836, 0.0
        %v3965 = vmin.f32 %v3837, 0.0
        %v3966 = vmin.f32 %v3838, 0.0
        %v3967 = vmin.f32 %v3839, 0.0
        %v3968 = vmin.f32 %v3840, 0.0
        %v3969 = vmin.f32 %v3841, 0.0
        %v3970 = vmin.f32 %v3842, 0.0
        %v3971 = vmin.f32 %v3843, 0.0
        %v3972 = vmin.f32 %v3844, 0.0
        %v3973 = vmin.f32 %v3845, 0.0
        %v3974 = vmin.f32 %v3846, 0.0
        %v3975 = vmin.f32 %v3847, 0.0
        %v3976 = vmin.f32 %v3848, 0.0
        %v3977 = vmin.f32 %v3849, 0.0
        %v3978 = vmin.f32 %v3850, 0.0
        %v3979 = vmin.f32 %v3851, 0.0
        %v3980 = vmin.f32 %v3852, 0.0
        %v3981 = vmin.f32 %v3853, 0.0
        %v3982 = vmin.f32 %v3854, 0.0
        %v3983 = vmin.f32 %v3855, 0.0
        %v3984 = vmin.f32 %v3856, 0.0
        %v3985 = vmin.f32 %v3857, 0.0
        %v3986 = vmin.f32 %v3858, 0.0
        %v3987 = vmin.f32 %v3859, 0.0
        %v3988 = vmin.f32 %v3860, 0.0
        %v3989 = vmin.f32 %v3861, 0.0
        %v3990 = vmin.f32 %v3862, 0.0
        %v3991 = vmin.f32 %v3863, 0.0
        %v3992 = vmin.f32 %v3864, 0.0
        %v3993 = vmin.f32 %v3865, 0.0
        %v3994 = vmin.f32 %v3866, 0.0
        %v3995 = vmin.f32 %v3867, 0.0
        %v3996 = vmin.f32 %v3868, 0.0
        %v3997 = vmin.f32 %v3869, 0.0
        %v3998 = vmin.f32 %v3870, 0.0
        %v3999 = vmin.f32 %v3871, 0.0
        %v4000 = vmin.f32 %v3872, 0.0
        %v4001 = vmin.f32 %v3873, 0.0
        %v4002 = vmin.f32 %v3874, 0.0
        %v4003 = vmin.f32 %v3875, 0.0
        %v4004 = vmin.f32 %v3876, 0.0
        %v4005 = vmin.f32 %v3877, 0.0
        %v4006 = vmin.f32 %v3878, 0.0
        %v4007 = vmin.f32 %v3879, 0.0
        %v4008 = vmin.f32 %v3880, 0.0
        %v4009 = vmin.f32 %v3881, 0.0
        %v4010 = vmin.f32 %v3882, 0.0
        %v4011 = vmin.f32 %v3883, 0.0
        %v4012 = vmin.f32 %v3884, 0.0
        %v4013 = vmin.f32 %v3885, 0.0
        %v4014 = vmin.f32 %v3886, 0.0
        %v4015 = vmin.f32 %v3887, 0.0
        %v4016 = vmin.f32 %v3888, 0.0
        %v4017 = vmin.f32 %v3889, 0.0
        %v4018 = vmin.f32 %v3890, 0.0
        %v4019 = vmin.f32 %v3891, 0.0
        %v4020 = vmin.f32 %v3892, 0.0
        %v4021 = vmin.f32 %v3893, 0.0
        %v4022 = vmin.f32 %v3894, 0.0
        %v4023 = vmul.f32 %v3959, 1.442695
        %v4024 = vpow.pop %v4023
        %v4025 = vmul.f32 %v3960, 1.442695
        %v4026 = vpow.pop %v4025
        %v4027 = vmul.f32 %v3961, 1.442695
        %v4028 = vpow.pop %v4027
        %v4029 = vmul.f32 %v3962, 1.442695
        %v4030 = vpow.pop %v4029
        %v4031 = vmul.f32 %v3963, 1.442695
        %v4032 = vpow.pop %v4031
        %v4033 = vmul.f32 %v3964, 1.442695
        %v4034 = vpow.pop %v4033
        %v4035 = vmul.f32 %v3965, 1.442695
        %v4036 = vpow.pop %v4035
        %v4037 = vmul.f32 %v3966, 1.442695
        %v4038 = vpow.pop %v4037
        %v4039 = vmul.f32 %v3967, 1.442695
        %v4040 = vpow.pop %v4039
        %v4041 = vmul.f32 %v3968, 1.442695
        %v4042 = vpow.pop %v4041
        %v4043 = vmul.f32 %v3969, 1.442695
        %v4044 = vpow.pop %v4043
        %v4045 = vmul.f32 %v3970, 1.442695
        %v4046 = vpow.pop %v4045
        %v4047 = vmul.f32 %v3971, 1.442695
        %v4048 = vpow.pop %v4047
        %v4049 = vmul.f32 %v3972, 1.442695
        %v4050 = vpow.pop %v4049
        %v4051 = vmul.f32 %v3973, 1.442695
        %v4052 = vpow.pop %v4051
        %v4053 = vmul.f32 %v3974, 1.442695
        %v4054 = vpow.pop %v4053
        %v4055 = vmul.f32 %v3975, 1.442695
        %v4056 = vpow.pop %v4055
        %v4057 = vmul.f32 %v3976, 1.442695
        %v4058 = vpow.pop %v4057
        %v4059 = vmul.f32 %v3977, 1.442695
        %v4060 = vpow.pop %v4059
        %v4061 = vmul.f32 %v3978, 1.442695
        %v4062 = vpow.pop %v4061
        %v4063 = vmul.f32 %v3979, 1.442695
        %v4064 = vpow.pop %v4063
        %v4065 = vmul.f32 %v3980, 1.442695
        %v4066 = vpow.pop %v4065
        %v4067 = vmul.f32 %v3981, 1.442695
        %v4068 = vpow.pop %v4067
        %v4069 = vmul.f32 %v3982, 1.442695
        %v4070 = vpow.pop %v4069
        %v4071 = vmul.f32 %v3983, 1.442695
        %v4072 = vpow.pop %v4071
        %v4073 = vmul.f32 %v3984, 1.442695
        %v4074 = vpow.pop %v4073
        %v4075 = vmul.f32 %v3985, 1.442695
        %v4076 = vpow.pop %v4075
        %v4077 = vmul.f32 %v3986, 1.442695
        %v4078 = vpow.pop %v4077
        %v4079 = vmul.f32 %v3987, 1.442695
        %v4080 = vpow.pop %v4079
        %v4081 = vmul.f32 %v3988, 1.442695
        %v4082 = vpow.pop %v4081
        %v4083 = vmul.f32 %v3989, 1.442695
        %v4084 = vpow.pop %v4083
        %v4085 = vmul.f32 %v3990, 1.442695
        %v4086 = vpow.pop %v4085
        %v4087 = vmul.f32 %v3991, 1.442695
        %v4088 = vpow.pop %v4087
        %v4089 = vmul.f32 %v3992, 1.442695
        %v4090 = vpow.pop %v4089
        %v4091 = vmul.f32 %v3993, 1.442695
        %v4092 = vpow.pop %v4091
        %v4093 = vmul.f32 %v3994, 1.442695
        %v4094 = vpow.pop %v4093
        %v4095 = vmul.f32 %v3995, 1.442695
        %v4096 = vpow.pop %v4095
        %v4097 = vmul.f32 %v3996, 1.442695
        %v4098 = vpow.pop %v4097
        %v4099 = vmul.f32 %v3997, 1.442695
        %v4100 = vpow.pop %v4099
        %v4101 = vmul.f32 %v3998, 1.442695
        %v4102 = vpow.pop %v4101
        %v4103 = vmul.f32 %v3999, 1.442695
        %v4104 = vpow.pop %v4103
        %v4105 = vmul.f32 %v4000, 1.442695
        %v4106 = vpow.pop %v4105
        %v4107 = vmul.f32 %v4001, 1.442695
        %v4108 = vpow.pop %v4107
        %v4109 = vmul.f32 %v4002, 1.442695
        %v4110 = vpow.pop %v4109
        %v4111 = vmul.f32 %v4003, 1.442695
        %v4112 = vpow.pop %v4111
        %v4113 = vmul.f32 %v4004, 1.442695
        %v4114 = vpow.pop %v4113
        %v4115 = vmul.f32 %v4005, 1.442695
        %v4116 = vpow.pop %v4115
        %v4117 = vmul.f32 %v4006, 1.442695
        %v4118 = vpow.pop %v4117
        %v4119 = vmul.f32 %v4007, 1.442695
        %v4120 = vpow.pop %v4119
        %v4121 = vmul.f32 %v4008, 1.442695
        %v4122 = vpow.pop %v4121
        %v4123 = vmul.f32 %v4009, 1.442695
        %v4124 = vpow.pop %v4123
        %v4125 = vmul.f32 %v4010, 1.442695
        %v4126 = vpow.pop %v4125
        %v4127 = vmul.f32 %v4011, 1.442695
        %v4128 = vpow.pop %v4127
        %v4129 = vmul.f32 %v4012, 1.442695
        %v4130 = vpow.pop %v4129
        %v4131 = vmul.f32 %v4013, 1.442695
        %v4132 = vpow.pop %v4131
        %v4133 = vmul.f32 %v4014, 1.442695
        %v4134 = vpow.pop %v4133
        %v4135 = vmul.f32 %v4015, 1.442695
        %v4136 = vpow.pop %v4135
        %v4137 = vmul.f32 %v4016, 1.442695
        %v4138 = vpow.pop %v4137
        %v4139 = vmul.f32 %v4017, 1.442695
        %v4140 = vpow.pop %v4139
        %v4141 = vmul.f32 %v4018, 1.442695
        %v4142 = vpow.pop %v4141
        %v4143 = vmul.f32 %v4019, 1.442695
        %v4144 = vpow.pop %v4143
        %v4145 = vmul.f32 %v4020, 1.442695
        %v4146 = vpow.pop %v4145
        %v4147 = vmul.f32 %v4021, 1.442695
        %v4148 = vpow.pop %v4147
        %v4149 = vmul.f32 %v4022, 1.442695
        %v4150 = vpow.pop %v4149
        %v4151 = vsub.f32 %v4024, 1.0
        %v4152 = vsub.f32 %v4026, 1.0
        %v4153 = vsub.f32 %v4028, 1.0
        %v4154 = vsub.f32 %v4030, 1.0
        %v4155 = vsub.f32 %v4032, 1.0
        %v4156 = vsub.f32 %v4034, 1.0
        %v4157 = vsub.f32 %v4036, 1.0
        %v4158 = vsub.f32 %v4038, 1.0
        %v4159 = vsub.f32 %v4040, 1.0
        %v4160 = vsub.f32 %v4042, 1.0
        %v4161 = vsub.f32 %v4044, 1.0
        %v4162 = vsub.f32 %v4046, 1.0
        %v4163 = vsub.f32 %v4048, 1.0
        %v4164 = vsub.f32 %v4050, 1.0
        %v4165 = vsub.f32 %v4052, 1.0
        %v4166 = vsub.f32 %v4054, 1.0
        %v4167 = vsub.f32 %v4056, 1.0
        %v4168 = vsub.f32 %v4058, 1.0
        %v4169 = vsub.f32 %v4060, 1.0
        %v4170 = vsub.f32 %v4062, 1.0
        %v4171 = vsub.f32 %v4064, 1.0
        %v4172 = vsub.f32 %v4066, 1.0
        %v4173 = vsub.f32 %v4068, 1.0
        %v4174 = vsub.f32 %v4070, 1.0
        %v4175 = vsub.f32 %v4072, 1.0
        %v4176 = vsub.f32 %v4074, 1.0
        %v4177 = vsub.f32 %v4076, 1.0
        %v4178 = vsub.f32 %v4078, 1.0
        %v4179 = vsub.f32 %v4080, 1.0
        %v4180 = vsub.f32 %v4082, 1.0
        %v4181 = vsub.f32 %v4084, 1.0
        %v4182 = vsub.f32 %v4086, 1.0
        %v4183 = vsub.f32 %v4088, 1.0
        %v4184 = vsub.f32 %v4090, 1.0
        %v4185 = vsub.f32 %v4092, 1.0
        %v4186 = vsub.f32 %v4094, 1.0
        %v4187 = vsub.f32 %v4096, 1.0
        %v4188 = vsub.f32 %v4098, 1.0
        %v4189 = vsub.f32 %v4100, 1.0
        %v4190 = vsub.f32 %v4102, 1.0
        %v4191 = vsub.f32 %v4104, 1.0
        %v4192 = vsub.f32 %v4106, 1.0
        %v4193 = vsub.f32 %v4108, 1.0
        %v4194 = vsub.f32 %v4110, 1.0
        %v4195 = vsub.f32 %v4112, 1.0
        %v4196 = vsub.f32 %v4114, 1.0
        %v4197 = vsub.f32 %v4116, 1.0
        %v4198 = vsub.f32 %v4118, 1.0
        %v4199 = vsub.f32 %v4120, 1.0
        %v4200 = vsub.f32 %v4122, 1.0
        %v4201 = vsub.f32 %v4124, 1.0
        %v4202 = vsub.f32 %v4126, 1.0
        %v4203 = vsub.f32 %v4128, 1.0
        %v4204 = vsub.f32 %v4130, 1.0
        %v4205 = vsub.f32 %v4132, 1.0
        %v4206 = vsub.f32 %v4134, 1.0
        %v4207 = vsub.f32 %v4136, 1.0
        %v4208 = vsub.f32 %v4138, 1.0
        %v4209 = vsub.f32 %v4140, 1.0
        %v4210 = vsub.f32 %v4142, 1.0
        %v4211 = vsub.f32 %v4144, 1.0
        %v4212 = vsub.f32 %v4146, 1.0
        %v4213 = vsub.f32 %v4148, 1.0
        %v4214 = vsub.f32 %v4150, 1.0
        %v4215 = vsel %vm3895, %v3831, %v4151
        %v4216 = vsel %vm3896, %v3832, %v4152
        %v4217 = vsel %vm3897, %v3833, %v4153
        %v4218 = vsel %vm3898, %v3834, %v4154
        %v4219 = vsel %vm3899, %v3835, %v4155
        %v4220 = vsel %vm3900, %v3836, %v4156
        %v4221 = vsel %vm3901, %v3837, %v4157
        %v4222 = vsel %vm3902, %v3838, %v4158
        %v4223 = vsel %vm3903, %v3839, %v4159
        %v4224 = vsel %vm3904, %v3840, %v4160
        %v4225 = vsel %vm3905, %v3841, %v4161
        %v4226 = vsel %vm3906, %v3842, %v4162
        %v4227 = vsel %vm3907, %v3843, %v4163
        %v4228 = vsel %vm3908, %v3844, %v4164
        %v4229 = vsel %vm3909, %v3845, %v4165
        %v4230 = vsel %vm3910, %v3846, %v4166
        %v4231 = vsel %vm3911, %v3847, %v4167
        %v4232 = vsel %vm3912, %v3848, %v4168
        %v4233 = vsel %vm3913, %v3849, %v4169
        %v4234 = vsel %vm3914, %v3850, %v4170
        %v4235 = vsel %vm3915, %v3851, %v4171
        %v4236 = vsel %vm3916, %v3852, %v4172
        %v4237 = vsel %vm3917, %v3853, %v4173
        %v4238 = vsel %vm3918, %v3854, %v4174
        %v4239 = vsel %vm3919, %v3855, %v4175
        %v4240 = vsel %vm3920, %v3856, %v4176
        %v4241 = vsel %vm3921, %v3857, %v4177
        %v4242 = vsel %vm3922, %v3858, %v4178
        %v4243 = vsel %vm3923, %v3859, %v4179
        %v4244 = vsel %vm3924, %v3860, %v4180
        %v4245 = vsel %vm3925, %v3861, %v4181
        %v4246 = vsel %vm3926, %v3862, %v4182
        %v4247 = vsel %vm3927, %v3863, %v4183
        %v4248 = vsel %vm3928, %v3864, %v4184
        %v4249 = vsel %vm3929, %v3865, %v4185
        %v4250 = vsel %vm3930, %v3866, %v4186
        %v4251 = vsel %vm3931, %v3867, %v4187
        %v4252 = vsel %vm3932, %v3868, %v4188
        %v4253 = vsel %vm3933, %v3869, %v4189
        %v4254 = vsel %vm3934, %v3870, %v4190
        %v4255 = vsel %vm3935, %v3871, %v4191
        %v4256 = vsel %vm3936, %v3872, %v4192
        %v4257 = vsel %vm3937, %v3873, %v4193
        %v4258 = vsel %vm3938, %v3874, %v4194
        %v4259 = vsel %vm3939, %v3875, %v4195
        %v4260 = vsel %vm3940, %v3876, %v4196
        %v4261 = vsel %vm3941, %v3877, %v4197
        %v4262 = vsel %vm3942, %v3878, %v4198
        %v4263 = vsel %vm3943, %v3879, %v4199
        %v4264 = vsel %vm3944, %v3880, %v4200
        %v4265 = vsel %vm3945, %v3881, %v4201
        %v4266 = vsel %vm3946, %v3882, %v4202
        %v4267 = vsel %vm3947, %v3883, %v4203
        %v4268 = vsel %vm3948, %v3884, %v4204
        %v4269 = vsel %vm3949, %v3885, %v4205
        %v4270 = vsel %vm3950, %v3886, %v4206
        %v4271 = vsel %vm3951, %v3887, %v4207
        %v4272 = vsel %vm3952, %v3888, %v4208
        %v4273 = vsel %vm3953, %v3889, %v4209
        %v4274 = vsel %vm3954, %v3890, %v4210
        %v4275 = vsel %vm3955, %v3891, %v4211
        %v4276 = vsel %vm3956, %v3892, %v4212
        %v4277 = vsel %vm3957, %v3893, %v4213
        %v4278 = vsel %vm3958, %v3894, %v4214
        %v4279 = vpack.c.bf16 %v4219, %v4215
        %v4280 = vpack.c.bf16 %v4220, %v4216
        %v4281 = vpack.c.bf16 %v4221, %v4217
        %v4282 = vpack.c.bf16 %v4222, %v4218
        %v4283 = vpack.c.bf16 %v4227, %v4223
        %v4284 = vpack.c.bf16 %v4228, %v4224
        %v4285 = vpack.c.bf16 %v4229, %v4225
        %v4286 = vpack.c.bf16 %v4230, %v4226
        %v4287 = vpack.c.bf16 %v4235, %v4231
        %v4288 = vpack.c.bf16 %v4236, %v4232
        %v4289 = vpack.c.bf16 %v4237, %v4233
        %v4290 = vpack.c.bf16 %v4238, %v4234
        %v4291 = vpack.c.bf16 %v4243, %v4239
        %v4292 = vpack.c.bf16 %v4244, %v4240
        %v4293 = vpack.c.bf16 %v4245, %v4241
        %v4294 = vpack.c.bf16 %v4246, %v4242
        %v4295 = vpack.c.bf16 %v4251, %v4247
        %v4296 = vpack.c.bf16 %v4252, %v4248
        %v4297 = vpack.c.bf16 %v4253, %v4249
        %v4298 = vpack.c.bf16 %v4254, %v4250
        %v4299 = vpack.c.bf16 %v4259, %v4255
        %v4300 = vpack.c.bf16 %v4260, %v4256
        %v4301 = vpack.c.bf16 %v4261, %v4257
        %v4302 = vpack.c.bf16 %v4262, %v4258
        %v4303 = vpack.c.bf16 %v4267, %v4263
        %v4304 = vpack.c.bf16 %v4268, %v4264
        %v4305 = vpack.c.bf16 %v4269, %v4265
        %v4306 = vpack.c.bf16 %v4270, %v4266
        %v4307 = vpack.c.bf16 %v4275, %v4271
        %v4308 = vpack.c.bf16 %v4276, %v4272
        %v4309 = vpack.c.bf16 %v4277, %v4273
        %v4310 = vpack.c.bf16 %v4278, %v4274
        %v4311 = vld [vmem:[#allocation8] sm:$0xff]
        %v4312 = vld [vmem:[#allocation8 + $0x8] sm:$0xff]
        %v4313 = vld [vmem:[#allocation8 + $0x10] sm:$0xff]
        %v4314 = vld [vmem:[#allocation8 + $0x18] sm:$0xff]
        %v4315 = vld [vmem:[#allocation8 + $0x20] sm:$0xff]
        %v4316 = vld [vmem:[#allocation8 + $0x28] sm:$0xff]
        %v4317 = vld [vmem:[#allocation8 + $0x30] sm:$0xff]
        %v4318 = vld [vmem:[#allocation8 + $0x38] sm:$0xff]
        %v4319 = vld [vmem:[#allocation8 + $0x40] sm:$0xff]
        %v4320 = vld [vmem:[#allocation8 + $0x48] sm:$0xff]
        %v4321 = vld [vmem:[#allocation8 + $0x50] sm:$0xff]
        %v4322 = vld [vmem:[#allocation8 + $0x58] sm:$0xff]
        %v4323 = vld [vmem:[#allocation8 + $0x60] sm:$0xff]
        %v4324 = vld [vmem:[#allocation8 + $0x68] sm:$0xff]
        %v4325 = vld [vmem:[#allocation8 + $0x70] sm:$0xff]
        %v4326 = vld [vmem:[#allocation8 + $0x78] sm:$0xff]
        %v4327 = vld [vmem:[#allocation8 + $0x80] sm:$0xff]
        %v4328 = vld [vmem:[#allocation8 + $0x88] sm:$0xff]
        %v4329 = vld [vmem:[#allocation8 + $0x90] sm:$0xff]
        %v4330 = vld [vmem:[#allocation8 + $0x98] sm:$0xff]
        %v4331 = vld [vmem:[#allocation8 + $0xa0] sm:$0xff]
        %v4332 = vld [vmem:[#allocation8 + $0xa8] sm:$0xff]
        %v4333 = vld [vmem:[#allocation8 + $0xb0] sm:$0xff]
        %v4334 = vld [vmem:[#allocation8 + $0xb8] sm:$0xff]
        %v4335 = vld [vmem:[#allocation8 + $0xc0] sm:$0xff]
        %v4336 = vld [vmem:[#allocation8 + $0xc8] sm:$0xff]
        %v4337 = vld [vmem:[#allocation8 + $0xd0] sm:$0xff]
        %v4338 = vld [vmem:[#allocation8 + $0xd8] sm:$0xff]
        %v4339 = vld [vmem:[#allocation8 + $0xe0] sm:$0xff]
        %v4340 = vld [vmem:[#allocation8 + $0xe8] sm:$0xff]
        %v4341 = vld [vmem:[#allocation8 + $0xf0] sm:$0xff]
        %v4342 = vld [vmem:[#allocation8 + $0xf8] sm:$0xff]
        %v4343 = vld [vmem:[#allocation8 + $0x100] sm:$0xff]
        %v4344 = vld [vmem:[#allocation8 + $0x108] sm:$0xff]
        %v4345 = vld [vmem:[#allocation8 + $0x110] sm:$0xff]
        %v4346 = vld [vmem:[#allocation8 + $0x118] sm:$0xff]
        %v4347 = vld [vmem:[#allocation8 + $0x120] sm:$0xff]
        %v4348 = vld [vmem:[#allocation8 + $0x128] sm:$0xff]
        %v4349 = vld [vmem:[#allocation8 + $0x130] sm:$0xff]
        %v4350 = vld [vmem:[#allocation8 + $0x138] sm:$0xff]
        %v4351 = vld [vmem:[#allocation8 + $0x140] sm:$0xff]
        %v4352 = vld [vmem:[#allocation8 + $0x148] sm:$0xff]
        %v4353 = vld [vmem:[#allocation8 + $0x150] sm:$0xff]
        %v4354 = vld [vmem:[#allocation8 + $0x158] sm:$0xff]
        %v4355 = vld [vmem:[#allocation8 + $0x160] sm:$0xff]
        %v4356 = vld [vmem:[#allocation8 + $0x168] sm:$0xff]
        %v4357 = vld [vmem:[#allocation8 + $0x170] sm:$0xff]
        %v4358 = vld [vmem:[#allocation8 + $0x178] sm:$0xff]
        %v4359 = vld [vmem:[#allocation8 + $0x180] sm:$0xff]
        %v4360 = vld [vmem:[#allocation8 + $0x188] sm:$0xff]
        %v4361 = vld [vmem:[#allocation8 + $0x190] sm:$0xff]
        %v4362 = vld [vmem:[#allocation8 + $0x198] sm:$0xff]
        %v4363 = vld [vmem:[#allocation8 + $0x1a0] sm:$0xff]
        %v4364 = vld [vmem:[#allocation8 + $0x1a8] sm:$0xff]
        %v4365 = vld [vmem:[#allocation8 + $0x1b0] sm:$0xff]
        %v4366 = vld [vmem:[#allocation8 + $0x1b8] sm:$0xff]
        %v4367 = vld [vmem:[#allocation8 + $0x1c0] sm:$0xff]
        %v4368 = vld [vmem:[#allocation8 + $0x1c8] sm:$0xff]
        %v4369 = vld [vmem:[#allocation8 + $0x1d0] sm:$0xff]
        %v4370 = vld [vmem:[#allocation8 + $0x1d8] sm:$0xff]
        %v4371 = vld [vmem:[#allocation8 + $0x1e0] sm:$0xff]
        %v4372 = vld [vmem:[#allocation8 + $0x1e8] sm:$0xff]
        %v4373 = vld [vmem:[#allocation8 + $0x1f0] sm:$0xff]
        %v4374 = vld [vmem:[#allocation8 + $0x1f8] sm:$0xff]
        %v4439 = vunpack.c.l.b16 %v4311
        %v4440 = vunpack.c.h.b16 %v4311
        %v4441 = vunpack.c.l.b16 %v4312
        %v4442 = vunpack.c.h.b16 %v4312
        %v4443 = vunpack.c.l.b16 %v4313
        %v4444 = vunpack.c.h.b16 %v4313
        %v4445 = vunpack.c.l.b16 %v4314
        %v4446 = vunpack.c.h.b16 %v4314
        %v4447 = vunpack.c.l.b16 %v4315
        %v4448 = vunpack.c.h.b16 %v4315
        %v4449 = vunpack.c.l.b16 %v4316
        %v4450 = vunpack.c.h.b16 %v4316
        %v4451 = vunpack.c.l.b16 %v4317
        %v4452 = vunpack.c.h.b16 %v4317
        %v4453 = vunpack.c.l.b16 %v4318
        %v4454 = vunpack.c.h.b16 %v4318
        %v4455 = vunpack.c.l.b16 %v4319
        %v4456 = vunpack.c.h.b16 %v4319
        %v4457 = vunpack.c.l.b16 %v4320
        %v4458 = vunpack.c.h.b16 %v4320
        %v4459 = vunpack.c.l.b16 %v4321
        %v4460 = vunpack.c.h.b16 %v4321
        %v4461 = vunpack.c.l.b16 %v4322
        %v4462 = vunpack.c.h.b16 %v4322
        %v4463 = vunpack.c.l.b16 %v4323
        %v4464 = vunpack.c.h.b16 %v4323
        %v4465 = vunpack.c.l.b16 %v4324
        %v4466 = vunpack.c.h.b16 %v4324
        %v4467 = vunpack.c.l.b16 %v4325
        %v4468 = vunpack.c.h.b16 %v4325
        %v4469 = vunpack.c.l.b16 %v4326
        %v4470 = vunpack.c.h.b16 %v4326
        %v4471 = vunpack.c.l.b16 %v4327
        %v4472 = vunpack.c.h.b16 %v4327
        %v4473 = vunpack.c.l.b16 %v4328
        %v4474 = vunpack.c.h.b16 %v4328
        %v4475 = vunpack.c.l.b16 %v4329
        %v4476 = vunpack.c.h.b16 %v4329
        %v4477 = vunpack.c.l.b16 %v4330
        %v4478 = vunpack.c.h.b16 %v4330
        %v4479 = vunpack.c.l.b16 %v4331
        %v4480 = vunpack.c.h.b16 %v4331
        %v4481 = vunpack.c.l.b16 %v4332
        %v4482 = vunpack.c.h.b16 %v4332
        %v4483 = vunpack.c.l.b16 %v4333
        %v4484 = vunpack.c.h.b16 %v4333
        %v4485 = vunpack.c.l.b16 %v4334
        %v4486 = vunpack.c.h.b16 %v4334
        %v4487 = vunpack.c.l.b16 %v4335
        %v4488 = vunpack.c.h.b16 %v4335
        %v4489 = vunpack.c.l.b16 %v4336
        %v4490 = vunpack.c.h.b16 %v4336
        %v4491 = vunpack.c.l.b16 %v4337
        %v4492 = vunpack.c.h.b16 %v4337
        %v4493 = vunpack.c.l.b16 %v4338
        %v4494 = vunpack.c.h.b16 %v4338
        %v4495 = vunpack.c.l.b16 %v4339
        %v4496 = vunpack.c.h.b16 %v4339
        %v4497 = vunpack.c.l.b16 %v4340
        %v4498 = vunpack.c.h.b16 %v4340
        %v4499 = vunpack.c.l.b16 %v4341
        %v4500 = vunpack.c.h.b16 %v4341
        %v4501 = vunpack.c.l.b16 %v4342
        %v4502 = vunpack.c.h.b16 %v4342
        %v4503 = vunpack.c.l.b16 %v4343
        %v4504 = vunpack.c.h.b16 %v4343
        %v4505 = vunpack.c.l.b16 %v4344
        %v4506 = vunpack.c.h.b16 %v4344
        %v4507 = vunpack.c.l.b16 %v4345
        %v4508 = vunpack.c.h.b16 %v4345
        %v4509 = vunpack.c.l.b16 %v4346
        %v4510 = vunpack.c.h.b16 %v4346
        %v4511 = vunpack.c.l.b16 %v4347
        %v4512 = vunpack.c.h.b16 %v4347
        %v4513 = vunpack.c.l.b16 %v4348
        %v4514 = vunpack.c.h.b16 %v4348
        %v4515 = vunpack.c.l.b16 %v4349
        %v4516 = vunpack.c.h.b16 %v4349
        %v4517 = vunpack.c.l.b16 %v4350
        %v4518 = vunpack.c.h.b16 %v4350
        %v4519 = vunpack.c.l.b16 %v4351
        %v4520 = vunpack.c.h.b16 %v4351
        %v4521 = vunpack.c.l.b16 %v4352
        %v4522 = vunpack.c.h.b16 %v4352
        %v4523 = vunpack.c.l.b16 %v4353
        %v4524 = vunpack.c.h.b16 %v4353
        %v4525 = vunpack.c.l.b16 %v4354
        %v4526 = vunpack.c.h.b16 %v4354
        %v4527 = vunpack.c.l.b16 %v4355
        %v4528 = vunpack.c.h.b16 %v4355
        %v4529 = vunpack.c.l.b16 %v4356
        %v4530 = vunpack.c.h.b16 %v4356
        %v4531 = vunpack.c.l.b16 %v4357
        %v4532 = vunpack.c.h.b16 %v4357
        %v4533 = vunpack.c.l.b16 %v4358
        %v4534 = vunpack.c.h.b16 %v4358
        %v4535 = vunpack.c.l.b16 %v4359
        %v4536 = vunpack.c.h.b16 %v4359
        %v4537 = vunpack.c.l.b16 %v4360
        %v4538 = vunpack.c.h.b16 %v4360
        %v4539 = vunpack.c.l.b16 %v4361
        %v4540 = vunpack.c.h.b16 %v4361
        %v4541 = vunpack.c.l.b16 %v4362
        %v4542 = vunpack.c.h.b16 %v4362
        %v4543 = vunpack.c.l.b16 %v4363
        %v4544 = vunpack.c.h.b16 %v4363
        %v4545 = vunpack.c.l.b16 %v4364
        %v4546 = vunpack.c.h.b16 %v4364
        %v4547 = vunpack.c.l.b16 %v4365
        %v4548 = vunpack.c.h.b16 %v4365
        %v4549 = vunpack.c.l.b16 %v4366
        %v4550 = vunpack.c.h.b16 %v4366
        %v4551 = vunpack.c.l.b16 %v4367
        %v4552 = vunpack.c.h.b16 %v4367
        %v4553 = vunpack.c.l.b16 %v4368
        %v4554 = vunpack.c.h.b16 %v4368
        %v4555 = vunpack.c.l.b16 %v4369
        %v4556 = vunpack.c.h.b16 %v4369
        %v4557 = vunpack.c.l.b16 %v4370
        %v4558 = vunpack.c.h.b16 %v4370
        %v4559 = vunpack.c.l.b16 %v4371
        %v4560 = vunpack.c.h.b16 %v4371
        %v4561 = vunpack.c.l.b16 %v4372
        %v4562 = vunpack.c.h.b16 %v4372
        %v4563 = vunpack.c.l.b16 %v4373
        %v4564 = vunpack.c.h.b16 %v4373
        %v4565 = vunpack.c.l.b16 %v4374
        %v4566 = vunpack.c.h.b16 %v4374
        %v4567 = vpack.c.b16 %v4441, %v4439
        %v4568 = vpack.c.b16 %v4442, %v4440
        %v4569 = vpack.c.b16 %v4445, %v4443
        %v4570 = vpack.c.b16 %v4446, %v4444
        %v4571 = vpack.c.b16 %v4449, %v4447
        %v4572 = vpack.c.b16 %v4450, %v4448
        %v4573 = vpack.c.b16 %v4453, %v4451
        %v4574 = vpack.c.b16 %v4454, %v4452
        %v4575 = vpack.c.b16 %v4457, %v4455
        %v4576 = vpack.c.b16 %v4458, %v4456
        %v4577 = vpack.c.b16 %v4461, %v4459
        %v4578 = vpack.c.b16 %v4462, %v4460
        %v4579 = vpack.c.b16 %v4465, %v4463
        %v4580 = vpack.c.b16 %v4466, %v4464
        %v4581 = vpack.c.b16 %v4469, %v4467
        %v4582 = vpack.c.b16 %v4470, %v4468
        %v4583 = vpack.c.b16 %v4473, %v4471
        %v4584 = vpack.c.b16 %v4474, %v4472
        %v4585 = vpack.c.b16 %v4477, %v4475
        %v4586 = vpack.c.b16 %v4478, %v4476
        %v4587 = vpack.c.b16 %v4481, %v4479
        %v4588 = vpack.c.b16 %v4482, %v4480
        %v4589 = vpack.c.b16 %v4485, %v4483
        %v4590 = vpack.c.b16 %v4486, %v4484
        %v4591 = vpack.c.b16 %v4489, %v4487
        %v4592 = vpack.c.b16 %v4490, %v4488
        %v4593 = vpack.c.b16 %v4493, %v4491
        %v4594 = vpack.c.b16 %v4494, %v4492
        %v4595 = vpack.c.b16 %v4497, %v4495
        %v4596 = vpack.c.b16 %v4498, %v4496
        %v4597 = vpack.c.b16 %v4501, %v4499
        %v4598 = vpack.c.b16 %v4502, %v4500
        %v4599 = vpack.c.b16 %v4505, %v4503
        %v4600 = vpack.c.b16 %v4506, %v4504
        %v4601 = vpack.c.b16 %v4509, %v4507
        %v4602 = vpack.c.b16 %v4510, %v4508
        %v4603 = vpack.c.b16 %v4513, %v4511
        %v4604 = vpack.c.b16 %v4514, %v4512
        %v4605 = vpack.c.b16 %v4517, %v4515
        %v4606 = vpack.c.b16 %v4518, %v4516
        %v4607 = vpack.c.b16 %v4521, %v4519
        %v4608 = vpack.c.b16 %v4522, %v4520
        %v4609 = vpack.c.b16 %v4525, %v4523
        %v4610 = vpack.c.b16 %v4526, %v4524
        %v4611 = vpack.c.b16 %v4529, %v4527
        %v4612 = vpack.c.b16 %v4530, %v4528
        %v4613 = vpack.c.b16 %v4533, %v4531
        %v4614 = vpack.c.b16 %v4534, %v4532
        %v4615 = vpack.c.b16 %v4537, %v4535
        %v4616 = vpack.c.b16 %v4538, %v4536
        %v4617 = vpack.c.b16 %v4541, %v4539
        %v4618 = vpack.c.b16 %v4542, %v4540
        %v4619 = vpack.c.b16 %v4545, %v4543
        %v4620 = vpack.c.b16 %v4546, %v4544
        %v4621 = vpack.c.b16 %v4549, %v4547
        %v4622 = vpack.c.b16 %v4550, %v4548
        %v4623 = vpack.c.b16 %v4553, %v4551
        %v4624 = vpack.c.b16 %v4554, %v4552
        %v4625 = vpack.c.b16 %v4557, %v4555
        %v4626 = vpack.c.b16 %v4558, %v4556
        %v4627 = vpack.c.b16 %v4561, %v4559
        %v4628 = vpack.c.b16 %v4562, %v4560
        %v4629 = vpack.c.b16 %v4565, %v4563
        %v4630 = vpack.c.b16 %v4566, %v4564
        %4695 = vmatprep.subr.bf16.mxu0 %v4568
        %4696 = vmatpush1.bf16.msra.mxu0 %v4567
        %4697 = vmatprep.subr.bf16.mxu0 %v4570
        %4698 = vmatpush1.bf16.msra.mxu0 %v4569
        %4699 = vmatprep.subr.bf16.mxu0 %v4572
        %4700 = vmatpush1.bf16.msra.mxu0 %v4571
        %4701 = vmatprep.subr.bf16.mxu0 %v4574
        %4702 = vmatpush1.bf16.msra.mxu0 %v4573
        %4703 = vmatprep.subr.bf16.mxu0 %v4576
        %4704 = vmatpush1.bf16.msra.mxu0 %v4575
        %4705 = vmatprep.subr.bf16.mxu0 %v4578
        %4706 = vmatpush1.bf16.msra.mxu0 %v4577
        %4707 = vmatprep.subr.bf16.mxu0 %v4580
        %4708 = vmatpush1.bf16.msra.mxu0 %v4579
        %4709 = vmatprep.subr.bf16.mxu0 %v4582
        %4710 = vmatpush1.bf16.msra.mxu0 %v4581
        %4711 = vmatprep.subr.bf16.mxu0 %v4584
        %4712 = vmatpush1.bf16.msra.mxu0 %v4583
        %4713 = vmatprep.subr.bf16.mxu0 %v4586
        %4714 = vmatpush1.bf16.msra.mxu0 %v4585
        %4715 = vmatprep.subr.bf16.mxu0 %v4588
        %4716 = vmatpush1.bf16.msra.mxu0 %v4587
        %4717 = vmatprep.subr.bf16.mxu0 %v4590
        %4718 = vmatpush1.bf16.msra.mxu0 %v4589
        %4719 = vmatprep.subr.bf16.mxu0 %v4592
        %4720 = vmatpush1.bf16.msra.mxu0 %v4591
        %4721 = vmatprep.subr.bf16.mxu0 %v4594
        %4722 = vmatpush1.bf16.msra.mxu0 %v4593
        %4723 = vmatprep.subr.bf16.mxu0 %v4596
        %4724 = vmatpush1.bf16.msra.mxu0 %v4595
        %4725 = vmatprep.subr.bf16.mxu0 %v4598
        %4726 = vmatpush1.bf16.msra.mxu0 %v4597
        %4727 = vmatprep.mubr.bf16.mxu0 %v4280
        %4728 = vmatmul.mubr.bf16.gmra.mrb[0].mxu0 %v4279
        %v4729 = vpop.f32.mrb[0].mxu0
        %v4730 = vadd.f32 0.0, %v4729
        %v4731 = vpop.f32.mrb[0].mxu0
        %v4732 = vadd.f32 0.0, %v4731
        %v4733 = vpop.f32.mrb[0].mxu0
        %v4734 = vadd.f32 0.0, %v4733
        %v4735 = vpop.f32.mrb[0].mxu0
        %v4736 = vadd.f32 0.0, %v4735
        %4737 = vmatprep.mubr.bf16.mxu0 %v4284
        %4738 = vmatmul.mubr.bf16.gmra.mrb[0].mxu0 %v4283
        %v4739 = vpop.f32.mrb[0].mxu0
        %v4740 = vadd.f32 0.0, %v4739
        %v4741 = vpop.f32.mrb[0].mxu0
        %v4742 = vadd.f32 0.0, %v4741
        %v4743 = vpop.f32.mrb[0].mxu0
        %v4744 = vadd.f32 0.0, %v4743
        %v4745 = vpop.f32.mrb[0].mxu0
        %v4746 = vadd.f32 0.0, %v4745
        %4747 = vmatprep.mubr.bf16.mxu0 %v4288
        %4748 = vmatmul.mubr.bf16.gmra.mrb[0].mxu0 %v4287
        %v4749 = vpop.f32.mrb[0].mxu0
        %v4750 = vadd.f32 0.0, %v4749
        %v4751 = vpop.f32.mrb[0].mxu0
        %v4752 = vadd.f32 0.0, %v4751
        %v4753 = vpop.f32.mrb[0].mxu0
        %v4754 = vadd.f32 0.0, %v4753
        %v4755 = vpop.f32.mrb[0].mxu0
        %v4756 = vadd.f32 0.0, %v4755
        %4757 = vmatprep.mubr.bf16.mxu0 %v4292
        %4758 = vmatmul.mubr.bf16.gmra.mrb[0].mxu0 %v4291
        %v4759 = vpop.f32.mrb[0].mxu0
        %v4760 = vadd.f32 0.0, %v4759
        %v4761 = vpop.f32.mrb[0].mxu0
        %v4762 = vadd.f32 0.0, %v4761
        %v4763 = vpop.f32.mrb[0].mxu0
        %v4764 = vadd.f32 0.0, %v4763
        %v4765 = vpop.f32.mrb[0].mxu0
        %v4766 = vadd.f32 0.0, %v4765
        %4767 = vmatprep.mubr.bf16.mxu0 %v4296
        %4768 = vmatmul.mubr.bf16.gmra.mrb[0].mxu0 %v4295
        %v4769 = vpop.f32.mrb[0].mxu0
        %v4770 = vadd.f32 0.0, %v4769
        %v4771 = vpop.f32.mrb[0].mxu0
        %v4772 = vadd.f32 0.0, %v4771
        %v4773 = vpop.f32.mrb[0].mxu0
        %v4774 = vadd.f32 0.0, %v4773
        %v4775 = vpop.f32.mrb[0].mxu0
        %v4776 = vadd.f32 0.0, %v4775
        %4777 = vmatprep.mubr.bf16.mxu0 %v4300
        %4778 = vmatmul.mubr.bf16.gmra.mrb[0].mxu0 %v4299
        %v4779 = vpop.f32.mrb[0].mxu0
        %v4780 = vadd.f32 0.0, %v4779
        %v4781 = vpop.f32.mrb[0].mxu0
        %v4782 = vadd.f32 0.0, %v4781
        %v4783 = vpop.f32.mrb[0].mxu0
        %v4784 = vadd.f32 0.0, %v4783
        %v4785 = vpop.f32.mrb[0].mxu0
        %v4786 = vadd.f32 0.0, %v4785
        %4787 = vmatprep.mubr.bf16.mxu0 %v4304
        %4788 = vmatmul.mubr.bf16.gmra.mrb[0].mxu0 %v4303
        %v4789 = vpop.f32.mrb[0].mxu0
        %v4790 = vadd.f32 0.0, %v4789
        %v4791 = vpop.f32.mrb[0].mxu0
        %v4792 = vadd.f32 0.0, %v4791
        %v4793 = vpop.f32.mrb[0].mxu0
        %v4794 = vadd.f32 0.0, %v4793
        %v4795 = vpop.f32.mrb[0].mxu0
        %v4796 = vadd.f32 0.0, %v4795
        %4797 = vmatprep.mubr.bf16.mxu0 %v4308
        %4798 = vmatmul.mubr.bf16.gmra.mrb[0].mxu0 %v4307
        %v4799 = vpop.f32.mrb[0].mxu0
        %v4800 = vadd.f32 0.0, %v4799
        %v4801 = vpop.f32.mrb[0].mxu0
        %v4802 = vadd.f32 0.0, %v4801
        %v4803 = vpop.f32.mrb[0].mxu0
        %v4804 = vadd.f32 0.0, %v4803
        %v4805 = vpop.f32.mrb[0].mxu0
        %v4806 = vadd.f32 0.0, %v4805
        %4807 = vdwg.mxu0
        %4808 = vmatprep.subr.bf16.mxu0 %v4600
        %4809 = vmatpush1.bf16.msra.mxu0 %v4599
        %4810 = vmatprep.subr.bf16.mxu0 %v4602
        %4811 = vmatpush1.bf16.msra.mxu0 %v4601
        %4812 = vmatprep.subr.bf16.mxu0 %v4604
        %4813 = vmatpush1.bf16.msra.mxu0 %v4603
        %4814 = vmatprep.subr.bf16.mxu0 %v4606
        %4815 = vmatpush1.bf16.msra.mxu0 %v4605
        %4816 = vmatprep.subr.bf16.mxu0 %v4608
        %4817 = vmatpush1.bf16.msra.mxu0 %v4607
        %4818 = vmatprep.subr.bf16.mxu0 %v4610
        %4819 = vmatpush1.bf16.msra.mxu0 %v4609
        %4820 = vmatprep.subr.bf16.mxu0 %v4612
        %4821 = vmatpush1.bf16.msra.mxu0 %v4611
        %4822 = vmatprep.subr.bf16.mxu0 %v4614
        %4823 = vmatpush1.bf16.msra.mxu0 %v4613
        %4824 = vmatprep.subr.bf16.mxu0 %v4616
        %4825 = vmatpush1.bf16.msra.mxu0 %v4615
        %4826 = vmatprep.subr.bf16.mxu0 %v4618
        %4827 = vmatpush1.bf16.msra.mxu0 %v4617
        %4828 = vmatprep.subr.bf16.mxu0 %v4620
        %4829 = vmatpush1.bf16.msra.mxu0 %v4619
        %4830 = vmatprep.subr.bf16.mxu0 %v4622
        %4831 = vmatpush1.bf16.msra.mxu0 %v4621
        %4832 = vmatprep.subr.bf16.mxu0 %v4624
        %4833 = vmatpush1.bf16.msra.mxu0 %v4623
        %4834 = vmatprep.subr.bf16.mxu0 %v4626
        %4835 = vmatpush1.bf16.msra.mxu0 %v4625
        %4836 = vmatprep.subr.bf16.mxu0 %v4628
        %4837 = vmatpush1.bf16.msra.mxu0 %v4627
        %4838 = vmatprep.subr.bf16.mxu0 %v4630
        %4839 = vmatpush1.bf16.msra.mxu0 %v4629
        %4840 = vmatprep.mubr.bf16.mxu0 %v4282
        %4841 = vmatmul.mubr.bf16.gmra.mrb[0].mxu0 %v4281
        %v4842 = vpop.f32.mrb[0].mxu0
        %v4843 = vadd.f32 %v4730, %v4842
        %v4844 = vpop.f32.mrb[0].mxu0
        %v4845 = vadd.f32 %v4732, %v4844
        %v4846 = vpop.f32.mrb[0].mxu0
        %v4847 = vadd.f32 %v4734, %v4846
        %v4848 = vpop.f32.mrb[0].mxu0
        %v4849 = vadd.f32 %v4736, %v4848
        %4850 = vmatprep.mubr.bf16.mxu0 %v4286
        %4851 = vmatmul.mubr.bf16.gmra.mrb[0].mxu0 %v4285
        %v4852 = vpop.f32.mrb[0].mxu0
        %v4853 = vadd.f32 %v4740, %v4852
        %v4854 = vpop.f32.mrb[0].mxu0
        %v4855 = vadd.f32 %v4742, %v4854
        %v4856 = vpop.f32.mrb[0].mxu0
        %v4857 = vadd.f32 %v4744, %v4856
        %v4858 = vpop.f32.mrb[0].mxu0
        %v4859 = vadd.f32 %v4746, %v4858
        %4860 = vmatprep.mubr.bf16.mxu0 %v4290
        %4861 = vmatmul.mubr.bf16.gmra.mrb[0].mxu0 %v4289
        %v4862 = vpop.f32.mrb[0].mxu0
        %v4863 = vadd.f32 %v4750, %v4862
        %v4864 = vpop.f32.mrb[0].mxu0
        %v4865 = vadd.f32 %v4752, %v4864
        %v4866 = vpop.f32.mrb[0].mxu0
        %v4867 = vadd.f32 %v4754, %v4866
        %v4868 = vpop.f32.mrb[0].mxu0
        %v4869 = vadd.f32 %v4756, %v4868
        %4870 = vmatprep.mubr.bf16.mxu0 %v4294
        %4871 = vmatmul.mubr.bf16.gmra.mrb[0].mxu0 %v4293
        %v4872 = vpop.f32.mrb[0].mxu0
        %v4873 = vadd.f32 %v4760, %v4872
        %v4874 = vpop.f32.mrb[0].mxu0
        %v4875 = vadd.f32 %v4762, %v4874
        %v4876 = vpop.f32.mrb[0].mxu0
        %v4877 = vadd.f32 %v4764, %v4876
        %v4878 = vpop.f32.mrb[0].mxu0
        %v4879 = vadd.f32 %v4766, %v4878
        %4880 = vmatprep.mubr.bf16.mxu0 %v4298
        %4881 = vmatmul.mubr.bf16.gmra.mrb[0].mxu0 %v4297
        %v4882 = vpop.f32.mrb[0].mxu0
        %v4883 = vadd.f32 %v4770, %v4882
        %v4884 = vpop.f32.mrb[0].mxu0
        %v4885 = vadd.f32 %v4772, %v4884
        %v4886 = vpop.f32.mrb[0].mxu0
        %v4887 = vadd.f32 %v4774, %v4886
        %v4888 = vpop.f32.mrb[0].mxu0
        %v4889 = vadd.f32 %v4776, %v4888
        %4890 = vmatprep.mubr.bf16.mxu0 %v4302
        %4891 = vmatmul.mubr.bf16.gmra.mrb[0].mxu0 %v4301
        %v4892 = vpop.f32.mrb[0].mxu0
        %v4893 = vadd.f32 %v4780, %v4892
        %v4894 = vpop.f32.mrb[0].mxu0
        %v4895 = vadd.f32 %v4782, %v4894
        %v4896 = vpop.f32.mrb[0].mxu0
        %v4897 = vadd.f32 %v4784, %v4896
        %v4898 = vpop.f32.mrb[0].mxu0
        %v4899 = vadd.f32 %v4786, %v4898
        %4900 = vmatprep.mubr.bf16.mxu0 %v4306
        %4901 = vmatmul.mubr.bf16.gmra.mrb[0].mxu0 %v4305
        %v4902 = vpop.f32.mrb[0].mxu0
        %v4903 = vadd.f32 %v4790, %v4902
        %v4904 = vpop.f32.mrb[0].mxu0
        %v4905 = vadd.f32 %v4792, %v4904
        %v4906 = vpop.f32.mrb[0].mxu0
        %v4907 = vadd.f32 %v4794, %v4906
        %v4908 = vpop.f32.mrb[0].mxu0
        %v4909 = vadd.f32 %v4796, %v4908
        %4910 = vmatprep.mubr.bf16.mxu0 %v4310
        %4911 = vmatmul.mubr.bf16.gmra.mrb[0].mxu0 %v4309
        %v4912 = vpop.f32.mrb[0].mxu0
        %v4913 = vadd.f32 %v4800, %v4912
        %v4914 = vpop.f32.mrb[0].mxu0
        %v4915 = vadd.f32 %v4802, %v4914
        %v4916 = vpop.f32.mrb[0].mxu0
        %v4917 = vadd.f32 %v4804, %v4916
        %v4918 = vpop.f32.mrb[0].mxu0
        %v4919 = vadd.f32 %v4806, %v4918
        %4920 = vdwg.mxu0
        %v4921 = vld [vmem:[%s6] sm:$0x3]
        %v4922 = vld [vmem:[%s7] sm:$0x3]
        %v4923 = vrot.slane %v4843, 4
        %v4924 = vadd.f32 %v4843, %v4923
        %v4925 = vrot.slane %v4924, 2
        %v4926 = vadd.f32 %v4924, %v4925
        %v4927 = vrot.slane %v4926, 1
        %v4928 = vadd.f32 %v4926, %v4927
        %v4929 = vrot.slane %v4845, 4
        %v4930 = vadd.f32 %v4845, %v4929
        %v4931 = vrot.slane %v4930, 2
        %v4932 = vadd.f32 %v4930, %v4931
        %v4933 = vrot.slane %v4932, 1
        %v4934 = vadd.f32 %v4932, %v4933
        %v4935 = vrot.slane %v4847, 4
        %v4936 = vadd.f32 %v4847, %v4935
        %v4937 = vrot.slane %v4936, 2
        %v4938 = vadd.f32 %v4936, %v4937
        %v4939 = vrot.slane %v4938, 1
        %v4940 = vadd.f32 %v4938, %v4939
        %v4941 = vrot.slane %v4849, 4
        %v4942 = vadd.f32 %v4849, %v4941
        %v4943 = vrot.slane %v4942, 2
        %v4944 = vadd.f32 %v4942, %v4943
        %v4945 = vrot.slane %v4944, 1
        %v4946 = vadd.f32 %v4944, %v4945
        %v4947 = vrot.slane %v4853, 4
        %v4948 = vadd.f32 %v4853, %v4947
        %v4949 = vrot.slane %v4948, 2
        %v4950 = vadd.f32 %v4948, %v4949
        %v4951 = vrot.slane %v4950, 1
        %v4952 = vadd.f32 %v4950, %v4951
        %v4953 = vrot.slane %v4855, 4
        %v4954 = vadd.f32 %v4855, %v4953
        %v4955 = vrot.slane %v4954, 2
        %v4956 = vadd.f32 %v4954, %v4955
        %v4957 = vrot.slane %v4956, 1
        %v4958 = vadd.f32 %v4956, %v4957
        %v4959 = vrot.slane %v4857, 4
        %v4960 = vadd.f32 %v4857, %v4959
        %v4961 = vrot.slane %v4960, 2
        %v4962 = vadd.f32 %v4960, %v4961
        %v4963 = vrot.slane %v4962, 1
        %v4964 = vadd.f32 %v4962, %v4963
        %v4965 = vrot.slane %v4859, 4
        %v4966 = vadd.f32 %v4859, %v4965
        %v4967 = vrot.slane %v4966, 2
        %v4968 = vadd.f32 %v4966, %v4967
        %v4969 = vrot.slane %v4968, 1
        %v4970 = vadd.f32 %v4968, %v4969
        %v4971 = vrot.slane %v4863, 4
        %v4972 = vadd.f32 %v4863, %v4971
        %v4973 = vrot.slane %v4972, 2
        %v4974 = vadd.f32 %v4972, %v4973
        %v4975 = vrot.slane %v4974, 1
        %v4976 = vadd.f32 %v4974, %v4975
        %v4977 = vrot.slane %v4865, 4
        %v4978 = vadd.f32 %v4865, %v4977
        %v4979 = vrot.slane %v4978, 2
        %v4980 = vadd.f32 %v4978, %v4979
        %v4981 = vrot.slane %v4980, 1
        %v4982 = vadd.f32 %v4980, %v4981
        %v4983 = vrot.slane %v4867, 4
        %v4984 = vadd.f32 %v4867, %v4983
        %v4985 = vrot.slane %v4984, 2
        %v4986 = vadd.f32 %v4984, %v4985
        %v4987 = vrot.slane %v4986, 1
        %v4988 = vadd.f32 %v4986, %v4987
        %v4989 = vrot.slane %v4869, 4
        %v4990 = vadd.f32 %v4869, %v4989
        %v4991 = vrot.slane %v4990, 2
        %v4992 = vadd.f32 %v4990, %v4991
        %v4993 = vrot.slane %v4992, 1
        %v4994 = vadd.f32 %v4992, %v4993
        %v4995 = vrot.slane %v4873, 4
        %v4996 = vadd.f32 %v4873, %v4995
        %v4997 = vrot.slane %v4996, 2
        %v4998 = vadd.f32 %v4996, %v4997
        %v4999 = vrot.slane %v4998, 1
        %v5000 = vadd.f32 %v4998, %v4999
        %v5001 = vrot.slane %v4875, 4
        %v5002 = vadd.f32 %v4875, %v5001
        %v5003 = vrot.slane %v5002, 2
        %v5004 = vadd.f32 %v5002, %v5003
        %v5005 = vrot.slane %v5004, 1
        %v5006 = vadd.f32 %v5004, %v5005
        %v5007 = vrot.slane %v4877, 4
        %v5008 = vadd.f32 %v4877, %v5007
        %v5009 = vrot.slane %v5008, 2
        %v5010 = vadd.f32 %v5008, %v5009
        %v5011 = vrot.slane %v5010, 1
        %v5012 = vadd.f32 %v5010, %v5011
        %v5013 = vrot.slane %v4879, 4
        %v5014 = vadd.f32 %v4879, %v5013
        %v5015 = vrot.slane %v5014, 2
        %v5016 = vadd.f32 %v5014, %v5015
        %v5017 = vrot.slane %v5016, 1
        %v5018 = vadd.f32 %v5016, %v5017
        %v5019 = vrot.slane %v4883, 4
        %v5020 = vadd.f32 %v4883, %v5019
        %v5021 = vrot.slane %v5020, 2
        %v5022 = vadd.f32 %v5020, %v5021
        %v5023 = vrot.slane %v5022, 1
        %v5024 = vadd.f32 %v5022, %v5023
        %v5025 = vrot.slane %v4885, 4
        %v5026 = vadd.f32 %v4885, %v5025
        %v5027 = vrot.slane %v5026, 2
        %v5028 = vadd.f32 %v5026, %v5027
        %v5029 = vrot.slane %v5028, 1
        %v5030 = vadd.f32 %v5028, %v5029
        %v5031 = vrot.slane %v4887, 4
        %v5032 = vadd.f32 %v4887, %v5031
        %v5033 = vrot.slane %v5032, 2
        %v5034 = vadd.f32 %v5032, %v5033
        %v5035 = vrot.slane %v5034, 1
        %v5036 = vadd.f32 %v5034, %v5035
        %v5037 = vrot.slane %v4889, 4
        %v5038 = vadd.f32 %v4889, %v5037
        %v5039 = vrot.slane %v5038, 2
        %v5040 = vadd.f32 %v5038, %v5039
        %v5041 = vrot.slane %v5040, 1
        %v5042 = vadd.f32 %v5040, %v5041
        %v5043 = vrot.slane %v4893, 4
        %v5044 = vadd.f32 %v4893, %v5043
        %v5045 = vrot.slane %v5044, 2
        %v5046 = vadd.f32 %v5044, %v5045
        %v5047 = vrot.slane %v5046, 1
        %v5048 = vadd.f32 %v5046, %v5047
        %v5049 = vrot.slane %v4895, 4
        %v5050 = vadd.f32 %v4895, %v5049
        %v5051 = vrot.slane %v5050, 2
        %v5052 = vadd.f32 %v5050, %v5051
        %v5053 = vrot.slane %v5052, 1
        %v5054 = vadd.f32 %v5052, %v5053
        %v5055 = vrot.slane %v4897, 4
        %v5056 = vadd.f32 %v4897, %v5055
        %v5057 = vrot.slane %v5056, 2
        %v5058 = vadd.f32 %v5056, %v5057
        %v5059 = vrot.slane %v5058, 1
        %v5060 = vadd.f32 %v5058, %v5059
        %v5061 = vrot.slane %v4899, 4
        %v5062 = vadd.f32 %v4899, %v5061
        %v5063 = vrot.slane %v5062, 2
        %v5064 = vadd.f32 %v5062, %v5063
        %v5065 = vrot.slane %v5064, 1
        %v5066 = vadd.f32 %v5064, %v5065
        %v5067 = vrot.slane %v4903, 4
        %v5068 = vadd.f32 %v4903, %v5067
        %v5069 = vrot.slane %v5068, 2
        %v5070 = vadd.f32 %v5068, %v5069
        %v5071 = vrot.slane %v5070, 1
        %v5072 = vadd.f32 %v5070, %v5071
        %v5073 = vrot.slane %v4905, 4
        %v5074 = vadd.f32 %v4905, %v5073
        %v5075 = vrot.slane %v5074, 2
        %v5076 = vadd.f32 %v5074, %v5075
        %v5077 = vrot.slane %v5076, 1
        %v5078 = vadd.f32 %v5076, %v5077
        %v5079 = vrot.slane %v4907, 4
        %v5080 = vadd.f32 %v4907, %v5079
        %v5081 = vrot.slane %v5080, 2
        %v5082 = vadd.f32 %v5080, %v5081
        %v5083 = vrot.slane %v5082, 1
        %v5084 = vadd.f32 %v5082, %v5083
        %v5085 = vrot.slane %v4909, 4
        %v5086 = vadd.f32 %v4909, %v5085
        %v5087 = vrot.slane %v5086, 2
        %v5088 = vadd.f32 %v5086, %v5087
        %v5089 = vrot.slane %v5088, 1
        %v5090 = vadd.f32 %v5088, %v5089
        %v5091 = vrot.slane %v4913, 4
        %v5092 = vadd.f32 %v4913, %v5091
        %v5093 = vrot.slane %v5092, 2
        %v5094 = vadd.f32 %v5092, %v5093
        %v5095 = vrot.slane %v5094, 1
        %v5096 = vadd.f32 %v5094, %v5095
        %v5097 = vrot.slane %v4915, 4
        %v5098 = vadd.f32 %v4915, %v5097
        %v5099 = vrot.slane %v5098, 2
        %v5100 = vadd.f32 %v5098, %v5099
        %v5101 = vrot.slane %v5100, 1
        %v5102 = vadd.f32 %v5100, %v5101
        %v5103 = vrot.slane %v4917, 4
        %v5104 = vadd.f32 %v4917, %v5103
        %v5105 = vrot.slane %v5104, 2
        %v5106 = vadd.f32 %v5104, %v5105
        %v5107 = vrot.slane %v5106, 1
        %v5108 = vadd.f32 %v5106, %v5107
        %v5109 = vrot.slane %v4919, 4
        %v5110 = vadd.f32 %v4919, %v5109
        %v5111 = vrot.slane %v5110, 2
        %v5112 = vadd.f32 %v5110, %v5111
        %v5113 = vrot.slane %v5112, 1
        %v5114 = vadd.f32 %v5112, %v5113
        %v5115 = vmul.f32 %v4928, %v1174
        %v5116 = vmul.f32 %v4934, %v1174
        %v5117 = vmul.f32 %v4940, %v1174
        %v5118 = vmul.f32 %v4946, %v1174
        %v5119 = vmul.f32 %v4952, %v1174
        %v5120 = vmul.f32 %v4958, %v1174
        %v5121 = vmul.f32 %v4964, %v1174
        %v5122 = vmul.f32 %v4970, %v1174
        %v5123 = vmul.f32 %v4976, %v1174
        %v5124 = vmul.f32 %v4982, %v1174
        %v5125 = vmul.f32 %v4988, %v1174
        %v5126 = vmul.f32 %v4994, %v1174
        %v5127 = vmul.f32 %v5000, %v1174
        %v5128 = vmul.f32 %v5006, %v1174
        %v5129 = vmul.f32 %v5012, %v1174
        %v5130 = vmul.f32 %v5018, %v1174
        %v5131 = vmul.f32 %v5024, %v1174
        %v5132 = vmul.f32 %v5030, %v1174
        %v5133 = vmul.f32 %v5036, %v1174
        %v5134 = vmul.f32 %v5042, %v1174
        %v5135 = vmul.f32 %v5048, %v1174
        %v5136 = vmul.f32 %v5054, %v1174
        %v5137 = vmul.f32 %v5060, %v1174
        %v5138 = vmul.f32 %v5066, %v1174
        %v5139 = vmul.f32 %v5072, %v1174
        %v5140 = vmul.f32 %v5078, %v1174
        %v5141 = vmul.f32 %v5084, %v1174
        %v5142 = vmul.f32 %v5090, %v1174
        %v5143 = vmul.f32 %v5096, %v1174
        %v5144 = vmul.f32 %v5102, %v1174
        %v5145 = vmul.f32 %v5108, %v1174
        %v5146 = vmul.f32 %v5114, %v1174
        %v5147 = vmul.f32 %v4843, %v4843
        %v5148 = vmul.f32 %v4845, %v4845
        %v5149 = vmul.f32 %v4847, %v4847
        %v5150 = vmul.f32 %v4849, %v4849
        %v5151 = vmul.f32 %v4853, %v4853
        %v5152 = vmul.f32 %v4855, %v4855
        %v5153 = vmul.f32 %v4857, %v4857
        %v5154 = vmul.f32 %v4859, %v4859
        %v5155 = vmul.f32 %v4863, %v4863
        %v5156 = vmul.f32 %v4865, %v4865
        %v5157 = vmul.f32 %v4867, %v4867
        %v5158 = vmul.f32 %v4869, %v4869
        %v5159 = vmul.f32 %v4873, %v4873
        %v5160 = vmul.f32 %v4875, %v4875
        %v5161 = vmul.f32 %v4877, %v4877
        %v5162 = vmul.f32 %v4879, %v4879
        %v5163 = vmul.f32 %v4883, %v4883
        %v5164 = vmul.f32 %v4885, %v4885
        %v5165 = vmul.f32 %v4887, %v4887
        %v5166 = vmul.f32 %v4889, %v4889
        %v5167 = vmul.f32 %v4893, %v4893
        %v5168 = vmul.f32 %v4895, %v4895
        %v5169 = vmul.f32 %v4897, %v4897
        %v5170 = vmul.f32 %v4899, %v4899
        %v5171 = vmul.f32 %v4903, %v4903
        %v5172 = vmul.f32 %v4905, %v4905
        %v5173 = vmul.f32 %v4907, %v4907
        %v5174 = vmul.f32 %v4909, %v4909
        %v5175 = vmul.f32 %v4913, %v4913
        %v5176 = vmul.f32 %v4915, %v4915
        %v5177 = vmul.f32 %v4917, %v4917
        %v5178 = vmul.f32 %v4919, %v4919
        %v5179 = vrot.slane %v5147, 4
        %v5180 = vadd.f32 %v5147, %v5179
        %v5181 = vrot.slane %v5180, 2
        %v5182 = vadd.f32 %v5180, %v5181
        %v5183 = vrot.slane %v5182, 1
        %v5184 = vadd.f32 %v5182, %v5183
        %v5185 = vrot.slane %v5148, 4
        %v5186 = vadd.f32 %v5148, %v5185
        %v5187 = vrot.slane %v5186, 2
        %v5188 = vadd.f32 %v5186, %v5187
        %v5189 = vrot.slane %v5188, 1
        %v5190 = vadd.f32 %v5188, %v5189
        %v5191 = vrot.slane %v5149, 4
        %v5192 = vadd.f32 %v5149, %v5191
        %v5193 = vrot.slane %v5192, 2
        %v5194 = vadd.f32 %v5192, %v5193
        %v5195 = vrot.slane %v5194, 1
        %v5196 = vadd.f32 %v5194, %v5195
        %v5197 = vrot.slane %v5150, 4
        %v5198 = vadd.f32 %v5150, %v5197
        %v5199 = vrot.slane %v5198, 2
        %v5200 = vadd.f32 %v5198, %v5199
        %v5201 = vrot.slane %v5200, 1
        %v5202 = vadd.f32 %v5200, %v5201
        %v5203 = vrot.slane %v5151, 4
        %v5204 = vadd.f32 %v5151, %v5203
        %v5205 = vrot.slane %v5204, 2
        %v5206 = vadd.f32 %v5204, %v5205
        %v5207 = vrot.slane %v5206, 1
        %v5208 = vadd.f32 %v5206, %v5207
        %v5209 = vrot.slane %v5152, 4
        %v5210 = vadd.f32 %v5152, %v5209
        %v5211 = vrot.slane %v5210, 2
        %v5212 = vadd.f32 %v5210, %v5211
        %v5213 = vrot.slane %v5212, 1
        %v5214 = vadd.f32 %v5212, %v5213
        %v5215 = vrot.slane %v5153, 4
        %v5216 = vadd.f32 %v5153, %v5215
        %v5217 = vrot.slane %v5216, 2
        %v5218 = vadd.f32 %v5216, %v5217
        %v5219 = vrot.slane %v5218, 1
        %v5220 = vadd.f32 %v5218, %v5219
        %v5221 = vrot.slane %v5154, 4
        %v5222 = vadd.f32 %v5154, %v5221
        %v5223 = vrot.slane %v5222, 2
        %v5224 = vadd.f32 %v5222, %v5223
        %v5225 = vrot.slane %v5224, 1
        %v5226 = vadd.f32 %v5224, %v5225
        %v5227 = vrot.slane %v5155, 4
        %v5228 = vadd.f32 %v5155, %v5227
        %v5229 = vrot.slane %v5228, 2
        %v5230 = vadd.f32 %v5228, %v5229
        %v5231 = vrot.slane %v5230, 1
        %v5232 = vadd.f32 %v5230, %v5231
        %v5233 = vrot.slane %v5156, 4
        %v5234 = vadd.f32 %v5156, %v5233
        %v5235 = vrot.slane %v5234, 2
        %v5236 = vadd.f32 %v5234, %v5235
        %v5237 = vrot.slane %v5236, 1
        %v5238 = vadd.f32 %v5236, %v5237
        %v5239 = vrot.slane %v5157, 4
        %v5240 = vadd.f32 %v5157, %v5239
        %v5241 = vrot.slane %v5240, 2
        %v5242 = vadd.f32 %v5240, %v5241
        %v5243 = vrot.slane %v5242, 1
        %v5244 = vadd.f32 %v5242, %v5243
        %v5245 = vrot.slane %v5158, 4
        %v5246 = vadd.f32 %v5158, %v5245
        %v5247 = vrot.slane %v5246, 2
        %v5248 = vadd.f32 %v5246, %v5247
        %v5249 = vrot.slane %v5248, 1
        %v5250 = vadd.f32 %v5248, %v5249
        %v5251 = vrot.slane %v5159, 4
        %v5252 = vadd.f32 %v5159, %v5251
        %v5253 = vrot.slane %v5252, 2
        %v5254 = vadd.f32 %v5252, %v5253
        %v5255 = vrot.slane %v5254, 1
        %v5256 = vadd.f32 %v5254, %v5255
        %v5257 = vrot.slane %v5160, 4
        %v5258 = vadd.f32 %v5160, %v5257
        %v5259 = vrot.slane %v5258, 2
        %v5260 = vadd.f32 %v5258, %v5259
        %v5261 = vrot.slane %v5260, 1
        %v5262 = vadd.f32 %v5260, %v5261
        %v5263 = vrot.slane %v5161, 4
        %v5264 = vadd.f32 %v5161, %v5263
        %v5265 = vrot.slane %v5264, 2
        %v5266 = vadd.f32 %v5264, %v5265
        %v5267 = vrot.slane %v5266, 1
        %v5268 = vadd.f32 %v5266, %v5267
        %v5269 = vrot.slane %v5162, 4
        %v5270 = vadd.f32 %v5162, %v5269
        %v5271 = vrot.slane %v5270, 2
        %v5272 = vadd.f32 %v5270, %v5271
        %v5273 = vrot.slane %v5272, 1
        %v5274 = vadd.f32 %v5272, %v5273
        %v5275 = vrot.slane %v5163, 4
        %v5276 = vadd.f32 %v5163, %v5275
        %v5277 = vrot.slane %v5276, 2
        %v5278 = vadd.f32 %v5276, %v5277
        %v5279 = vrot.slane %v5278, 1
        %v5280 = vadd.f32 %v5278, %v5279
        %v5281 = vrot.slane %v5164, 4
        %v5282 = vadd.f32 %v5164, %v5281
        %v5283 = vrot.slane %v5282, 2
        %v5284 = vadd.f32 %v5282, %v5283
        %v5285 = vrot.slane %v5284, 1
        %v5286 = vadd.f32 %v5284, %v5285
        %v5287 = vrot.slane %v5165, 4
        %v5288 = vadd.f32 %v5165, %v5287
        %v5289 = vrot.slane %v5288, 2
        %v5290 = vadd.f32 %v5288, %v5289
        %v5291 = vrot.slane %v5290, 1
        %v5292 = vadd.f32 %v5290, %v5291
        %v5293 = vrot.slane %v5166, 4
        %v5294 = vadd.f32 %v5166, %v5293
        %v5295 = vrot.slane %v5294, 2
        %v5296 = vadd.f32 %v5294, %v5295
        %v5297 = vrot.slane %v5296, 1
        %v5298 = vadd.f32 %v5296, %v5297
        %v5299 = vrot.slane %v5167, 4
        %v5300 = vadd.f32 %v5167, %v5299
        %v5301 = vrot.slane %v5300, 2
        %v5302 = vadd.f32 %v5300, %v5301
        %v5303 = vrot.slane %v5302, 1
        %v5304 = vadd.f32 %v5302, %v5303
        %v5305 = vrot.slane %v5168, 4
        %v5306 = vadd.f32 %v5168, %v5305
        %v5307 = vrot.slane %v5306, 2
        %v5308 = vadd.f32 %v5306, %v5307
        %v5309 = vrot.slane %v5308, 1
        %v5310 = vadd.f32 %v5308, %v5309
        %v5311 = vrot.slane %v5169, 4
        %v5312 = vadd.f32 %v5169, %v5311
        %v5313 = vrot.slane %v5312, 2
        %v5314 = vadd.f32 %v5312, %v5313
        %v5315 = vrot.slane %v5314, 1
        %v5316 = vadd.f32 %v5314, %v5315
        %v5317 = vrot.slane %v5170, 4
        %v5318 = vadd.f32 %v5170, %v5317
        %v5319 = vrot.slane %v5318, 2
        %v5320 = vadd.f32 %v5318, %v5319
        %v5321 = vrot.slane %v5320, 1
        %v5322 = vadd.f32 %v5320, %v5321
        %v5323 = vrot.slane %v5171, 4
        %v5324 = vadd.f32 %v5171, %v5323
        %v5325 = vrot.slane %v5324, 2
        %v5326 = vadd.f32 %v5324, %v5325
        %v5327 = vrot.slane %v5326, 1
        %v5328 = vadd.f32 %v5326, %v5327
        %v5329 = vrot.slane %v5172, 4
        %v5330 = vadd.f32 %v5172, %v5329
        %v5331 = vrot.slane %v5330, 2
        %v5332 = vadd.f32 %v5330, %v5331
        %v5333 = vrot.slane %v5332, 1
        %v5334 = vadd.f32 %v5332, %v5333
        %v5335 = vrot.slane %v5173, 4
        %v5336 = vadd.f32 %v5173, %v5335
        %v5337 = vrot.slane %v5336, 2
        %v5338 = vadd.f32 %v5336, %v5337
        %v5339 = vrot.slane %v5338, 1
        %v5340 = vadd.f32 %v5338, %v5339
        %v5341 = vrot.slane %v5174, 4
        %v5342 = vadd.f32 %v5174, %v5341
        %v5343 = vrot.slane %v5342, 2
        %v5344 = vadd.f32 %v5342, %v5343
        %v5345 = vrot.slane %v5344, 1
        %v5346 = vadd.f32 %v5344, %v5345
        %v5347 = vrot.slane %v5175, 4
        %v5348 = vadd.f32 %v5175, %v5347
        %v5349 = vrot.slane %v5348, 2
        %v5350 = vadd.f32 %v5348, %v5349
        %v5351 = vrot.slane %v5350, 1
        %v5352 = vadd.f32 %v5350, %v5351
        %v5353 = vrot.slane %v5176, 4
        %v5354 = vadd.f32 %v5176, %v5353
        %v5355 = vrot.slane %v5354, 2
        %v5356 = vadd.f32 %v5354, %v5355
        %v5357 = vrot.slane %v5356, 1
        %v5358 = vadd.f32 %v5356, %v5357
        %v5359 = vrot.slane %v5177, 4
        %v5360 = vadd.f32 %v5177, %v5359
        %v5361 = vrot.slane %v5360, 2
        %v5362 = vadd.f32 %v5360, %v5361
        %v5363 = vrot.slane %v5362, 1
        %v5364 = vadd.f32 %v5362, %v5363
        %v5365 = vrot.slane %v5178, 4
        %v5366 = vadd.f32 %v5178, %v5365
        %v5367 = vrot.slane %v5366, 2
        %v5368 = vadd.f32 %v5366, %v5367
        %v5369 = vrot.slane %v5368, 1
        %v5370 = vadd.f32 %v5368, %v5369
        %v5371 = vmul.f32 %v5184, %v1174
        %v5372 = vmul.f32 %v5190, %v1174
        %v5373 = vmul.f32 %v5196, %v1174
        %v5374 = vmul.f32 %v5202, %v1174
        %v5375 = vmul.f32 %v5208, %v1174
        %v5376 = vmul.f32 %v5214, %v1174
        %v5377 = vmul.f32 %v5220, %v1174
        %v5378 = vmul.f32 %v5226, %v1174
        %v5379 = vmul.f32 %v5232, %v1174
        %v5380 = vmul.f32 %v5238, %v1174
        %v5381 = vmul.f32 %v5244, %v1174
        %v5382 = vmul.f32 %v5250, %v1174
        %v5383 = vmul.f32 %v5256, %v1174
        %v5384 = vmul.f32 %v5262, %v1174
        %v5385 = vmul.f32 %v5268, %v1174
        %v5386 = vmul.f32 %v5274, %v1174
        %v5387 = vmul.f32 %v5280, %v1174
        %v5388 = vmul.f32 %v5286, %v1174
        %v5389 = vmul.f32 %v5292, %v1174
        %v5390 = vmul.f32 %v5298, %v1174
        %v5391 = vmul.f32 %v5304, %v1174
        %v5392 = vmul.f32 %v5310, %v1174
        %v5393 = vmul.f32 %v5316, %v1174
        %v5394 = vmul.f32 %v5322, %v1174
        %v5395 = vmul.f32 %v5328, %v1174
        %v5396 = vmul.f32 %v5334, %v1174
        %v5397 = vmul.f32 %v5340, %v1174
        %v5398 = vmul.f32 %v5346, %v1174
        %v5399 = vmul.f32 %v5352, %v1174
        %v5400 = vmul.f32 %v5358, %v1174
        %v5401 = vmul.f32 %v5364, %v1174
        %v5402 = vmul.f32 %v5370, %v1174
        %v5403 = vmul.f32 %v5115, %v5115
        %v5404 = vmul.f32 %v5116, %v5116
        %v5405 = vmul.f32 %v5117, %v5117
        %v5406 = vmul.f32 %v5118, %v5118
        %v5407 = vmul.f32 %v5119, %v5119
        %v5408 = vmul.f32 %v5120, %v5120
        %v5409 = vmul.f32 %v5121, %v5121
        %v5410 = vmul.f32 %v5122, %v5122
        %v5411 = vmul.f32 %v5123, %v5123
        %v5412 = vmul.f32 %v5124, %v5124
        %v5413 = vmul.f32 %v5125, %v5125
        %v5414 = vmul.f32 %v5126, %v5126
        %v5415 = vmul.f32 %v5127, %v5127
        %v5416 = vmul.f32 %v5128, %v5128
        %v5417 = vmul.f32 %v5129, %v5129
        %v5418 = vmul.f32 %v5130, %v5130
        %v5419 = vmul.f32 %v5131, %v5131
        %v5420 = vmul.f32 %v5132, %v5132
        %v5421 = vmul.f32 %v5133, %v5133
        %v5422 = vmul.f32 %v5134, %v5134
        %v5423 = vmul.f32 %v5135, %v5135
        %v5424 = vmul.f32 %v5136, %v5136
        %v5425 = vmul.f32 %v5137, %v5137
        %v5426 = vmul.f32 %v5138, %v5138
        %v5427 = vmul.f32 %v5139, %v5139
        %v5428 = vmul.f32 %v5140, %v5140
        %v5429 = vmul.f32 %v5141, %v5141
        %v5430 = vmul.f32 %v5142, %v5142
        %v5431 = vmul.f32 %v5143, %v5143
        %v5432 = vmul.f32 %v5144, %v5144
        %v5433 = vmul.f32 %v5145, %v5145
        %v5434 = vmul.f32 %v5146, %v5146
        %v5435 = vsub.f32 %v5371, %v5403
        %v5436 = vsub.f32 %v5372, %v5404
        %v5437 = vsub.f32 %v5373, %v5405
        %v5438 = vsub.f32 %v5374, %v5406
        %v5439 = vsub.f32 %v5375, %v5407
        %v5440 = vsub.f32 %v5376, %v5408
        %v5441 = vsub.f32 %v5377, %v5409
        %v5442 = vsub.f32 %v5378, %v5410
        %v5443 = vsub.f32 %v5379, %v5411
        %v5444 = vsub.f32 %v5380, %v5412
        %v5445 = vsub.f32 %v5381, %v5413
        %v5446 = vsub.f32 %v5382, %v5414
        %v5447 = vsub.f32 %v5383, %v5415
        %v5448 = vsub.f32 %v5384, %v5416
        %v5449 = vsub.f32 %v5385, %v5417
        %v5450 = vsub.f32 %v5386, %v5418
        %v5451 = vsub.f32 %v5387, %v5419
        %v5452 = vsub.f32 %v5388, %v5420
        %v5453 = vsub.f32 %v5389, %v5421
        %v5454 = vsub.f32 %v5390, %v5422
        %v5455 = vsub.f32 %v5391, %v5423
        %v5456 = vsub.f32 %v5392, %v5424
        %v5457 = vsub.f32 %v5393, %v5425
        %v5458 = vsub.f32 %v5394, %v5426
        %v5459 = vsub.f32 %v5395, %v5427
        %v5460 = vsub.f32 %v5396, %v5428
        %v5461 = vsub.f32 %v5397, %v5429
        %v5462 = vsub.f32 %v5398, %v5430
        %v5463 = vsub.f32 %v5399, %v5431
        %v5464 = vsub.f32 %v5400, %v5432
        %v5465 = vsub.f32 %v5401, %v5433
        %v5466 = vsub.f32 %v5402, %v5434
        %v5467 = vmax.f32 %v5435, 0.0
        %v5468 = vmax.f32 %v5436, 0.0
        %v5469 = vmax.f32 %v5437, 0.0
        %v5470 = vmax.f32 %v5438, 0.0
        %v5471 = vmax.f32 %v5439, 0.0
        %v5472 = vmax.f32 %v5440, 0.0
        %v5473 = vmax.f32 %v5441, 0.0
        %v5474 = vmax.f32 %v5442, 0.0
        %v5475 = vmax.f32 %v5443, 0.0
        %v5476 = vmax.f32 %v5444, 0.0
        %v5477 = vmax.f32 %v5445, 0.0
        %v5478 = vmax.f32 %v5446, 0.0
        %v5479 = vmax.f32 %v5447, 0.0
        %v5480 = vmax.f32 %v5448, 0.0
        %v5481 = vmax.f32 %v5449, 0.0
        %v5482 = vmax.f32 %v5450, 0.0
        %v5483 = vmax.f32 %v5451, 0.0
        %v5484 = vmax.f32 %v5452, 0.0
        %v5485 = vmax.f32 %v5453, 0.0
        %v5486 = vmax.f32 %v5454, 0.0
        %v5487 = vmax.f32 %v5455, 0.0
        %v5488 = vmax.f32 %v5456, 0.0
        %v5489 = vmax.f32 %v5457, 0.0
        %v5490 = vmax.f32 %v5458, 0.0
        %v5491 = vmax.f32 %v5459, 0.0
        %v5492 = vmax.f32 %v5460, 0.0
        %v5493 = vmax.f32 %v5461, 0.0
        %v5494 = vmax.f32 %v5462, 0.0
        %v5495 = vmax.f32 %v5463, 0.0
        %v5496 = vmax.f32 %v5464, 0.0
        %v5497 = vmax.f32 %v5465, 0.0
        %v5498 = vmax.f32 %v5466, 0.0
        %v5499 = vadd.f32 %v5467, 1e-05
        %v5500 = vadd.f32 %v5468, 1e-05
        %v5501 = vadd.f32 %v5469, 1e-05
        %v5502 = vadd.f32 %v5470, 1e-05
        %v5503 = vadd.f32 %v5471, 1e-05
        %v5504 = vadd.f32 %v5472, 1e-05
        %v5505 = vadd.f32 %v5473, 1e-05
        %v5506 = vadd.f32 %v5474, 1e-05
        %v5507 = vadd.f32 %v5475, 1e-05
        %v5508 = vadd.f32 %v5476, 1e-05
        %v5509 = vadd.f32 %v5477, 1e-05
        %v5510 = vadd.f32 %v5478, 1e-05
        %v5511 = vadd.f32 %v5479, 1e-05
        %v5512 = vadd.f32 %v5480, 1e-05
        %v5513 = vadd.f32 %v5481, 1e-05
        %v5514 = vadd.f32 %v5482, 1e-05
        %v5515 = vadd.f32 %v5483, 1e-05
        %v5516 = vadd.f32 %v5484, 1e-05
        %v5517 = vadd.f32 %v5485, 1e-05
        %v5518 = vadd.f32 %v5486, 1e-05
        %v5519 = vadd.f32 %v5487, 1e-05
        %v5520 = vadd.f32 %v5488, 1e-05
        %v5521 = vadd.f32 %v5489, 1e-05
        %v5522 = vadd.f32 %v5490, 1e-05
        %v5523 = vadd.f32 %v5491, 1e-05
        %v5524 = vadd.f32 %v5492, 1e-05
        %v5525 = vadd.f32 %v5493, 1e-05
        %v5526 = vadd.f32 %v5494, 1e-05
        %v5527 = vadd.f32 %v5495, 1e-05
        %v5528 = vadd.f32 %v5496, 1e-05
        %v5529 = vadd.f32 %v5497, 1e-05
        %v5530 = vadd.f32 %v5498, 1e-05
        %v5531 = vrsqrt.pop %v5499
        %v5532 = vrsqrt.pop %v5500
        %v5533 = vrsqrt.pop %v5501
        %v5534 = vrsqrt.pop %v5502
        %v5535 = vrsqrt.pop %v5503
        %v5536 = vrsqrt.pop %v5504
        %v5537 = vrsqrt.pop %v5505
        %v5538 = vrsqrt.pop %v5506
        %v5539 = vrsqrt.pop %v5507
        %v5540 = vrsqrt.pop %v5508
        %v5541 = vrsqrt.pop %v5509
        %v5542 = vrsqrt.pop %v5510
        %v5543 = vrsqrt.pop %v5511
        %v5544 = vrsqrt.pop %v5512
        %v5545 = vrsqrt.pop %v5513
        %v5546 = vrsqrt.pop %v5514
        %v5547 = vrsqrt.pop %v5515
        %v5548 = vrsqrt.pop %v5516
        %v5549 = vrsqrt.pop %v5517
        %v5550 = vrsqrt.pop %v5518
        %v5551 = vrsqrt.pop %v5519
        %v5552 = vrsqrt.pop %v5520
        %v5553 = vrsqrt.pop %v5521
        %v5554 = vrsqrt.pop %v5522
        %v5555 = vrsqrt.pop %v5523
        %v5556 = vrsqrt.pop %v5524
        %v5557 = vrsqrt.pop %v5525
        %v5558 = vrsqrt.pop %v5526
        %v5559 = vrsqrt.pop %v5527
        %v5560 = vrsqrt.pop %v5528
        %v5561 = vrsqrt.pop %v5529
        %v5562 = vrsqrt.pop %v5530
        %v5595 = vcombine.low %v5531, %v5532
        %v5597 = vunpack.c.l.s4 1966171168
        %v5598 = vunpack.c.0.s8 %v5597
        %v5599 = vlaneseq
        %v5600 = vshrl.u32 %v5599, 7
        %v5601 = vsub.s32 %v5598, %v5600
        %v5602 = vrot.slane %v5595, %v5601
        %v5604 = vunpack.c.l.s4 1966171168
        %v5605 = vunpack.c.0.s8 %v5604
        %v5606 = vlaneseq
        %v5607 = vshrl.u32 %v5606, 7
        %v5608 = vsub.s32 %v5605, %v5607
        %v5609 = vrot.slane %v5602, %v5608
        %v5610 = vcombine.low %v5533, %v5534
        %v5612 = vunpack.c.l.s4 1966171168
        %v5613 = vunpack.c.0.s8 %v5612
        %v5614 = vlaneseq
        %v5615 = vshrl.u32 %v5614, 7
        %v5616 = vsub.s32 %v5613, %v5615
        %v5617 = vrot.slane %v5610, %v5616
        %v5619 = vunpack.c.l.s4 1966171168
        %v5620 = vunpack.c.0.s8 %v5619
        %v5621 = vlaneseq
        %v5622 = vshrl.u32 %v5621, 7
        %v5623 = vsub.s32 %v5620, %v5622
        %v5624 = vrot.slane %v5617, %v5623
        %v5625 = vcombine.low %v5535, %v5536
        %v5627 = vunpack.c.l.s4 1966171168
        %v5628 = vunpack.c.0.s8 %v5627
        %v5629 = vlaneseq
        %v5630 = vshrl.u32 %v5629, 7
        %v5631 = vsub.s32 %v5628, %v5630
        %v5632 = vrot.slane %v5625, %v5631
        %v5634 = vunpack.c.l.s4 1966171168
        %v5635 = vunpack.c.0.s8 %v5634
        %v5636 = vlaneseq
        %v5637 = vshrl.u32 %v5636, 7
        %v5638 = vsub.s32 %v5635, %v5637
        %v5639 = vrot.slane %v5632, %v5638
        %v5640 = vcombine.low %v5537, %v5538
        %v5642 = vunpack.c.l.s4 1966171168
        %v5643 = vunpack.c.0.s8 %v5642
        %v5644 = vlaneseq
        %v5645 = vshrl.u32 %v5644, 7
        %v5646 = vsub.s32 %v5643, %v5645
        %v5647 = vrot.slane %v5640, %v5646
        %v5649 = vunpack.c.l.s4 1966171168
        %v5650 = vunpack.c.0.s8 %v5649
        %v5651 = vlaneseq
        %v5652 = vshrl.u32 %v5651, 7
        %v5653 = vsub.s32 %v5650, %v5652
        %v5654 = vrot.slane %v5647, %v5653
        %v5655 = vcombine.low %v5539, %v5540
        %v5657 = vunpack.c.l.s4 1966171168
        %v5658 = vunpack.c.0.s8 %v5657
        %v5659 = vlaneseq
        %v5660 = vshrl.u32 %v5659, 7
        %v5661 = vsub.s32 %v5658, %v5660
        %v5662 = vrot.slane %v5655, %v5661
        %v5664 = vunpack.c.l.s4 1966171168
        %v5665 = vunpack.c.0.s8 %v5664
        %v5666 = vlaneseq
        %v5667 = vshrl.u32 %v5666, 7
        %v5668 = vsub.s32 %v5665, %v5667
        %v5669 = vrot.slane %v5662, %v5668
        %v5670 = vcombine.low %v5541, %v5542
        %v5672 = vunpack.c.l.s4 1966171168
        %v5673 = vunpack.c.0.s8 %v5672
        %v5674 = vlaneseq
        %v5675 = vshrl.u32 %v5674, 7
        %v5676 = vsub.s32 %v5673, %v5675
        %v5677 = vrot.slane %v5670, %v5676
        %v5679 = vunpack.c.l.s4 1966171168
        %v5680 = vunpack.c.0.s8 %v5679
        %v5681 = vlaneseq
        %v5682 = vshrl.u32 %v5681, 7
        %v5683 = vsub.s32 %v5680, %v5682
        %v5684 = vrot.slane %v5677, %v5683
        %v5685 = vcombine.low %v5543, %v5544
        %v5687 = vunpack.c.l.s4 1966171168
        %v5688 = vunpack.c.0.s8 %v5687
        %v5689 = vlaneseq
        %v5690 = vshrl.u32 %v5689, 7
        %v5691 = vsub.s32 %v5688, %v5690
        %v5692 = vrot.slane %v5685, %v5691
        %v5694 = vunpack.c.l.s4 1966171168
        %v5695 = vunpack.c.0.s8 %v5694
        %v5696 = vlaneseq
        %v5697 = vshrl.u32 %v5696, 7
        %v5698 = vsub.s32 %v5695, %v5697
        %v5699 = vrot.slane %v5692, %v5698
        %v5700 = vcombine.low %v5545, %v5546
        %v5702 = vunpack.c.l.s4 1966171168
        %v5703 = vunpack.c.0.s8 %v5702
        %v5704 = vlaneseq
        %v5705 = vshrl.u32 %v5704, 7
        %v5706 = vsub.s32 %v5703, %v5705
        %v5707 = vrot.slane %v5700, %v5706
        %v5709 = vunpack.c.l.s4 1966171168
        %v5710 = vunpack.c.0.s8 %v5709
        %v5711 = vlaneseq
        %v5712 = vshrl.u32 %v5711, 7
        %v5713 = vsub.s32 %v5710, %v5712
        %v5714 = vrot.slane %v5707, %v5713
        %v5715 = vcombine.low %v5547, %v5548
        %v5717 = vunpack.c.l.s4 1966171168
        %v5718 = vunpack.c.0.s8 %v5717
        %v5719 = vlaneseq
        %v5720 = vshrl.u32 %v5719, 7
        %v5721 = vsub.s32 %v5718, %v5720
        %v5722 = vrot.slane %v5715, %v5721
        %v5724 = vunpack.c.l.s4 1966171168
        %v5725 = vunpack.c.0.s8 %v5724
        %v5726 = vlaneseq
        %v5727 = vshrl.u32 %v5726, 7
        %v5728 = vsub.s32 %v5725, %v5727
        %v5729 = vrot.slane %v5722, %v5728
        %v5730 = vcombine.low %v5549, %v5550
        %v5732 = vunpack.c.l.s4 1966171168
        %v5733 = vunpack.c.0.s8 %v5732
        %v5734 = vlaneseq
        %v5735 = vshrl.u32 %v5734, 7
        %v5736 = vsub.s32 %v5733, %v5735
        %v5737 = vrot.slane %v5730, %v5736
        %v5739 = vunpack.c.l.s4 1966171168
        %v5740 = vunpack.c.0.s8 %v5739
        %v5741 = vlaneseq
        %v5742 = vshrl.u32 %v5741, 7
        %v5743 = vsub.s32 %v5740, %v5742
        %v5744 = vrot.slane %v5737, %v5743
        %v5745 = vcombine.low %v5551, %v5552
        %v5747 = vunpack.c.l.s4 1966171168
        %v5748 = vunpack.c.0.s8 %v5747
        %v5749 = vlaneseq
        %v5750 = vshrl.u32 %v5749, 7
        %v5751 = vsub.s32 %v5748, %v5750
        %v5752 = vrot.slane %v5745, %v5751
        %v5754 = vunpack.c.l.s4 1966171168
        %v5755 = vunpack.c.0.s8 %v5754
        %v5756 = vlaneseq
        %v5757 = vshrl.u32 %v5756, 7
        %v5758 = vsub.s32 %v5755, %v5757
        %v5759 = vrot.slane %v5752, %v5758
        %v5760 = vcombine.low %v5553, %v5554
        %v5762 = vunpack.c.l.s4 1966171168
        %v5763 = vunpack.c.0.s8 %v5762
        %v5764 = vlaneseq
        %v5765 = vshrl.u32 %v5764, 7
        %v5766 = vsub.s32 %v5763, %v5765
        %v5767 = vrot.slane %v5760, %v5766
        %v5769 = vunpack.c.l.s4 1966171168
        %v5770 = vunpack.c.0.s8 %v5769
        %v5771 = vlaneseq
        %v5772 = vshrl.u32 %v5771, 7
        %v5773 = vsub.s32 %v5770, %v5772
        %v5774 = vrot.slane %v5767, %v5773
        %v5775 = vcombine.low %v5555, %v5556
        %v5777 = vunpack.c.l.s4 1966171168
        %v5778 = vunpack.c.0.s8 %v5777
        %v5779 = vlaneseq
        %v5780 = vshrl.u32 %v5779, 7
        %v5781 = vsub.s32 %v5778, %v5780
        %v5782 = vrot.slane %v5775, %v5781
        %v5784 = vunpack.c.l.s4 1966171168
        %v5785 = vunpack.c.0.s8 %v5784
        %v5786 = vlaneseq
        %v5787 = vshrl.u32 %v5786, 7
        %v5788 = vsub.s32 %v5785, %v5787
        %v5789 = vrot.slane %v5782, %v5788
        %v5790 = vcombine.low %v5557, %v5558
        %v5792 = vunpack.c.l.s4 1966171168
        %v5793 = vunpack.c.0.s8 %v5792
        %v5794 = vlaneseq
        %v5795 = vshrl.u32 %v5794, 7
        %v5796 = vsub.s32 %v5793, %v5795
        %v5797 = vrot.slane %v5790, %v5796
        %v5799 = vunpack.c.l.s4 1966171168
        %v5800 = vunpack.c.0.s8 %v5799
        %v5801 = vlaneseq
        %v5802 = vshrl.u32 %v5801, 7
        %v5803 = vsub.s32 %v5800, %v5802
        %v5804 = vrot.slane %v5797, %v5803
        %v5805 = vcombine.low %v5559, %v5560
        %v5807 = vunpack.c.l.s4 1966171168
        %v5808 = vunpack.c.0.s8 %v5807
        %v5809 = vlaneseq
        %v5810 = vshrl.u32 %v5809, 7
        %v5811 = vsub.s32 %v5808, %v5810
        %v5812 = vrot.slane %v5805, %v5811
        %v5814 = vunpack.c.l.s4 1966171168
        %v5815 = vunpack.c.0.s8 %v5814
        %v5816 = vlaneseq
        %v5817 = vshrl.u32 %v5816, 7
        %v5818 = vsub.s32 %v5815, %v5817
        %v5819 = vrot.slane %v5812, %v5818
        %v5820 = vcombine.low %v5561, %v5562
        %v5822 = vunpack.c.l.s4 1966171168
        %v5823 = vunpack.c.0.s8 %v5822
        %v5824 = vlaneseq
        %v5825 = vshrl.u32 %v5824, 7
        %v5826 = vsub.s32 %v5823, %v5825
        %v5827 = vrot.slane %v5820, %v5826
        %v5829 = vunpack.c.l.s4 1966171168
        %v5830 = vunpack.c.0.s8 %v5829
        %v5831 = vlaneseq
        %v5832 = vshrl.u32 %v5831, 7
        %v5833 = vsub.s32 %v5830, %v5832
        %v5834 = vrot.slane %v5827, %v5833
        %v5851 = vmul.f32 %v4921, %v5609
        %v5852 = vmul.f32 %v4921, %v5624
        %v5853 = vmul.f32 %v4921, %v5639
        %v5854 = vmul.f32 %v4921, %v5654
        %v5855 = vmul.f32 %v4921, %v5669
        %v5856 = vmul.f32 %v4921, %v5684
        %v5857 = vmul.f32 %v4921, %v5699
        %v5858 = vmul.f32 %v4921, %v5714
        %v5859 = vmul.f32 %v4921, %v5729
        %v5860 = vmul.f32 %v4921, %v5744
        %v5861 = vmul.f32 %v4921, %v5759
        %v5862 = vmul.f32 %v4921, %v5774
        %v5863 = vmul.f32 %v4921, %v5789
        %v5864 = vmul.f32 %v4921, %v5804
        %v5865 = vmul.f32 %v4921, %v5819
        %v5866 = vmul.f32 %v4921, %v5834
        %v5883 = vlaneseq
        %v5884 = vshrl.u32 %v5883, 7
        %v5885 = vsub.s32 0, %v5884
        %v5886 = vrot.slane %v5851, %v5885
        %v5887 = vlaneseq
        %v5888 = vshrl.u32 %v5887, 7
        %v5889 = vsub.s32 1, %v5888
        %v5890 = vrot.slane %v5851, %v5889
        %v5891 = vlaneseq
        %v5892 = vshrl.u32 %v5891, 7
        %v5893 = vsub.s32 0, %v5892
        %v5894 = vrot.slane %v5852, %v5893
        %v5895 = vlaneseq
        %v5896 = vshrl.u32 %v5895, 7
        %v5897 = vsub.s32 1, %v5896
        %v5898 = vrot.slane %v5852, %v5897
        %v5899 = vlaneseq
        %v5900 = vshrl.u32 %v5899, 7
        %v5901 = vsub.s32 0, %v5900
        %v5902 = vrot.slane %v5853, %v5901
        %v5903 = vlaneseq
        %v5904 = vshrl.u32 %v5903, 7
        %v5905 = vsub.s32 1, %v5904
        %v5906 = vrot.slane %v5853, %v5905
        %v5907 = vlaneseq
        %v5908 = vshrl.u32 %v5907, 7
        %v5909 = vsub.s32 0, %v5908
        %v5910 = vrot.slane %v5854, %v5909
        %v5911 = vlaneseq
        %v5912 = vshrl.u32 %v5911, 7
        %v5913 = vsub.s32 1, %v5912
        %v5914 = vrot.slane %v5854, %v5913
        %v5915 = vlaneseq
        %v5916 = vshrl.u32 %v5915, 7
        %v5917 = vsub.s32 0, %v5916
        %v5918 = vrot.slane %v5855, %v5917
        %v5919 = vlaneseq
        %v5920 = vshrl.u32 %v5919, 7
        %v5921 = vsub.s32 1, %v5920
        %v5922 = vrot.slane %v5855, %v5921
        %v5923 = vlaneseq
        %v5924 = vshrl.u32 %v5923, 7
        %v5925 = vsub.s32 0, %v5924
        %v5926 = vrot.slane %v5856, %v5925
        %v5927 = vlaneseq
        %v5928 = vshrl.u32 %v5927, 7
        %v5929 = vsub.s32 1, %v5928
        %v5930 = vrot.slane %v5856, %v5929
        %v5931 = vlaneseq
        %v5932 = vshrl.u32 %v5931, 7
        %v5933 = vsub.s32 0, %v5932
        %v5934 = vrot.slane %v5857, %v5933
        %v5935 = vlaneseq
        %v5936 = vshrl.u32 %v5935, 7
        %v5937 = vsub.s32 1, %v5936
        %v5938 = vrot.slane %v5857, %v5937
        %v5939 = vlaneseq
        %v5940 = vshrl.u32 %v5939, 7
        %v5941 = vsub.s32 0, %v5940
        %v5942 = vrot.slane %v5858, %v5941
        %v5943 = vlaneseq
        %v5944 = vshrl.u32 %v5943, 7
        %v5945 = vsub.s32 1, %v5944
        %v5946 = vrot.slane %v5858, %v5945
        %v5947 = vlaneseq
        %v5948 = vshrl.u32 %v5947, 7
        %v5949 = vsub.s32 0, %v5948
        %v5950 = vrot.slane %v5859, %v5949
        %v5951 = vlaneseq
        %v5952 = vshrl.u32 %v5951, 7
        %v5953 = vsub.s32 1, %v5952
        %v5954 = vrot.slane %v5859, %v5953
        %v5955 = vlaneseq
        %v5956 = vshrl.u32 %v5955, 7
        %v5957 = vsub.s32 0, %v5956
        %v5958 = vrot.slane %v5860, %v5957
        %v5959 = vlaneseq
        %v5960 = vshrl.u32 %v5959, 7
        %v5961 = vsub.s32 1, %v5960
        %v5962 = vrot.slane %v5860, %v5961
        %v5963 = vlaneseq
        %v5964 = vshrl.u32 %v5963, 7
        %v5965 = vsub.s32 0, %v5964
        %v5966 = vrot.slane %v5861, %v5965
        %v5967 = vlaneseq
        %v5968 = vshrl.u32 %v5967, 7
        %v5969 = vsub.s32 1, %v5968
        %v5970 = vrot.slane %v5861, %v5969
        %v5971 = vlaneseq
        %v5972 = vshrl.u32 %v5971, 7
        %v5973 = vsub.s32 0, %v5972
        %v5974 = vrot.slane %v5862, %v5973
        %v5975 = vlaneseq
        %v5976 = vshrl.u32 %v5975, 7
        %v5977 = vsub.s32 1, %v5976
        %v5978 = vrot.slane %v5862, %v5977
        %v5979 = vlaneseq
        %v5980 = vshrl.u32 %v5979, 7
        %v5981 = vsub.s32 0, %v5980
        %v5982 = vrot.slane %v5863, %v5981
        %v5983 = vlaneseq
        %v5984 = vshrl.u32 %v5983, 7
        %v5985 = vsub.s32 1, %v5984
        %v5986 = vrot.slane %v5863, %v5985
        %v5987 = vlaneseq
        %v5988 = vshrl.u32 %v5987, 7
        %v5989 = vsub.s32 0, %v5988
        %v5990 = vrot.slane %v5864, %v5989
        %v5991 = vlaneseq
        %v5992 = vshrl.u32 %v5991, 7
        %v5993 = vsub.s32 1, %v5992
        %v5994 = vrot.slane %v5864, %v5993
        %v5995 = vlaneseq
        %v5996 = vshrl.u32 %v5995, 7
        %v5997 = vsub.s32 0, %v5996
        %v5998 = vrot.slane %v5865, %v5997
        %v5999 = vlaneseq
        %v6000 = vshrl.u32 %v5999, 7
        %v6001 = vsub.s32 1, %v6000
        %v6002 = vrot.slane %v5865, %v6001
        %v6003 = vlaneseq
        %v6004 = vshrl.u32 %v6003, 7
        %v6005 = vsub.s32 0, %v6004
        %v6006 = vrot.slane %v5866, %v6005
        %v6007 = vlaneseq
        %v6008 = vshrl.u32 %v6007, 7
        %v6009 = vsub.s32 1, %v6008
        %v6010 = vrot.slane %v5866, %v6009
        %v6043 = vmul.f32 %v5115, %v5886
        %v6044 = vmul.f32 %v5116, %v5890
        %v6045 = vmul.f32 %v5117, %v5894
        %v6046 = vmul.f32 %v5118, %v5898
        %v6047 = vmul.f32 %v5119, %v5902
        %v6048 = vmul.f32 %v5120, %v5906
        %v6049 = vmul.f32 %v5121, %v5910
        %v6050 = vmul.f32 %v5122, %v5914
        %v6051 = vmul.f32 %v5123, %v5918
        %v6052 = vmul.f32 %v5124, %v5922
        %v6053 = vmul.f32 %v5125, %v5926
        %v6054 = vmul.f32 %v5126, %v5930
        %v6055 = vmul.f32 %v5127, %v5934
        %v6056 = vmul.f32 %v5128, %v5938
        %v6057 = vmul.f32 %v5129, %v5942
        %v6058 = vmul.f32 %v5130, %v5946
        %v6059 = vmul.f32 %v5131, %v5950
        %v6060 = vmul.f32 %v5132, %v5954
        %v6061 = vmul.f32 %v5133, %v5958
        %v6062 = vmul.f32 %v5134, %v5962
        %v6063 = vmul.f32 %v5135, %v5966
        %v6064 = vmul.f32 %v5136, %v5970
        %v6065 = vmul.f32 %v5137, %v5974
        %v6066 = vmul.f32 %v5138, %v5978
        %v6067 = vmul.f32 %v5139, %v5982
        %v6068 = vmul.f32 %v5140, %v5986
        %v6069 = vmul.f32 %v5141, %v5990
        %v6070 = vmul.f32 %v5142, %v5994
        %v6071 = vmul.f32 %v5143, %v5998
        %v6072 = vmul.f32 %v5144, %v6002
        %v6073 = vmul.f32 %v5145, %v6006
        %v6074 = vmul.f32 %v5146, %v6010
        %v6107 = vcombine.low %v6043, %v6044
        %v6109 = vunpack.c.l.s4 1966171168
        %v6110 = vunpack.c.0.s8 %v6109
        %v6111 = vlaneseq
        %v6112 = vshrl.u32 %v6111, 7
        %v6113 = vsub.s32 %v6110, %v6112
        %v6114 = vrot.slane %v6107, %v6113
        %v6116 = vunpack.c.l.s4 1966171168
        %v6117 = vunpack.c.0.s8 %v6116
        %v6118 = vlaneseq
        %v6119 = vshrl.u32 %v6118, 7
        %v6120 = vsub.s32 %v6117, %v6119
        %v6121 = vrot.slane %v6114, %v6120
        %v6122 = vcombine.low %v6045, %v6046
        %v6124 = vunpack.c.l.s4 1966171168
        %v6125 = vunpack.c.0.s8 %v6124
        %v6126 = vlaneseq
        %v6127 = vshrl.u32 %v6126, 7
        %v6128 = vsub.s32 %v6125, %v6127
        %v6129 = vrot.slane %v6122, %v6128
        %v6131 = vunpack.c.l.s4 1966171168
        %v6132 = vunpack.c.0.s8 %v6131
        %v6133 = vlaneseq
        %v6134 = vshrl.u32 %v6133, 7
        %v6135 = vsub.s32 %v6132, %v6134
        %v6136 = vrot.slane %v6129, %v6135
        %v6137 = vcombine.low %v6047, %v6048
        %v6139 = vunpack.c.l.s4 1966171168
        %v6140 = vunpack.c.0.s8 %v6139
        %v6141 = vlaneseq
        %v6142 = vshrl.u32 %v6141, 7
        %v6143 = vsub.s32 %v6140, %v6142
        %v6144 = vrot.slane %v6137, %v6143
        %v6146 = vunpack.c.l.s4 1966171168
        %v6147 = vunpack.c.0.s8 %v6146
        %v6148 = vlaneseq
        %v6149 = vshrl.u32 %v6148, 7
        %v6150 = vsub.s32 %v6147, %v6149
        %v6151 = vrot.slane %v6144, %v6150
        %v6152 = vcombine.low %v6049, %v6050
        %v6154 = vunpack.c.l.s4 1966171168
        %v6155 = vunpack.c.0.s8 %v6154
        %v6156 = vlaneseq
        %v6157 = vshrl.u32 %v6156, 7
        %v6158 = vsub.s32 %v6155, %v6157
        %v6159 = vrot.slane %v6152, %v6158
        %v6161 = vunpack.c.l.s4 1966171168
        %v6162 = vunpack.c.0.s8 %v6161
        %v6163 = vlaneseq
        %v6164 = vshrl.u32 %v6163, 7
        %v6165 = vsub.s32 %v6162, %v6164
        %v6166 = vrot.slane %v6159, %v6165
        %v6167 = vcombine.low %v6051, %v6052
        %v6169 = vunpack.c.l.s4 1966171168
        %v6170 = vunpack.c.0.s8 %v6169
        %v6171 = vlaneseq
        %v6172 = vshrl.u32 %v6171, 7
        %v6173 = vsub.s32 %v6170, %v6172
        %v6174 = vrot.slane %v6167, %v6173
        %v6176 = vunpack.c.l.s4 1966171168
        %v6177 = vunpack.c.0.s8 %v6176
        %v6178 = vlaneseq
        %v6179 = vshrl.u32 %v6178, 7
        %v6180 = vsub.s32 %v6177, %v6179
        %v6181 = vrot.slane %v6174, %v6180
        %v6182 = vcombine.low %v6053, %v6054
        %v6184 = vunpack.c.l.s4 1966171168
        %v6185 = vunpack.c.0.s8 %v6184
        %v6186 = vlaneseq
        %v6187 = vshrl.u32 %v6186, 7
        %v6188 = vsub.s32 %v6185, %v6187
        %v6189 = vrot.slane %v6182, %v6188
        %v6191 = vunpack.c.l.s4 1966171168
        %v6192 = vunpack.c.0.s8 %v6191
        %v6193 = vlaneseq
        %v6194 = vshrl.u32 %v6193, 7
        %v6195 = vsub.s32 %v6192, %v6194
        %v6196 = vrot.slane %v6189, %v6195
        %v6197 = vcombine.low %v6055, %v6056
        %v6199 = vunpack.c.l.s4 1966171168
        %v6200 = vunpack.c.0.s8 %v6199
        %v6201 = vlaneseq
        %v6202 = vshrl.u32 %v6201, 7
        %v6203 = vsub.s32 %v6200, %v6202
        %v6204 = vrot.slane %v6197, %v6203
        %v6206 = vunpack.c.l.s4 1966171168
        %v6207 = vunpack.c.0.s8 %v6206
        %v6208 = vlaneseq
        %v6209 = vshrl.u32 %v6208, 7
        %v6210 = vsub.s32 %v6207, %v6209
        %v6211 = vrot.slane %v6204, %v6210
        %v6212 = vcombine.low %v6057, %v6058
        %v6214 = vunpack.c.l.s4 1966171168
        %v6215 = vunpack.c.0.s8 %v6214
        %v6216 = vlaneseq
        %v6217 = vshrl.u32 %v6216, 7
        %v6218 = vsub.s32 %v6215, %v6217
        %v6219 = vrot.slane %v6212, %v6218
        %v6221 = vunpack.c.l.s4 1966171168
        %v6222 = vunpack.c.0.s8 %v6221
        %v6223 = vlaneseq
        %v6224 = vshrl.u32 %v6223, 7
        %v6225 = vsub.s32 %v6222, %v6224
        %v6226 = vrot.slane %v6219, %v6225
        %v6227 = vcombine.low %v6059, %v6060
        %v6229 = vunpack.c.l.s4 1966171168
        %v6230 = vunpack.c.0.s8 %v6229
        %v6231 = vlaneseq
        %v6232 = vshrl.u32 %v6231, 7
        %v6233 = vsub.s32 %v6230, %v6232
        %v6234 = vrot.slane %v6227, %v6233
        %v6236 = vunpack.c.l.s4 1966171168
        %v6237 = vunpack.c.0.s8 %v6236
        %v6238 = vlaneseq
        %v6239 = vshrl.u32 %v6238, 7
        %v6240 = vsub.s32 %v6237, %v6239
        %v6241 = vrot.slane %v6234, %v6240
        %v6242 = vcombine.low %v6061, %v6062
        %v6244 = vunpack.c.l.s4 1966171168
        %v6245 = vunpack.c.0.s8 %v6244
        %v6246 = vlaneseq
        %v6247 = vshrl.u32 %v6246, 7
        %v6248 = vsub.s32 %v6245, %v6247
        %v6249 = vrot.slane %v6242, %v6248
        %v6251 = vunpack.c.l.s4 1966171168
        %v6252 = vunpack.c.0.s8 %v6251
        %v6253 = vlaneseq
        %v6254 = vshrl.u32 %v6253, 7
        %v6255 = vsub.s32 %v6252, %v6254
        %v6256 = vrot.slane %v6249, %v6255
        %v6257 = vcombine.low %v6063, %v6064
        %v6259 = vunpack.c.l.s4 1966171168
        %v6260 = vunpack.c.0.s8 %v6259
        %v6261 = vlaneseq
        %v6262 = vshrl.u32 %v6261, 7
        %v6263 = vsub.s32 %v6260, %v6262
        %v6264 = vrot.slane %v6257, %v6263
        %v6266 = vunpack.c.l.s4 1966171168
        %v6267 = vunpack.c.0.s8 %v6266
        %v6268 = vlaneseq
        %v6269 = vshrl.u32 %v6268, 7
        %v6270 = vsub.s32 %v6267, %v6269
        %v6271 = vrot.slane %v6264, %v6270
        %v6272 = vcombine.low %v6065, %v6066
        %v6274 = vunpack.c.l.s4 1966171168
        %v6275 = vunpack.c.0.s8 %v6274
        %v6276 = vlaneseq
        %v6277 = vshrl.u32 %v6276, 7
        %v6278 = vsub.s32 %v6275, %v6277
        %v6279 = vrot.slane %v6272, %v6278
        %v6281 = vunpack.c.l.s4 1966171168
        %v6282 = vunpack.c.0.s8 %v6281
        %v6283 = vlaneseq
        %v6284 = vshrl.u32 %v6283, 7
        %v6285 = vsub.s32 %v6282, %v6284
        %v6286 = vrot.slane %v6279, %v6285
        %v6287 = vcombine.low %v6067, %v6068
        %v6289 = vunpack.c.l.s4 1966171168
        %v6290 = vunpack.c.0.s8 %v6289
        %v6291 = vlaneseq
        %v6292 = vshrl.u32 %v6291, 7
        %v6293 = vsub.s32 %v6290, %v6292
        %v6294 = vrot.slane %v6287, %v6293
        %v6296 = vunpack.c.l.s4 1966171168
        %v6297 = vunpack.c.0.s8 %v6296
        %v6298 = vlaneseq
        %v6299 = vshrl.u32 %v6298, 7
        %v6300 = vsub.s32 %v6297, %v6299
        %v6301 = vrot.slane %v6294, %v6300
        %v6302 = vcombine.low %v6069, %v6070
        %v6304 = vunpack.c.l.s4 1966171168
        %v6305 = vunpack.c.0.s8 %v6304
        %v6306 = vlaneseq
        %v6307 = vshrl.u32 %v6306, 7
        %v6308 = vsub.s32 %v6305, %v6307
        %v6309 = vrot.slane %v6302, %v6308
        %v6311 = vunpack.c.l.s4 1966171168
        %v6312 = vunpack.c.0.s8 %v6311
        %v6313 = vlaneseq
        %v6314 = vshrl.u32 %v6313, 7
        %v6315 = vsub.s32 %v6312, %v6314
        %v6316 = vrot.slane %v6309, %v6315
        %v6317 = vcombine.low %v6071, %v6072
        %v6319 = vunpack.c.l.s4 1966171168
        %v6320 = vunpack.c.0.s8 %v6319
        %v6321 = vlaneseq
        %v6322 = vshrl.u32 %v6321, 7
        %v6323 = vsub.s32 %v6320, %v6322
        %v6324 = vrot.slane %v6317, %v6323
        %v6326 = vunpack.c.l.s4 1966171168
        %v6327 = vunpack.c.0.s8 %v6326
        %v6328 = vlaneseq
        %v6329 = vshrl.u32 %v6328, 7
        %v6330 = vsub.s32 %v6327, %v6329
        %v6331 = vrot.slane %v6324, %v6330
        %v6332 = vcombine.low %v6073, %v6074
        %v6334 = vunpack.c.l.s4 1966171168
        %v6335 = vunpack.c.0.s8 %v6334
        %v6336 = vlaneseq
        %v6337 = vshrl.u32 %v6336, 7
        %v6338 = vsub.s32 %v6335, %v6337
        %v6339 = vrot.slane %v6332, %v6338
        %v6341 = vunpack.c.l.s4 1966171168
        %v6342 = vunpack.c.0.s8 %v6341
        %v6343 = vlaneseq
        %v6344 = vshrl.u32 %v6343, 7
        %v6345 = vsub.s32 %v6342, %v6344
        %v6346 = vrot.slane %v6339, %v6345
        %v6363 = vsub.f32 %v4922, %v6121
        %v6364 = vsub.f32 %v4922, %v6136
        %v6365 = vsub.f32 %v4922, %v6151
        %v6366 = vsub.f32 %v4922, %v6166
        %v6367 = vsub.f32 %v4922, %v6181
        %v6368 = vsub.f32 %v4922, %v6196
        %v6369 = vsub.f32 %v4922, %v6211
        %v6370 = vsub.f32 %v4922, %v6226
        %v6371 = vsub.f32 %v4922, %v6241
        %v6372 = vsub.f32 %v4922, %v6256
        %v6373 = vsub.f32 %v4922, %v6271
        %v6374 = vsub.f32 %v4922, %v6286
        %v6375 = vsub.f32 %v4922, %v6301
        %v6376 = vsub.f32 %v4922, %v6316
        %v6377 = vsub.f32 %v4922, %v6331
        %v6378 = vsub.f32 %v4922, %v6346
        %v6379 = vmul.f32 %v4843, %v5886
        %v6380 = vmul.f32 %v4845, %v5890
        %v6381 = vmul.f32 %v4847, %v5894
        %v6382 = vmul.f32 %v4849, %v5898
        %v6383 = vmul.f32 %v4853, %v5902
        %v6384 = vmul.f32 %v4855, %v5906
        %v6385 = vmul.f32 %v4857, %v5910
        %v6386 = vmul.f32 %v4859, %v5914
        %v6387 = vmul.f32 %v4863, %v5918
        %v6388 = vmul.f32 %v4865, %v5922
        %v6389 = vmul.f32 %v4867, %v5926
        %v6390 = vmul.f32 %v4869, %v5930
        %v6391 = vmul.f32 %v4873, %v5934
        %v6392 = vmul.f32 %v4875, %v5938
        %v6393 = vmul.f32 %v4877, %v5942
        %v6394 = vmul.f32 %v4879, %v5946
        %v6395 = vmul.f32 %v4883, %v5950
        %v6396 = vmul.f32 %v4885, %v5954
        %v6397 = vmul.f32 %v4887, %v5958
        %v6398 = vmul.f32 %v4889, %v5962
        %v6399 = vmul.f32 %v4893, %v5966
        %v6400 = vmul.f32 %v4895, %v5970
        %v6401 = vmul.f32 %v4897, %v5974
        %v6402 = vmul.f32 %v4899, %v5978
        %v6403 = vmul.f32 %v4903, %v5982
        %v6404 = vmul.f32 %v4905, %v5986
        %v6405 = vmul.f32 %v4907, %v5990
        %v6406 = vmul.f32 %v4909, %v5994
        %v6407 = vmul.f32 %v4913, %v5998
        %v6408 = vmul.f32 %v4915, %v6002
        %v6409 = vmul.f32 %v4917, %v6006
        %v6410 = vmul.f32 %v4919, %v6010
        %v6427 = vlaneseq
        %v6428 = vshrl.u32 %v6427, 7
        %v6429 = vsub.s32 0, %v6428
        %v6430 = vrot.slane %v6363, %v6429
        %v6431 = vlaneseq
        %v6432 = vshrl.u32 %v6431, 7
        %v6433 = vsub.s32 1, %v6432
        %v6434 = vrot.slane %v6363, %v6433
        %v6435 = vlaneseq
        %v6436 = vshrl.u32 %v6435, 7
        %v6437 = vsub.s32 0, %v6436
        %v6438 = vrot.slane %v6364, %v6437
        %v6439 = vlaneseq
        %v6440 = vshrl.u32 %v6439, 7
        %v6441 = vsub.s32 1, %v6440
        %v6442 = vrot.slane %v6364, %v6441
        %v6443 = vlaneseq
        %v6444 = vshrl.u32 %v6443, 7
        %v6445 = vsub.s32 0, %v6444
        %v6446 = vrot.slane %v6365, %v6445
        %v6447 = vlaneseq
        %v6448 = vshrl.u32 %v6447, 7
        %v6449 = vsub.s32 1, %v6448
        %v6450 = vrot.slane %v6365, %v6449
        %v6451 = vlaneseq
        %v6452 = vshrl.u32 %v6451, 7
        %v6453 = vsub.s32 0, %v6452
        %v6454 = vrot.slane %v6366, %v6453
        %v6455 = vlaneseq
        %v6456 = vshrl.u32 %v6455, 7
        %v6457 = vsub.s32 1, %v6456
        %v6458 = vrot.slane %v6366, %v6457
        %v6459 = vlaneseq
        %v6460 = vshrl.u32 %v6459, 7
        %v6461 = vsub.s32 0, %v6460
        %v6462 = vrot.slane %v6367, %v6461
        %v6463 = vlaneseq
        %v6464 = vshrl.u32 %v6463, 7
        %v6465 = vsub.s32 1, %v6464
        %v6466 = vrot.slane %v6367, %v6465
        %v6467 = vlaneseq
        %v6468 = vshrl.u32 %v6467, 7
        %v6469 = vsub.s32 0, %v6468
        %v6470 = vrot.slane %v6368, %v6469
        %v6471 = vlaneseq
        %v6472 = vshrl.u32 %v6471, 7
        %v6473 = vsub.s32 1, %v6472
        %v6474 = vrot.slane %v6368, %v6473
        %v6475 = vlaneseq
        %v6476 = vshrl.u32 %v6475, 7
        %v6477 = vsub.s32 0, %v6476
        %v6478 = vrot.slane %v6369, %v6477
        %v6479 = vlaneseq
        %v6480 = vshrl.u32 %v6479, 7
        %v6481 = vsub.s32 1, %v6480
        %v6482 = vrot.slane %v6369, %v6481
        %v6483 = vlaneseq
        %v6484 = vshrl.u32 %v6483, 7
        %v6485 = vsub.s32 0, %v6484
        %v6486 = vrot.slane %v6370, %v6485
        %v6487 = vlaneseq
        %v6488 = vshrl.u32 %v6487, 7
        %v6489 = vsub.s32 1, %v6488
        %v6490 = vrot.slane %v6370, %v6489
        %v6491 = vlaneseq
        %v6492 = vshrl.u32 %v6491, 7
        %v6493 = vsub.s32 0, %v6492
        %v6494 = vrot.slane %v6371, %v6493
        %v6495 = vlaneseq
        %v6496 = vshrl.u32 %v6495, 7
        %v6497 = vsub.s32 1, %v6496
        %v6498 = vrot.slane %v6371, %v6497
        %v6499 = vlaneseq
        %v6500 = vshrl.u32 %v6499, 7
        %v6501 = vsub.s32 0, %v6500
        %v6502 = vrot.slane %v6372, %v6501
        %v6503 = vlaneseq
        %v6504 = vshrl.u32 %v6503, 7
        %v6505 = vsub.s32 1, %v6504
        %v6506 = vrot.slane %v6372, %v6505
        %v6507 = vlaneseq
        %v6508 = vshrl.u32 %v6507, 7
        %v6509 = vsub.s32 0, %v6508
        %v6510 = vrot.slane %v6373, %v6509
        %v6511 = vlaneseq
        %v6512 = vshrl.u32 %v6511, 7
        %v6513 = vsub.s32 1, %v6512
        %v6514 = vrot.slane %v6373, %v6513
        %v6515 = vlaneseq
        %v6516 = vshrl.u32 %v6515, 7
        %v6517 = vsub.s32 0, %v6516
        %v6518 = vrot.slane %v6374, %v6517
        %v6519 = vlaneseq
        %v6520 = vshrl.u32 %v6519, 7
        %v6521 = vsub.s32 1, %v6520
        %v6522 = vrot.slane %v6374, %v6521
        %v6523 = vlaneseq
        %v6524 = vshrl.u32 %v6523, 7
        %v6525 = vsub.s32 0, %v6524
        %v6526 = vrot.slane %v6375, %v6525
        %v6527 = vlaneseq
        %v6528 = vshrl.u32 %v6527, 7
        %v6529 = vsub.s32 1, %v6528
        %v6530 = vrot.slane %v6375, %v6529
        %v6531 = vlaneseq
        %v6532 = vshrl.u32 %v6531, 7
        %v6533 = vsub.s32 0, %v6532
        %v6534 = vrot.slane %v6376, %v6533
        %v6535 = vlaneseq
        %v6536 = vshrl.u32 %v6535, 7
        %v6537 = vsub.s32 1, %v6536
        %v6538 = vrot.slane %v6376, %v6537
        %v6539 = vlaneseq
        %v6540 = vshrl.u32 %v6539, 7
        %v6541 = vsub.s32 0, %v6540
        %v6542 = vrot.slane %v6377, %v6541
        %v6543 = vlaneseq
        %v6544 = vshrl.u32 %v6543, 7
        %v6545 = vsub.s32 1, %v6544
        %v6546 = vrot.slane %v6377, %v6545
        %v6547 = vlaneseq
        %v6548 = vshrl.u32 %v6547, 7
        %v6549 = vsub.s32 0, %v6548
        %v6550 = vrot.slane %v6378, %v6549
        %v6551 = vlaneseq
        %v6552 = vshrl.u32 %v6551, 7
        %v6553 = vsub.s32 1, %v6552
        %v6554 = vrot.slane %v6378, %v6553
        %v6587 = vadd.f32 %v6379, %v6430
        %v6588 = vadd.f32 %v6380, %v6434
        %v6589 = vadd.f32 %v6381, %v6438
        %v6590 = vadd.f32 %v6382, %v6442
        %v6591 = vadd.f32 %v6383, %v6446
        %v6592 = vadd.f32 %v6384, %v6450
        %v6593 = vadd.f32 %v6385, %v6454
        %v6594 = vadd.f32 %v6386, %v6458
        %v6595 = vadd.f32 %v6387, %v6462
        %v6596 = vadd.f32 %v6388, %v6466
        %v6597 = vadd.f32 %v6389, %v6470
        %v6598 = vadd.f32 %v6390, %v6474
        %v6599 = vadd.f32 %v6391, %v6478
        %v6600 = vadd.f32 %v6392, %v6482
        %v6601 = vadd.f32 %v6393, %v6486
        %v6602 = vadd.f32 %v6394, %v6490
        %v6603 = vadd.f32 %v6395, %v6494
        %v6604 = vadd.f32 %v6396, %v6498
        %v6605 = vadd.f32 %v6397, %v6502
        %v6606 = vadd.f32 %v6398, %v6506
        %v6607 = vadd.f32 %v6399, %v6510
        %v6608 = vadd.f32 %v6400, %v6514
        %v6609 = vadd.f32 %v6401, %v6518
        %v6610 = vadd.f32 %v6402, %v6522
        %v6611 = vadd.f32 %v6403, %v6526
        %v6612 = vadd.f32 %v6404, %v6530
        %v6613 = vadd.f32 %v6405, %v6534
        %v6614 = vadd.f32 %v6406, %v6538
        %v6615 = vadd.f32 %v6407, %v6542
        %v6616 = vadd.f32 %v6408, %v6546
        %v6617 = vadd.f32 %v6409, %v6550
        %v6618 = vadd.f32 %v6410, %v6554
        %vm6619 = vcmp.gt.f32.partialorder %v6587, 0.0
        %vm6620 = vcmp.gt.f32.partialorder %v6588, 0.0
        %vm6621 = vcmp.gt.f32.partialorder %v6589, 0.0
        %vm6622 = vcmp.gt.f32.partialorder %v6590, 0.0
        %vm6623 = vcmp.gt.f32.partialorder %v6591, 0.0
        %vm6624 = vcmp.gt.f32.partialorder %v6592, 0.0
        %vm6625 = vcmp.gt.f32.partialorder %v6593, 0.0
        %vm6626 = vcmp.gt.f32.partialorder %v6594, 0.0
        %vm6627 = vcmp.gt.f32.partialorder %v6595, 0.0
        %vm6628 = vcmp.gt.f32.partialorder %v6596, 0.0
        %vm6629 = vcmp.gt.f32.partialorder %v6597, 0.0
        %vm6630 = vcmp.gt.f32.partialorder %v6598, 0.0
        %vm6631 = vcmp.gt.f32.partialorder %v6599, 0.0
        %vm6632 = vcmp.gt.f32.partialorder %v6600, 0.0
        %vm6633 = vcmp.gt.f32.partialorder %v6601, 0.0
        %vm6634 = vcmp.gt.f32.partialorder %v6602, 0.0
        %vm6635 = vcmp.gt.f32.partialorder %v6603, 0.0
        %vm6636 = vcmp.gt.f32.partialorder %v6604, 0.0
        %vm6637 = vcmp.gt.f32.partialorder %v6605, 0.0
        %vm6638 = vcmp.gt.f32.partialorder %v6606, 0.0
        %vm6639 = vcmp.gt.f32.partialorder %v6607, 0.0
        %vm6640 = vcmp.gt.f32.partialorder %v6608, 0.0
        %vm6641 = vcmp.gt.f32.partialorder %v6609, 0.0
        %vm6642 = vcmp.gt.f32.partialorder %v6610, 0.0
        %vm6643 = vcmp.gt.f32.partialorder %v6611, 0.0
        %vm6644 = vcmp.gt.f32.partialorder %v6612, 0.0
        %vm6645 = vcmp.gt.f32.partialorder %v6613, 0.0
        %vm6646 = vcmp.gt.f32.partialorder %v6614, 0.0
        %vm6647 = vcmp.gt.f32.partialorder %v6615, 0.0
        %vm6648 = vcmp.gt.f32.partialorder %v6616, 0.0
        %vm6649 = vcmp.gt.f32.partialorder %v6617, 0.0
        %vm6650 = vcmp.gt.f32.partialorder %v6618, 0.0
        %v6651 = vmin.f32 %v6587, 0.0
        %v6652 = vmin.f32 %v6588, 0.0
        %v6653 = vmin.f32 %v6589, 0.0
        %v6654 = vmin.f32 %v6590, 0.0
        %v6655 = vmin.f32 %v6591, 0.0
        %v6656 = vmin.f32 %v6592, 0.0
        %v6657 = vmin.f32 %v6593, 0.0
        %v6658 = vmin.f32 %v6594, 0.0
        %v6659 = vmin.f32 %v6595, 0.0
        %v6660 = vmin.f32 %v6596, 0.0
        %v6661 = vmin.f32 %v6597, 0.0
        %v6662 = vmin.f32 %v6598, 0.0
        %v6663 = vmin.f32 %v6599, 0.0
        %v6664 = vmin.f32 %v6600, 0.0
        %v6665 = vmin.f32 %v6601, 0.0
        %v6666 = vmin.f32 %v6602, 0.0
        %v6667 = vmin.f32 %v6603, 0.0
        %v6668 = vmin.f32 %v6604, 0.0
        %v6669 = vmin.f32 %v6605, 0.0
        %v6670 = vmin.f32 %v6606, 0.0
        %v6671 = vmin.f32 %v6607, 0.0
        %v6672 = vmin.f32 %v6608, 0.0
        %v6673 = vmin.f32 %v6609, 0.0
        %v6674 = vmin.f32 %v6610, 0.0
        %v6675 = vmin.f32 %v6611, 0.0
        %v6676 = vmin.f32 %v6612, 0.0
        %v6677 = vmin.f32 %v6613, 0.0
        %v6678 = vmin.f32 %v6614, 0.0
        %v6679 = vmin.f32 %v6615, 0.0
        %v6680 = vmin.f32 %v6616, 0.0
        %v6681 = vmin.f32 %v6617, 0.0
        %v6682 = vmin.f32 %v6618, 0.0
        %v6683 = vmul.f32 %v6651, 1.442695
        %v6684 = vpow.pop %v6683
        %v6685 = vmul.f32 %v6652, 1.442695
        %v6686 = vpow.pop %v6685
        %v6687 = vmul.f32 %v6653, 1.442695
        %v6688 = vpow.pop %v6687
        %v6689 = vmul.f32 %v6654, 1.442695
        %v6690 = vpow.pop %v6689
        %v6691 = vmul.f32 %v6655, 1.442695
        %v6692 = vpow.pop %v6691
        %v6693 = vmul.f32 %v6656, 1.442695
        %v6694 = vpow.pop %v6693
        %v6695 = vmul.f32 %v6657, 1.442695
        %v6696 = vpow.pop %v6695
        %v6697 = vmul.f32 %v6658, 1.442695
        %v6698 = vpow.pop %v6697
        %v6699 = vmul.f32 %v6659, 1.442695
        %v6700 = vpow.pop %v6699
        %v6701 = vmul.f32 %v6660, 1.442695
        %v6702 = vpow.pop %v6701
        %v6703 = vmul.f32 %v6661, 1.442695
        %v6704 = vpow.pop %v6703
        %v6705 = vmul.f32 %v6662, 1.442695
        %v6706 = vpow.pop %v6705
        %v6707 = vmul.f32 %v6663, 1.442695
        %v6708 = vpow.pop %v6707
        %v6709 = vmul.f32 %v6664, 1.442695
        %v6710 = vpow.pop %v6709
        %v6711 = vmul.f32 %v6665, 1.442695
        %v6712 = vpow.pop %v6711
        %v6713 = vmul.f32 %v6666, 1.442695
        %v6714 = vpow.pop %v6713
        %v6715 = vmul.f32 %v6667, 1.442695
        %v6716 = vpow.pop %v6715
        %v6717 = vmul.f32 %v6668, 1.442695
        %v6718 = vpow.pop %v6717
        %v6719 = vmul.f32 %v6669, 1.442695
        %v6720 = vpow.pop %v6719
        %v6721 = vmul.f32 %v6670, 1.442695
        %v6722 = vpow.pop %v6721
        %v6723 = vmul.f32 %v6671, 1.442695
        %v6724 = vpow.pop %v6723
        %v6725 = vmul.f32 %v6672, 1.442695
        %v6726 = vpow.pop %v6725
        %v6727 = vmul.f32 %v6673, 1.442695
        %v6728 = vpow.pop %v6727
        %v6729 = vmul.f32 %v6674, 1.442695
        %v6730 = vpow.pop %v6729
        %v6731 = vmul.f32 %v6675, 1.442695
        %v6732 = vpow.pop %v6731
        %v6733 = vmul.f32 %v6676, 1.442695
        %v6734 = vpow.pop %v6733
        %v6735 = vmul.f32 %v6677, 1.442695
        %v6736 = vpow.pop %v6735
        %v6737 = vmul.f32 %v6678, 1.442695
        %v6738 = vpow.pop %v6737
        %v6739 = vmul.f32 %v6679, 1.442695
        %v6740 = vpow.pop %v6739
        %v6741 = vmul.f32 %v6680, 1.442695
        %v6742 = vpow.pop %v6741
        %v6743 = vmul.f32 %v6681, 1.442695
        %v6744 = vpow.pop %v6743
        %v6745 = vmul.f32 %v6682, 1.442695
        %v6746 = vpow.pop %v6745
        %v6747 = vsub.f32 %v6684, 1.0
        %v6748 = vsub.f32 %v6686, 1.0
        %v6749 = vsub.f32 %v6688, 1.0
        %v6750 = vsub.f32 %v6690, 1.0
        %v6751 = vsub.f32 %v6692, 1.0
        %v6752 = vsub.f32 %v6694, 1.0
        %v6753 = vsub.f32 %v6696, 1.0
        %v6754 = vsub.f32 %v6698, 1.0
        %v6755 = vsub.f32 %v6700, 1.0
        %v6756 = vsub.f32 %v6702, 1.0
        %v6757 = vsub.f32 %v6704, 1.0
        %v6758 = vsub.f32 %v6706, 1.0
        %v6759 = vsub.f32 %v6708, 1.0
        %v6760 = vsub.f32 %v6710, 1.0
        %v6761 = vsub.f32 %v6712, 1.0
        %v6762 = vsub.f32 %v6714, 1.0
        %v6763 = vsub.f32 %v6716, 1.0
        %v6764 = vsub.f32 %v6718, 1.0
        %v6765 = vsub.f32 %v6720, 1.0
        %v6766 = vsub.f32 %v6722, 1.0
        %v6767 = vsub.f32 %v6724, 1.0
        %v6768 = vsub.f32 %v6726, 1.0
        %v6769 = vsub.f32 %v6728, 1.0
        %v6770 = vsub.f32 %v6730, 1.0
        %v6771 = vsub.f32 %v6732, 1.0
        %v6772 = vsub.f32 %v6734, 1.0
        %v6773 = vsub.f32 %v6736, 1.0
        %v6774 = vsub.f32 %v6738, 1.0
        %v6775 = vsub.f32 %v6740, 1.0
        %v6776 = vsub.f32 %v6742, 1.0
        %v6777 = vsub.f32 %v6744, 1.0
        %v6778 = vsub.f32 %v6746, 1.0
        %v6779 = vsel %vm6619, %v6587, %v6747
        %v6780 = vsel %vm6620, %v6588, %v6748
        %v6781 = vsel %vm6621, %v6589, %v6749
        %v6782 = vsel %vm6622, %v6590, %v6750
        %v6783 = vsel %vm6623, %v6591, %v6751
        %v6784 = vsel %vm6624, %v6592, %v6752
        %v6785 = vsel %vm6625, %v6593, %v6753
        %v6786 = vsel %vm6626, %v6594, %v6754
        %v6787 = vsel %vm6627, %v6595, %v6755
        %v6788 = vsel %vm6628, %v6596, %v6756
        %v6789 = vsel %vm6629, %v6597, %v6757
        %v6790 = vsel %vm6630, %v6598, %v6758
        %v6791 = vsel %vm6631, %v6599, %v6759
        %v6792 = vsel %vm6632, %v6600, %v6760
        %v6793 = vsel %vm6633, %v6601, %v6761
        %v6794 = vsel %vm6634, %v6602, %v6762
        %v6795 = vsel %vm6635, %v6603, %v6763
        %v6796 = vsel %vm6636, %v6604, %v6764
        %v6797 = vsel %vm6637, %v6605, %v6765
        %v6798 = vsel %vm6638, %v6606, %v6766
        %v6799 = vsel %vm6639, %v6607, %v6767
        %v6800 = vsel %vm6640, %v6608, %v6768
        %v6801 = vsel %vm6641, %v6609, %v6769
        %v6802 = vsel %vm6642, %v6610, %v6770
        %v6803 = vsel %vm6643, %v6611, %v6771
        %v6804 = vsel %vm6644, %v6612, %v6772
        %v6805 = vsel %vm6645, %v6613, %v6773
        %v6806 = vsel %vm6646, %v6614, %v6774
        %v6807 = vsel %vm6647, %v6615, %v6775
        %v6808 = vsel %vm6648, %v6616, %v6776
        %v6809 = vsel %vm6649, %v6617, %v6777
        %v6810 = vsel %vm6650, %v6618, %v6778
        %v6811 = vpack.c.bf16 %v6781, %v6779
        %v6812 = vpack.c.bf16 %v6782, %v6780
        %v6813 = vpack.c.bf16 %v6785, %v6783
        %v6814 = vpack.c.bf16 %v6786, %v6784
        %v6815 = vpack.c.bf16 %v6789, %v6787
        %v6816 = vpack.c.bf16 %v6790, %v6788
        %v6817 = vpack.c.bf16 %v6793, %v6791
        %v6818 = vpack.c.bf16 %v6794, %v6792
        %v6819 = vpack.c.bf16 %v6797, %v6795
        %v6820 = vpack.c.bf16 %v6798, %v6796
        %v6821 = vpack.c.bf16 %v6801, %v6799
        %v6822 = vpack.c.bf16 %v6802, %v6800
        %v6823 = vpack.c.bf16 %v6805, %v6803
        %v6824 = vpack.c.bf16 %v6806, %v6804
        %v6825 = vpack.c.bf16 %v6809, %v6807
        %v6826 = vpack.c.bf16 %v6810, %v6808
        %v6827 = vld [vmem:[#allocation10] sm:$0xf]
        %v6828 = vld [vmem:[#allocation10 + $0x4] sm:$0xf]
        %v6829 = vld [vmem:[#allocation10 + $0x8] sm:$0xf]
        %v6830 = vld [vmem:[#allocation10 + $0xc] sm:$0xf]
        %v6831 = vld [vmem:[#allocation10 + $0x10] sm:$0xf]
        %v6832 = vld [vmem:[#allocation10 + $0x14] sm:$0xf]
        %v6833 = vld [vmem:[#allocation10 + $0x18] sm:$0xf]
        %v6834 = vld [vmem:[#allocation10 + $0x1c] sm:$0xf]
        %v6835 = vld [vmem:[#allocation10 + $0x20] sm:$0xf]
        %v6836 = vld [vmem:[#allocation10 + $0x24] sm:$0xf]
        %v6837 = vld [vmem:[#allocation10 + $0x28] sm:$0xf]
        %v6838 = vld [vmem:[#allocation10 + $0x2c] sm:$0xf]
        %v6839 = vld [vmem:[#allocation10 + $0x30] sm:$0xf]
        %v6840 = vld [vmem:[#allocation10 + $0x34] sm:$0xf]
        %v6841 = vld [vmem:[#allocation10 + $0x38] sm:$0xf]
        %v6842 = vld [vmem:[#allocation10 + $0x3c] sm:$0xf]
        %v6843 = vld [vmem:[#allocation10 + $0x40] sm:$0xf]
        %v6844 = vld [vmem:[#allocation10 + $0x44] sm:$0xf]
        %v6845 = vld [vmem:[#allocation10 + $0x48] sm:$0xf]
        %v6846 = vld [vmem:[#allocation10 + $0x4c] sm:$0xf]
        %v6847 = vld [vmem:[#allocation10 + $0x50] sm:$0xf]
        %v6848 = vld [vmem:[#allocation10 + $0x54] sm:$0xf]
        %v6849 = vld [vmem:[#allocation10 + $0x58] sm:$0xf]
        %v6850 = vld [vmem:[#allocation10 + $0x5c] sm:$0xf]
        %v6851 = vld [vmem:[#allocation10 + $0x60] sm:$0xf]
        %v6852 = vld [vmem:[#allocation10 + $0x64] sm:$0xf]
        %v6853 = vld [vmem:[#allocation10 + $0x68] sm:$0xf]
        %v6854 = vld [vmem:[#allocation10 + $0x6c] sm:$0xf]
        %v6855 = vld [vmem:[#allocation10 + $0x70] sm:$0xf]
        %v6856 = vld [vmem:[#allocation10 + $0x74] sm:$0xf]
        %v6857 = vld [vmem:[#allocation10 + $0x78] sm:$0xf]
        %v6858 = vld [vmem:[#allocation10 + $0x7c] sm:$0xf]
        %v6859 = vld [vmem:[%s9] sm:$0x1]
        %v6861 = vlaneseq
        %v6862 = vshrl.u32 %v6861, 7
        %v6863 = vsub.s32 0, %v6862
        %v6864 = vrot.slane %v6859, %v6863
        %v6898 = vunpack.c.l.b16 %v6827
        %v6899 = vunpack.c.l.b16 %v6828
        %v6900 = vunpack.c.l.b16 %v6829
        %v6901 = vunpack.c.l.b16 %v6830
        %v6902 = vunpack.c.l.b16 %v6831
        %v6903 = vunpack.c.l.b16 %v6832
        %v6904 = vunpack.c.l.b16 %v6833
        %v6905 = vunpack.c.l.b16 %v6834
        %v6906 = vunpack.c.l.b16 %v6835
        %v6907 = vunpack.c.l.b16 %v6836
        %v6908 = vunpack.c.l.b16 %v6837
        %v6909 = vunpack.c.l.b16 %v6838
        %v6910 = vunpack.c.l.b16 %v6839
        %v6911 = vunpack.c.l.b16 %v6840
        %v6912 = vunpack.c.l.b16 %v6841
        %v6913 = vunpack.c.l.b16 %v6842
        %v6914 = vunpack.c.l.b16 %v6843
        %v6915 = vunpack.c.l.b16 %v6844
        %v6916 = vunpack.c.l.b16 %v6845
        %v6917 = vunpack.c.l.b16 %v6846
        %v6918 = vunpack.c.l.b16 %v6847
        %v6919 = vunpack.c.l.b16 %v6848
        %v6920 = vunpack.c.l.b16 %v6849
        %v6921 = vunpack.c.l.b16 %v6850
        %v6922 = vunpack.c.l.b16 %v6851
        %v6923 = vunpack.c.l.b16 %v6852
        %v6924 = vunpack.c.l.b16 %v6853
        %v6925 = vunpack.c.l.b16 %v6854
        %v6926 = vunpack.c.l.b16 %v6855
        %v6927 = vunpack.c.l.b16 %v6856
        %v6928 = vunpack.c.l.b16 %v6857
        %v6929 = vunpack.c.l.b16 %v6858
        %v6930 = vpack.c.b16 %v6899, %v6898
        %v6931 = vpack.c.b16 %v6901, %v6900
        %v6932 = vpack.c.b16 %v6903, %v6902
        %v6933 = vpack.c.b16 %v6905, %v6904
        %v6934 = vpack.c.b16 %v6907, %v6906
        %v6935 = vpack.c.b16 %v6909, %v6908
        %v6936 = vpack.c.b16 %v6911, %v6910
        %v6937 = vpack.c.b16 %v6913, %v6912
        %v6938 = vpack.c.b16 %v6915, %v6914
        %v6939 = vpack.c.b16 %v6917, %v6916
        %v6940 = vpack.c.b16 %v6919, %v6918
        %v6941 = vpack.c.b16 %v6921, %v6920
        %v6942 = vpack.c.b16 %v6923, %v6922
        %v6943 = vpack.c.b16 %v6925, %v6924
        %v6944 = vpack.c.b16 %v6927, %v6926
        %v6945 = vpack.c.b16 %v6929, %v6928
        %6962 = vmatprep.subr.bf16.mxu0 0
        %6963 = vmatpush1.bf16.msra.mxu0 %v6930
        %6964 = vmatprep.subr.bf16.mxu0 0
        %6965 = vmatpush1.bf16.msra.mxu0 %v6931
        %6966 = vmatprep.subr.bf16.mxu0 0
        %6967 = vmatpush1.bf16.msra.mxu0 %v6932
        %6968 = vmatprep.subr.bf16.mxu0 0
        %6969 = vmatpush1.bf16.msra.mxu0 %v6933
        %6970 = vmatprep.subr.bf16.mxu0 0
        %6971 = vmatpush1.bf16.msra.mxu0 %v6934
        %6972 = vmatprep.subr.bf16.mxu0 0
        %6973 = vmatpush1.bf16.msra.mxu0 %v6935
        %6974 = vmatprep.subr.bf16.mxu0 0
        %6975 = vmatpush1.bf16.msra.mxu0 %v6936
        %6976 = vmatprep.subr.bf16.mxu0 0
        %6977 = vmatpush1.bf16.msra.mxu0 %v6937
        %6978 = vmatprep.subr.bf16.mxu0 0
        %6979 = vmatpush1.bf16.msra.mxu0 %v6938
        %6980 = vmatprep.subr.bf16.mxu0 0
        %6981 = vmatpush1.bf16.msra.mxu0 %v6939
        %6982 = vmatprep.subr.bf16.mxu0 0
        %6983 = vmatpush1.bf16.msra.mxu0 %v6940
        %6984 = vmatprep.subr.bf16.mxu0 0
        %6985 = vmatpush1.bf16.msra.mxu0 %v6941
        %6986 = vmatprep.subr.bf16.mxu0 0
        %6987 = vmatpush1.bf16.msra.mxu0 %v6942
        %6988 = vmatprep.subr.bf16.mxu0 0
        %6989 = vmatpush1.bf16.msra.mxu0 %v6943
        %6990 = vmatprep.subr.bf16.mxu0 0
        %6991 = vmatpush1.bf16.msra.mxu0 %v6944
        %6992 = vmatprep.subr.bf16.mxu0 0
        %6993 = vmatpush1.bf16.msra.mxu0 %v6945
        %6994 = vmatprep.mubr.bf16.mxu0 %v6812
        %6995 = vmatmul.mubr.bf16.gmra.mrb[0].mxu0 %v6811
        %v6996 = vpop.f32.mrb[0].mxu0
        %v6997 = vadd.f32 %v6864, %v6996
        %v6998 = vpop.f32.mrb[0].mxu0
        %v6999 = vpop.f32.mrb[0].mxu0
        %v7000 = vadd.f32 %v6864, %v6999
        %v7001 = vpop.f32.mrb[0].mxu0
        %7002 = vmatprep.mubr.bf16.mxu0 %v6814
        %7003 = vmatmul.mubr.bf16.gmra.mrb[0].mxu0 %v6813
        %v7004 = vpop.f32.mrb[0].mxu0
        %v7005 = vadd.f32 %v6864, %v7004
        %v7006 = vpop.f32.mrb[0].mxu0
        %v7007 = vpop.f32.mrb[0].mxu0
        %v7008 = vadd.f32 %v6864, %v7007
        %v7009 = vpop.f32.mrb[0].mxu0
        %7010 = vmatprep.mubr.bf16.mxu0 %v6816
        %7011 = vmatmul.mubr.bf16.gmra.mrb[0].mxu0 %v6815
        %v7012 = vpop.f32.mrb[0].mxu0
        %v7013 = vadd.f32 %v6864, %v7012
        %v7014 = vpop.f32.mrb[0].mxu0
        %v7015 = vpop.f32.mrb[0].mxu0
        %v7016 = vadd.f32 %v6864, %v7015
        %v7017 = vpop.f32.mrb[0].mxu0
        %7018 = vmatprep.mubr.bf16.mxu0 %v6818
        %7019 = vmatmul.mubr.bf16.gmra.mrb[0].mxu0 %v6817
        %v7020 = vpop.f32.mrb[0].mxu0
        %v7021 = vadd.f32 %v6864, %v7020
        %v7022 = vpop.f32.mrb[0].mxu0
        %v7023 = vpop.f32.mrb[0].mxu0
        %v7024 = vadd.f32 %v6864, %v7023
        %v7025 = vpop.f32.mrb[0].mxu0
        %7026 = vmatprep.mubr.bf16.mxu0 %v6820
        %7027 = vmatmul.mubr.bf16.gmra.mrb[0].mxu0 %v6819
        %v7028 = vpop.f32.mrb[0].mxu0
        %v7029 = vadd.f32 %v6864, %v7028
        %v7030 = vpop.f32.mrb[0].mxu0
        %v7031 = vpop.f32.mrb[0].mxu0
        %v7032 = vadd.f32 %v6864, %v7031
        %v7033 = vpop.f32.mrb[0].mxu0
        %7034 = vmatprep.mubr.bf16.mxu0 %v6822
        %7035 = vmatmul.mubr.bf16.gmra.mrb[0].mxu0 %v6821
        %v7036 = vpop.f32.mrb[0].mxu0
        %v7037 = vadd.f32 %v6864, %v7036
        %v7038 = vpop.f32.mrb[0].mxu0
        %v7039 = vpop.f32.mrb[0].mxu0
        %v7040 = vadd.f32 %v6864, %v7039
        %v7041 = vpop.f32.mrb[0].mxu0
        %7042 = vmatprep.mubr.bf16.mxu0 %v6824
        %7043 = vmatmul.mubr.bf16.gmra.mrb[0].mxu0 %v6823
        %v7044 = vpop.f32.mrb[0].mxu0
        %v7045 = vadd.f32 %v6864, %v7044
        %v7046 = vpop.f32.mrb[0].mxu0
        %v7047 = vpop.f32.mrb[0].mxu0
        %v7048 = vadd.f32 %v6864, %v7047
        %v7049 = vpop.f32.mrb[0].mxu0
        %7050 = vmatprep.mubr.bf16.mxu0 %v6826
        %7051 = vmatmul.mubr.bf16.gmra.mrb[0].mxu0 %v6825
        %v7052 = vpop.f32.mrb[0].mxu0
        %v7053 = vadd.f32 %v6864, %v7052
        %v7054 = vpop.f32.mrb[0].mxu0
        %v7055 = vpop.f32.mrb[0].mxu0
        %v7056 = vadd.f32 %v6864, %v7055
        %v7057 = vpop.f32.mrb[0].mxu0
        %7058 = vdwg.mxu0
        %v7059 = vld [vmem:[%s407] sm:$0xff]
        %v7060 = vld [vmem:[%s407 + $0x8] sm:$0xff]
        %v7061 = vld [vmem:[%s407 + $0x10] sm:$0xff]
        %v7062 = vld [vmem:[%s407 + $0x18] sm:$0xff]
        %v7063 = vld [vmem:[%s407 + $0x20] sm:$0xff]
        %v7064 = vld [vmem:[%s407 + $0x28] sm:$0xff]
        %v7065 = vld [vmem:[%s407 + $0x30] sm:$0xff]
        %v7066 = vld [vmem:[%s407 + $0x38] sm:$0xff]
        %v7067 = vld [vmem:[%s407 + $0x40] sm:$0xff]
        %v7068 = vld [vmem:[%s407 + $0x48] sm:$0xff]
        %v7069 = vld [vmem:[%s407 + $0x50] sm:$0xff]
        %v7070 = vld [vmem:[%s407 + $0x58] sm:$0xff]
        %v7071 = vld [vmem:[%s407 + $0x60] sm:$0xff]
        %v7072 = vld [vmem:[%s407 + $0x68] sm:$0xff]
        %v7073 = vld [vmem:[%s407 + $0x70] sm:$0xff]
        %v7074 = vld [vmem:[%s407 + $0x78] sm:$0xff]
        %vm7075 = vcmp.gt.f32.partialorder %v7059, 0.0
        %vm7076 = vcmp.gt.f32.partialorder %v7060, 0.0
        %vm7077 = vcmp.gt.f32.partialorder %v7061, 0.0
        %vm7078 = vcmp.gt.f32.partialorder %v7062, 0.0
        %vm7079 = vcmp.gt.f32.partialorder %v7063, 0.0
        %vm7080 = vcmp.gt.f32.partialorder %v7064, 0.0
        %vm7081 = vcmp.gt.f32.partialorder %v7065, 0.0
        %vm7082 = vcmp.gt.f32.partialorder %v7066, 0.0
        %vm7083 = vcmp.gt.f32.partialorder %v7067, 0.0
        %vm7084 = vcmp.gt.f32.partialorder %v7068, 0.0
        %vm7085 = vcmp.gt.f32.partialorder %v7069, 0.0
        %vm7086 = vcmp.gt.f32.partialorder %v7070, 0.0
        %vm7087 = vcmp.gt.f32.partialorder %v7071, 0.0
        %vm7088 = vcmp.gt.f32.partialorder %v7072, 0.0
        %vm7089 = vcmp.gt.f32.partialorder %v7073, 0.0
        %vm7090 = vcmp.gt.f32.partialorder %v7074, 0.0
        %v7091 = vsel %vm7075, %v6997, -inf
        %v7092 = vsel %vm7076, %v7000, -inf
        %v7093 = vsel %vm7077, %v7005, -inf
        %v7094 = vsel %vm7078, %v7008, -inf
        %v7095 = vsel %vm7079, %v7013, -inf
        %v7096 = vsel %vm7080, %v7016, -inf
        %v7097 = vsel %vm7081, %v7021, -inf
        %v7098 = vsel %vm7082, %v7024, -inf
        %v7099 = vsel %vm7083, %v7029, -inf
        %v7100 = vsel %vm7084, %v7032, -inf
        %v7101 = vsel %vm7085, %v7037, -inf
        %v7102 = vsel %vm7086, %v7040, -inf
        %v7103 = vsel %vm7087, %v7045, -inf
        %v7104 = vsel %vm7088, %v7048, -inf
        %v7105 = vsel %vm7089, %v7053, -inf
        %v7106 = vsel %vm7090, %v7056, -inf
        %7107 = vmax.xlane.f32.xlu0 %v7091
        %v7108 = vpop.xlane.xlu0 %7107
        %7109 = vmax.xlane.f32.xlu0 %v7092
        %v7110 = vpop.xlane.xlu0 %7109
        %7111 = vmax.xlane.f32.xlu0 %v7093
        %v7112 = vpop.xlane.xlu0 %7111
        %7113 = vmax.xlane.f32.xlu0 %v7094
        %v7114 = vpop.xlane.xlu0 %7113
        %7115 = vmax.xlane.f32.xlu0 %v7095
        %v7116 = vpop.xlane.xlu0 %7115
        %7117 = vmax.xlane.f32.xlu0 %v7096
        %v7118 = vpop.xlane.xlu0 %7117
        %7119 = vmax.xlane.f32.xlu0 %v7097
        %v7120 = vpop.xlane.xlu0 %7119
        %7121 = vmax.xlane.f32.xlu0 %v7098
        %v7122 = vpop.xlane.xlu0 %7121
        %7123 = vmax.xlane.f32.xlu0 %v7099
        %v7124 = vpop.xlane.xlu0 %7123
        %7125 = vmax.xlane.f32.xlu0 %v7100
        %v7126 = vpop.xlane.xlu0 %7125
        %7127 = vmax.xlane.f32.xlu0 %v7101
        %v7128 = vpop.xlane.xlu0 %7127
        %7129 = vmax.xlane.f32.xlu0 %v7102
        %v7130 = vpop.xlane.xlu0 %7129
        %7131 = vmax.xlane.f32.xlu0 %v7103
        %v7132 = vpop.xlane.xlu0 %7131
        %7133 = vmax.xlane.f32.xlu0 %v7104
        %v7134 = vpop.xlane.xlu0 %7133
        %7135 = vmax.xlane.f32.xlu0 %v7105
        %v7136 = vpop.xlane.xlu0 %7135
        %7137 = vmax.xlane.f32.xlu0 %v7106
        %v7138 = vpop.xlane.xlu0 %7137
        %v7139 = vsub.f32 %v6997, %v7108
        %v7140 = vsub.f32 %v7000, %v7110
        %v7141 = vsub.f32 %v7005, %v7112
        %v7142 = vsub.f32 %v7008, %v7114
        %v7143 = vsub.f32 %v7013, %v7116
        %v7144 = vsub.f32 %v7016, %v7118
        %v7145 = vsub.f32 %v7021, %v7120
        %v7146 = vsub.f32 %v7024, %v7122
        %v7147 = vsub.f32 %v7029, %v7124
        %v7148 = vsub.f32 %v7032, %v7126
        %v7149 = vsub.f32 %v7037, %v7128
        %v7150 = vsub.f32 %v7040, %v7130
        %v7151 = vsub.f32 %v7045, %v7132
        %v7152 = vsub.f32 %v7048, %v7134
        %v7153 = vsub.f32 %v7053, %v7136
        %v7154 = vsub.f32 %v7056, %v7138
        %v7155 = vmul.f32 %v7139, 1.442695
        %v7156 = vpow.pop %v7155
        %v7157 = vmul.f32 %v7140, 1.442695
        %v7158 = vpow.pop %v7157
        %v7159 = vmul.f32 %v7141, 1.442695
        %v7160 = vpow.pop %v7159
        %v7161 = vmul.f32 %v7142, 1.442695
        %v7162 = vpow.pop %v7161
        %v7163 = vmul.f32 %v7143, 1.442695
        %v7164 = vpow.pop %v7163
        %v7165 = vmul.f32 %v7144, 1.442695
        %v7166 = vpow.pop %v7165
        %v7167 = vmul.f32 %v7145, 1.442695
        %v7168 = vpow.pop %v7167
        %v7169 = vmul.f32 %v7146, 1.442695
        %v7170 = vpow.pop %v7169
        %v7171 = vmul.f32 %v7147, 1.442695
        %v7172 = vpow.pop %v7171
        %v7173 = vmul.f32 %v7148, 1.442695
        %v7174 = vpow.pop %v7173
        %v7175 = vmul.f32 %v7149, 1.442695
        %v7176 = vpow.pop %v7175
        %v7177 = vmul.f32 %v7150, 1.442695
        %v7178 = vpow.pop %v7177
        %v7179 = vmul.f32 %v7151, 1.442695
        %v7180 = vpow.pop %v7179
        %v7181 = vmul.f32 %v7152, 1.442695
        %v7182 = vpow.pop %v7181
        %v7183 = vmul.f32 %v7153, 1.442695
        %v7184 = vpow.pop %v7183
        %v7185 = vmul.f32 %v7154, 1.442695
        %v7186 = vpow.pop %v7185
        %v7187 = vsel %vm7075, %v7156, 0.0
        %v7188 = vsel %vm7076, %v7158, 0.0
        %v7189 = vsel %vm7077, %v7160, 0.0
        %v7190 = vsel %vm7078, %v7162, 0.0
        %v7191 = vsel %vm7079, %v7164, 0.0
        %v7192 = vsel %vm7080, %v7166, 0.0
        %v7193 = vsel %vm7081, %v7168, 0.0
        %v7194 = vsel %vm7082, %v7170, 0.0
        %v7195 = vsel %vm7083, %v7172, 0.0
        %v7196 = vsel %vm7084, %v7174, 0.0
        %v7197 = vsel %vm7085, %v7176, 0.0
        %v7198 = vsel %vm7086, %v7178, 0.0
        %v7199 = vsel %vm7087, %v7180, 0.0
        %v7200 = vsel %vm7088, %v7182, 0.0
        %v7201 = vsel %vm7089, %v7184, 0.0
        %v7202 = vsel %vm7090, %v7186, 0.0
        %7203 = vadd.xlane.f32.xlu0 %v7187
        %v7204 = vpop.xlane.xlu0 %7203
        %7205 = vadd.xlane.f32.xlu0 %v7188
        %v7206 = vpop.xlane.xlu0 %7205
        %7207 = vadd.xlane.f32.xlu0 %v7189
        %v7208 = vpop.xlane.xlu0 %7207
        %7209 = vadd.xlane.f32.xlu0 %v7190
        %v7210 = vpop.xlane.xlu0 %7209
        %7211 = vadd.xlane.f32.xlu0 %v7191
        %v7212 = vpop.xlane.xlu0 %7211
        %7213 = vadd.xlane.f32.xlu0 %v7192
        %v7214 = vpop.xlane.xlu0 %7213
        %7215 = vadd.xlane.f32.xlu0 %v7193
        %v7216 = vpop.xlane.xlu0 %7215
        %7217 = vadd.xlane.f32.xlu0 %v7194
        %v7218 = vpop.xlane.xlu0 %7217
        %7219 = vadd.xlane.f32.xlu0 %v7195
        %v7220 = vpop.xlane.xlu0 %7219
        %7221 = vadd.xlane.f32.xlu0 %v7196
        %v7222 = vpop.xlane.xlu0 %7221
        %7223 = vadd.xlane.f32.xlu0 %v7197
        %v7224 = vpop.xlane.xlu0 %7223
        %7225 = vadd.xlane.f32.xlu0 %v7198
        %v7226 = vpop.xlane.xlu0 %7225
        %7227 = vadd.xlane.f32.xlu0 %v7199
        %v7228 = vpop.xlane.xlu0 %7227
        %7229 = vadd.xlane.f32.xlu0 %v7200
        %v7230 = vpop.xlane.xlu0 %7229
        %7231 = vadd.xlane.f32.xlu0 %v7201
        %v7232 = vpop.xlane.xlu0 %7231
        %7233 = vadd.xlane.f32.xlu0 %v7202
        %v7234 = vpop.xlane.xlu0 %7233
        %v7235 = vrcp.pop %v7204
        %v7236 = vmul.f32 %v7187, %v7235
        %v7237 = vrcp.pop %v7206
        %v7238 = vmul.f32 %v7188, %v7237
        %v7239 = vrcp.pop %v7208
        %v7240 = vmul.f32 %v7189, %v7239
        %v7241 = vrcp.pop %v7210
        %v7242 = vmul.f32 %v7190, %v7241
        %v7243 = vrcp.pop %v7212
        %v7244 = vmul.f32 %v7191, %v7243
        %v7245 = vrcp.pop %v7214
        %v7246 = vmul.f32 %v7192, %v7245
        %v7247 = vrcp.pop %v7216
        %v7248 = vmul.f32 %v7193, %v7247
        %v7249 = vrcp.pop %v7218
        %v7250 = vmul.f32 %v7194, %v7249
        %v7251 = vrcp.pop %v7220
        %v7252 = vmul.f32 %v7195, %v7251
        %v7253 = vrcp.pop %v7222
        %v7254 = vmul.f32 %v7196, %v7253
        %v7255 = vrcp.pop %v7224
        %v7256 = vmul.f32 %v7197, %v7255
        %v7257 = vrcp.pop %v7226
        %v7258 = vmul.f32 %v7198, %v7257
        %v7259 = vrcp.pop %v7228
        %v7260 = vmul.f32 %v7199, %v7259
        %v7261 = vrcp.pop %v7230
        %v7262 = vmul.f32 %v7200, %v7261
        %v7263 = vrcp.pop %v7232
        %v7264 = vmul.f32 %v7201, %v7263
        %v7265 = vrcp.pop %v7234
        %v7266 = vmul.f32 %v7202, %v7265
        %7267 = vst [vmem:[%s460] sm:$0xff] %v7236
        %7268 = vst [vmem:[%s460 + $0x8] sm:$0xff] %v7238
        %7269 = vst [vmem:[%s460 + $0x10] sm:$0xff] %v7240
        %7270 = vst [vmem:[%s460 + $0x18] sm:$0xff] %v7242
        %7271 = vst [vmem:[%s460 + $0x20] sm:$0xff] %v7244
        %7272 = vst [vmem:[%s460 + $0x28] sm:$0xff] %v7246
        %7273 = vst [vmem:[%s460 + $0x30] sm:$0xff] %v7248
        %7274 = vst [vmem:[%s460 + $0x38] sm:$0xff] %v7250
        %7275 = vst [vmem:[%s460 + $0x40] sm:$0xff] %v7252
        %7276 = vst [vmem:[%s460 + $0x48] sm:$0xff] %v7254
        %7277 = vst [vmem:[%s460 + $0x50] sm:$0xff] %v7256
        %7278 = vst [vmem:[%s460 + $0x58] sm:$0xff] %v7258
        %7279 = vst [vmem:[%s460 + $0x60] sm:$0xff] %v7260
        %7280 = vst [vmem:[%s460 + $0x68] sm:$0xff] %v7262
        %7281 = vst [vmem:[%s460 + $0x70] sm:$0xff] %v7264
        %7282 = vst [vmem:[%s460 + $0x78] sm:$0xff] %v7266
        %s7283 = sand.u32 %s259, 1
        %s7284 = scalar_lea.sflag [#allocation4], %s7283
        %s7285 = sand.u32 %s259, 1
        %s7286 = smul.addr %s7285, 128
        %s7287 = scalar_lea.vmem [#allocation11], %s7286
        // Predicated region
        $region81: #{tpu_custom_call.1} parent=59 // pred_check
          %p7288 = pneg %p269
        $region82: #{tpu_custom_call.1} parent=59 // pred_check_branch
          %7290 = sbr.rel (%p7288) target = $region84
        $region83: #{tpu_custom_call.1} parent=59 // pred_region
          %s7291 = smul.u32 16, %s31
          %s7293 = ssub.s32 2048, 2048
          %7294 = vsyncadd %s7284, %s7293
          %s7295 = smul.addr %s7291, 128
          %s7296 = scalar_lea.hbm %s10, %s7295
          %s7297 = sshll.u32 %s7287, 4
          %s7298 = int_to_ptr.vmem [resolvable:$true] %s7297
          %7303 = dma.vmem_to_hbm [thread:$0]  %s7298, 2048, %s7296, %s7284, 128, 128, 8
        $region84: #{tpu_custom_call.1} parent=59 // pred_fallthru
          _
      $region60: #{tpu_custom_call.1} parent=5 // pred_fallthru
        _
      %p7304 = scmp.le.s32.totalorder 2, %s26
      // Predicated region
      $region85: #{tpu_custom_call.1} parent=5 // pred_check
        %p7305 = pneg %p7304
      $region86: #{tpu_custom_call.1} parent=5 // pred_check_branch
        %7307 = sbr.rel (%p7305) target = $region88
      $region87: #{tpu_custom_call.1} parent=5 // pred_region
        %s7308 = ssub.s32 %s26, 2
        // Predicated region
        $region89: #{tpu_custom_call.1} parent=87 // pred_check
          %p7309 = pneg %p275
        $region90: #{tpu_custom_call.1} parent=87 // pred_check_branch
          %7311 = sbr.rel (%p7309) target = $region92
        $region91: #{tpu_custom_call.1} parent=87 // pred_region
          %s7312 = sand.u32 %s260, 1
          %s7313 = scalar_lea.sflag [#allocation4], %s7312
          %s7314 = sand.u32 %s260, 1
          %s7315 = smul.addr %s7314, 128
          %s7316 = scalar_lea.vmem [#allocation11], %s7315
          %7317 = dma.done %s7313, 2048
        $region92: #{tpu_custom_call.1} parent=87 // pred_fallthru
          _
      $region88: #{tpu_custom_call.1} parent=5 // pred_fallthru
        _
    $region6: #{tpu_custom_call.1} parent=1 // loop_footer
      %s30 = sadd.s32 1, %s26
    $region7: #{tpu_custom_call.1} parent=1 // loop_footer_branch
      %25 = sbr.rel target = $region3
    $region8: #{tpu_custom_call.1} parent=1 // loop_exit
      _
    %7318 = vsyncpa [#allocation3], 1
    %s7319 = scalar_lea.sflag [#allocation3], 1
    %7320 = vsyncpa %s7319, 1
    %7321 = vsyncpa [#allocation6], 1
    %s7322 = scalar_lea.sflag [#allocation6], 1
    %7323 = vsyncpa %s7322, 1
    %7324 = vsyncpa [#allocation9], 1
    %7325 = vsyncpa [#allocation4], 1
    %s7326 = scalar_lea.sflag [#allocation4], 1
    %7327 = vsyncpa %s7326, 1

</llo_original>
